<compile_context>
chip_gen: v6e
topology: v6e:2x2x1
jax: 0.10.0
libtpu: 0.0.40
codegen_flags: <defaults>
</compile_context>

<pallas_src>
import math
import functools

import jax
import jax.numpy as jnp
from jax.experimental import pallas as pl
from jax.experimental.pallas import tpu as pltpu

LN_EPS = 1e-5
NEG_INF = -1e30  # additive key-padding bias (CLS key is never masked -> every row stays finite)


# ----------------------------- in-kernel helpers -----------------------------
def _ln(x, g, b):
    """LayerNorm over the last dim, f32 math."""
    mean = jnp.mean(x, axis=-1, keepdims=True)
    xc = x - mean
    var = jnp.mean(xc * xc, axis=-1, keepdims=True)
    return xc * jax.lax.rsqrt(var + LN_EPS) * g + b


# ----------------------------- fused encoder-stack kernel -----------------------------
def _fused_encoder_kernel(x_ref, mbias_ref,
                          nin_g_ref, nin_b_ref, enc_g_ref, enc_b_ref,
                          wqkv_ref, bqkv_ref, wo_ref, bo_ref,
                          ln1g_ref, ln1b_ref,
                          wff1_ref, bff1_ref, wff2_ref, bff2_ref,
                          ln2g_ref, ln2b_ref,
                          o_ref, res_ref, *, nhead, norm_input):
    l = pl.program_id(1)
    TB, S, D = res_ref.shape
    hd = D // nhead

    # ---- layer-0 prologue: seed the resident residual stream with norm_input(x) ----
    @pl.when(l == 0)
    def _():
        x0 = x_ref[...]                                             # [TB, S, D] f32
        if norm_input:
            res_ref[...] = _ln(x0, nin_g_ref[...], nin_b_ref[...])
        else:
            res_ref[...] = x0

    x = res_ref[...].reshape(TB * S, D)                             # f32 residual rows
    xb = x.astype(jnp.bfloat16)

    # ---- fused QKV projection: one lane-dense [TB*S, D] x [D, 3D] MXU matmul ----
    # (1/sqrt(hd) softmax scale is pre-folded into the Q columns of Wqkv / bqkv)
    qkv = jnp.dot(xb, wqkv_ref[0], preferred_element_type=jnp.float32) + bqkv_ref[0]
    qkv = qkv.reshape(TB, S, 3 * D)
    mbias = mbias_ref[...]                                          # [TB, 1, S] additive bias

    # ---- multi-head self-attention (scores contract over hd -- inherent to MHA) ----
    # TODO(synk): flash-style key-tiled online softmax for large S.
    heads = []
    for h in range(nhead):
        q = qkv[:, :, h * hd:(h + 1) * hd]
        k = qkv[:, :, D + h * hd:D + (h + 1) * hd]
        v = qkv[:, :, 2 * D + h * hd:2 * D + (h + 1) * hd]
        s = jnp.einsum('bqd,bkd->bqk', q.astype(jnp.bfloat16), k.astype(jnp.bfloat16),
                       preferred_element_type=jnp.float32)          # [TB, S, S]
        s = s + mbias
        s = s - jnp.max(s, axis=-1, keepdims=True)
        p = jnp.exp(s)
        p = p * pl.reciprocal(jnp.sum(p, axis=-1, keepdims=True), approx=True)
        heads.append(jnp.einsum('bqk,bkd->bqd', p.astype(jnp.bfloat16),
                                v.astype(jnp.bfloat16),
                                preferred_element_type=jnp.float32))  # [TB, S, hd]
    cat = jnp.concatenate(heads, axis=-1).reshape(TB * S, D)        # head concat, lane-dense

    # ---- single lane-dense out-projection (K = D) ----
    attn = jnp.dot(cat.astype(jnp.bfloat16), wo_ref[0],
                   preferred_element_type=jnp.float32) + bo_ref[0]

    # ---- residual + LayerNorm1 (post-norm) ----
    h1 = _ln(x + attn, ln1g_ref[0], ln1b_ref[0])

    # ---- FFN (relu) + residual + LayerNorm2 ----
    f = jnp.dot(h1.astype(jnp.bfloat16), wff1_ref[0],
                preferred_element_type=jnp.float32) + bff1_ref[0]
    f = jnp.maximum(f, 0.0)
    f = jnp.dot(f.astype(jnp.bfloat16), wff2_ref[0],
                preferred_element_type=jnp.float32) + bff2_ref[0]
    h2 = _ln(h1 + f, ln2g_ref[0], ln2b_ref[0])

    res_ref[...] = h2.reshape(TB, S, D)

    # ---- last-layer epilogue: final encoder LayerNorm, store the output block ----
    @pl.when(l == pl.num_programs(1) - 1)
    def _():
        o_ref[...] = _ln(h2, enc_g_ref[...], enc_b_ref[...]).reshape(TB, S, D)


# ----------------------------- wrapper-side helpers -----------------------------
def _vmem_limit_bytes():
    """Generation-aware VMEM budget: ~48 MiB on v7x (64 MiB phys), ~96 MiB on v5e/v6e."""
    try:
        cap = pltpu.get_tpu_info().vmem_capacity_bytes
    except Exception:
        cap = 64 * 1024 * 1024
    return int(min(cap * 3 // 4, 100 * 1024 * 1024))


def _pick_tb(batch, seq):
    """Largest batch tile that keeps >= 2 'parallel' grid steps (both v7x TensorCores busy)
    while bounding the per-step [TB, S, S] / [TB*S, 3D] activation footprint."""
    best = 1
    for tb in range(1, batch + 1):
        if batch % tb:
            continue
        steps = batch // tb
        if (steps >= 2 or batch == 1) and tb * seq <= 512:
            best = tb
    return best


# ----------------------------- parameters (deterministic, kernel layout) -----------------------------
def init_params(key, d_model, nhead, dim_ff, num_layers, transformer_norm_input=True):
    assert d_model % nhead == 0 and num_layers >= 1
    keys = iter(jax.random.split(key, 2 + 12 * num_layers))

    def nrm(shape, scale=0.1):
        return (scale * jax.random.normal(next(keys), shape)).astype(jnp.float32)

    hd = d_model // nhead
    q_scale = 1.0 / math.sqrt(hd)

    p = {"nhead": nhead, "num_layers": num_layers, "norm_input": transformer_norm_input}
    p["cls"] = nrm((1, 1, d_model), 0.02)                          # nn.init.normal_(std=0.02)
    p["norm_in_g"] = jnp.ones((1, d_model), jnp.float32)
    p["norm_in_b"] = jnp.zeros((1, d_model), jnp.float32)
    p["enc_norm_g"] = jnp.ones((1, d_model), jnp.float32)
    p["enc_norm_b"] = jnp.zeros((1, d_model), jnp.float32)

    wqkv_l, bqkv_l, wo_l, bo_l = [], [], [], []
    ln1g_l, ln1b_l, ln2g_l, ln2b_l = [], [], [], []
    wff1_l, bff1_l, wff2_l, bff2_l = [], [], [], []
    for _ in range(num_layers):
        wq = nrm((d_model, d_model)) * q_scale      # fold softmax 1/sqrt(hd) into Q projection
        wk = nrm((d_model, d_model))
        wv = nrm((d_model, d_model))
        bq = nrm((d_model,), 0.01) * q_scale
        bk = nrm((d_model,), 0.01)
        bv = nrm((d_model,), 0.01)
        wqkv_l.append(jnp.concatenate([wq, wk, wv], axis=1))       # [D, 3D] fused slab
        bqkv_l.append(jnp.concatenate([bq, bk, bv])[None, :])      # [1, 3D] lane-dense bias
        wo_l.append(nrm((d_model, d_model)))
        bo_l.append(nrm((d_model,), 0.01)[None, :])
        ln1g_l.append(jnp.ones((1, d_model), jnp.float32))
        ln1b_l.append(jnp.zeros((1, d_model), jnp.float32))
        wff1_l.append(nrm((d_model, dim_ff)))
        bff1_l.append(nrm((dim_ff,), 0.01)[None, :])
        wff2_l.append(nrm((dim_ff, d_model)))
        bff2_l.append(nrm((d_model,), 0.01)[None, :])
        ln2g_l.append(jnp.ones((1, d_model), jnp.float32))
        ln2b_l.append(jnp.zeros((1, d_model), jnp.float32))

    # per-layer weights stacked on a leading L axis; MXU operands pre-cast to bf16
    p["wqkv"] = jnp.stack(wqkv_l).astype(jnp.bfloat16)             # [L, D, 3D]
    p["bqkv"] = jnp.stack(bqkv_l)                                  # [L, 1, 3D]
    p["wo"] = jnp.stack(wo_l).astype(jnp.bfloat16)                 # [L, D, D]
    p["bo"] = jnp.stack(bo_l)                                      # [L, 1, D]
    p["ln1_g"] = jnp.stack(ln1g_l)
    p["ln1_b"] = jnp.stack(ln1b_l)
    p["wff1"] = jnp.stack(wff1_l).astype(jnp.bfloat16)             # [L, D, F]
    p["bff1"] = jnp.stack(bff1_l)                                  # [L, 1, F]
    p["wff2"] = jnp.stack(wff2_l).astype(jnp.bfloat16)             # [L, F, D]
    p["bff2"] = jnp.stack(bff2_l)                                  # [L, 1, D]
    p["ln2_g"] = jnp.stack(ln2g_l)
    p["ln2_b"] = jnp.stack(ln2b_l)
    return p


# ----------------------------- forward -----------------------------
def transformer_node_encoder_forward(params, padded_h_node, src_padding_mask):
    """padded_h_node: [N_max, B, D] f32; src_padding_mask: [B, N_max] bool (True = pad)."""
    n_max, B, D = padded_h_node.shape
    S = n_max + 1
    L = params["num_layers"]
    nhead = params["nhead"]

    # ---- append CLS token + an always-unmasked mask column (glue) ----
    cls = jnp.broadcast_to(params["cls"], (1, B, D)).astype(jnp.float32)
    h = jnp.concatenate([padded_h_node.astype(jnp.float32), cls], axis=0)          # [S, B, D]
    mask = jnp.concatenate([src_padding_mask, jnp.zeros((B, 1), bool)], axis=1)    # [B, S]

    # batch-first, lane-dense layout for the kernel
    x = jnp.transpose(h, (1, 0, 2))                                                # [B, S, D]
    mbias = jnp.where(mask, jnp.float32(NEG_INF), jnp.float32(0.0))[:, None, :]    # [B, 1, S]

    TB = _pick_tb(B, S)
    grid = (B // TB, L)

    def layer_spec(a):
        nd = a.ndim
        return pl.BlockSpec((1,) + a.shape[1:], lambda b, l, _nd=nd: (l,) + (0,) * (_nd - 1))

    def global_spec(a):
        nd = a.ndim
        return pl.BlockSpec(a.shape, lambda b, l, _nd=nd: (0,) * _nd)

    kernel = functools.partial(_fused_encoder_kernel, nhead=nhead,
                               norm_input=params["norm_input"])

    y = pl.pallas_call(
        kernel,
        grid=grid,
        in_specs=[
            pl.BlockSpec((TB, S, D), lambda b, l: (b, 0, 0)),        # activations (read at l==0)
            pl.BlockSpec((TB, 1, S), lambda b, l: (b, 0, 0)),        # key-padding bias
            global_spec(params["norm_in_g"]), global_spec(params["norm_in_b"]),
            global_spec(params["enc_norm_g"]), global_spec(params["enc_norm_b"]),
            layer_spec(params["wqkv"]), layer_spec(params["bqkv"]),
            layer_spec(params["wo"]), layer_spec(params["bo"]),
            layer_spec(params["ln1_g"]), layer_spec(params["ln1_b"]),
            layer_spec(params["wff1"]), layer_spec(params["bff1"]),
            layer_spec(params["wff2"]), layer_spec(params["bff2"]),
            layer_spec(params["ln2_g"]), layer_spec(params["ln2_b"]),
        ],
        out_specs=pl.BlockSpec((TB, S, D), lambda b, l: (b, 0, 0)),
        out_shape=jax.ShapeDtypeStruct((B, S, D), jnp.float32),
        scratch_shapes=[pltpu.VMEM((TB, S, D), jnp.float32)],        # residual stream across l
        compiler_params=pltpu.CompilerParams(
            dimension_semantics=("parallel", "arbitrary"),           # batches across TCs, layers serial
            vmem_limit_bytes=_vmem_limit_bytes()),
    )(x, mbias,
      params["norm_in_g"], params["norm_in_b"],
      params["enc_norm_g"], params["enc_norm_b"],
      params["wqkv"], params["bqkv"], params["wo"], params["bo"],
      params["ln1_g"], params["ln1_b"],
      params["wff1"], params["bff1"], params["wff2"], params["bff2"],
      params["ln2_g"], params["ln2_b"])

    transformer_out = jnp.transpose(y, (1, 0, 2))                    # [S, B, D]
    return transformer_out, mask


# ----------------------------- example -----------------------------
if __name__ == "__main__":
    key = jax.random.PRNGKey(0)

    # lane-dense model dims (multiples of 128 per the perf review), still small
    D_MODEL, NHEAD, DIM_FF = 128, 4, 256
    NUM_ENC_LAYERS = 2
    B, N_MAX = 4, 7                                   # S = 8 -> grid = (B//TB=2, L=2)

    k_h, k_p = jax.random.split(key, 2)
    padded_h_node = jax.random.normal(k_h, (N_MAX, B, D_MODEL), dtype=jnp.float32)
    lens = jnp.array([7, 5, 3, 6], jnp.int32)         # nodes per graph
    src_padding_mask = jnp.arange(N_MAX)[None, :] >= lens[:, None]   # [B, N_MAX], True = pad

    params = init_params(k_p, D_MODEL, NHEAD, DIM_FF, NUM_ENC_LAYERS,
                         transformer_norm_input=True)

    out, out_mask = transformer_node_encoder_forward(params, padded_h_node, src_padding_mask)
    out = jax.block_until_ready(out)

    assert out.shape == (N_MAX + 1, B, D_MODEL), out.shape
    assert out_mask.shape == (B, N_MAX + 1), out_mask.shape
    assert bool(jnp.all(jnp.isfinite(out)))
    print("KERNEL_OK")
</pallas_src>

<mosaic_0001>
module attributes {stable_mosaic.version = 11 : i64} {
  func.func @_fused_encoder_kernel(%arg0: i32, %arg1: i32, %arg2: memref<2x8x128xf32, #tpu.memory_space<vmem>>, %arg3: memref<2x1x8xf32, #tpu.memory_space<vmem>>, %arg4: memref<1x128xf32, #tpu.memory_space<vmem>>, %arg5: memref<1x128xf32, #tpu.memory_space<vmem>>, %arg6: memref<1x128xf32, #tpu.memory_space<vmem>>, %arg7: memref<1x128xf32, #tpu.memory_space<vmem>>, %arg8: memref<1x128x384xbf16, #tpu.memory_space<vmem>>, %arg9: memref<1x1x384xf32, #tpu.memory_space<vmem>>, %arg10: memref<1x128x128xbf16, #tpu.memory_space<vmem>>, %arg11: memref<1x1x128xf32, #tpu.memory_space<vmem>>, %arg12: memref<1x1x128xf32, #tpu.memory_space<vmem>>, %arg13: memref<1x1x128xf32, #tpu.memory_space<vmem>>, %arg14: memref<1x128x256xbf16, #tpu.memory_space<vmem>>, %arg15: memref<1x1x256xf32, #tpu.memory_space<vmem>>, %arg16: memref<1x256x128xbf16, #tpu.memory_space<vmem>>, %arg17: memref<1x1x128xf32, #tpu.memory_space<vmem>>, %arg18: memref<1x1x128xf32, #tpu.memory_space<vmem>>, %arg19: memref<1x1x128xf32, #tpu.memory_space<vmem>>, %arg20: memref<2x8x128xf32, #tpu.memory_space<vmem>>, %arg21: memref<2x8x128xf32, #tpu.memory_space<vmem>>) attributes {dimension_semantics = [#tpu.dimension_semantics<parallel>, #tpu.dimension_semantics<arbitrary>], iteration_bounds = array<i64: 2, 2>, scalar_prefetch = 0 : i64, scratch_operands = 1 : i64, tpu.core_type = #tpu.core_type<tc>, window_params = [{transform_indices = @transform_0, window_bounds = array<i64: 2, 8, 128>}, {transform_indices = @transform_1, window_bounds = array<i64: 2, 1, 8>}, {pipeline_mode = #tpu.pipeline_mode<synchronous>, transform_indices = @transform_2, window_bounds = array<i64: 1, 128>}, {pipeline_mode = #tpu.pipeline_mode<synchronous>, transform_indices = @transform_3, window_bounds = array<i64: 1, 128>}, {pipeline_mode = #tpu.pipeline_mode<synchronous>, transform_indices = @transform_4, window_bounds = array<i64: 1, 128>}, {pipeline_mode = #tpu.pipeline_mode<synchronous>, transform_indices = @transform_5, window_bounds = array<i64: 1, 128>}, {transform_indices = @transform_6, window_bounds = array<i64: 1, 128, 384>}, {transform_indices = @transform_7, window_bounds = array<i64: 1, 1, 384>}, {transform_indices = @transform_8, window_bounds = array<i64: 1, 128, 128>}, {transform_indices = @transform_9, window_bounds = array<i64: 1, 1, 128>}, {transform_indices = @transform_10, window_bounds = array<i64: 1, 1, 128>}, {transform_indices = @transform_11, window_bounds = array<i64: 1, 1, 128>}, {transform_indices = @transform_12, window_bounds = array<i64: 1, 128, 256>}, {transform_indices = @transform_13, window_bounds = array<i64: 1, 1, 256>}, {transform_indices = @transform_14, window_bounds = array<i64: 1, 256, 128>}, {transform_indices = @transform_15, window_bounds = array<i64: 1, 1, 128>}, {transform_indices = @transform_16, window_bounds = array<i64: 1, 1, 128>}, {transform_indices = @transform_17, window_bounds = array<i64: 1, 1, 128>}, {transform_indices = @transform_18, window_bounds = array<i64: 2, 8, 128>}]} {
    %c0_i32 = arith.constant 0 : i32
    %0 = arith.cmpi eq, %arg1, %c0_i32 : i32
    %1 = arith.extui %0 : i1 to i32
    %c0_i32_0 = arith.constant 0 : i32
    %2 = arith.cmpi ne, %1, %c0_i32_0 : i32
    scf.if %2 {
      %c0_76 = arith.constant 0 : index
      %c0_77 = arith.constant 0 : index
      %c0_78 = arith.constant 0 : index
      %182 = vector.load %arg2[%c0_76, %c0_77, %c0_78] : memref<2x8x128xf32, #tpu.memory_space<vmem>>, vector<2x8x128xf32>
      %c0_79 = arith.constant 0 : index
      %c0_80 = arith.constant 0 : index
      %183 = vector.load %arg4[%c0_79, %c0_80] : memref<1x128xf32, #tpu.memory_space<vmem>>, vector<1x128xf32>
      %c0_81 = arith.constant 0 : index
      %c0_82 = arith.constant 0 : index
      %184 = vector.load %arg5[%c0_81, %c0_82] : memref<1x128xf32, #tpu.memory_space<vmem>>, vector<1x128xf32>
      %cst_83 = arith.constant dense<0.000000e+00> : vector<2x8xf32>
      %185 = vector.multi_reduction <add>, %182, %cst_83 [2] : vector<2x8x128xf32> to vector<2x8xf32>
      %186 = vector.shape_cast %185 : vector<2x8xf32> to vector<2x8x1xf32>
      %cst_84 = arith.constant 1.280000e+02 : f32
      %187 = vector.broadcast %cst_84 : f32 to vector<2x8x1xf32>
      %188 = arith.divf %186, %187 : vector<2x8x1xf32>
      %189 = vector.broadcast %188 : vector<2x8x1xf32> to vector<2x8x128xf32>
      %190 = arith.subf %182, %189 : vector<2x8x128xf32>
      %191 = arith.mulf %190, %190 : vector<2x8x128xf32>
      %cst_85 = arith.constant dense<0.000000e+00> : vector<2x8xf32>
      %192 = vector.multi_reduction <add>, %191, %cst_85 [2] : vector<2x8x128xf32> to vector<2x8xf32>
      %193 = vector.shape_cast %192 : vector<2x8xf32> to vector<2x8x1xf32>
      %cst_86 = arith.constant 1.280000e+02 : f32
      %194 = vector.broadcast %cst_86 : f32 to vector<2x8x1xf32>
      %195 = arith.divf %193, %194 : vector<2x8x1xf32>
      %cst_87 = arith.constant 9.99999974E-6 : f32
      %196 = vector.broadcast %cst_87 : f32 to vector<2x8x1xf32>
      %197 = arith.addf %195, %196 : vector<2x8x1xf32>
      %198 = math.rsqrt %197 : vector<2x8x1xf32>
      %199 = vector.broadcast %198 : vector<2x8x1xf32> to vector<2x8x128xf32>
      %200 = arith.mulf %190, %199 : vector<2x8x128xf32>
      %201 = vector.shape_cast %183 : vector<1x128xf32> to vector<1x1x128xf32>
      %202 = vector.broadcast %201 : vector<1x1x128xf32> to vector<2x8x128xf32>
      %203 = arith.mulf %200, %202 : vector<2x8x128xf32>
      %204 = vector.shape_cast %184 : vector<1x128xf32> to vector<1x1x128xf32>
      %205 = vector.broadcast %204 : vector<1x1x128xf32> to vector<2x8x128xf32>
      %206 = arith.addf %203, %205 : vector<2x8x128xf32>
      %c0_88 = arith.constant 0 : index
      %c0_89 = arith.constant 0 : index
      %c0_90 = arith.constant 0 : index
      %207 = vector.load %arg21[%c0_88, %c0_89, %c0_90] : memref<2x8x128xf32, #tpu.memory_space<vmem>>, vector<2x8x128xf32>
      tpu.vector_store %arg21[%c0_88, %c0_89, %c0_90], %206 {strides = array<i32>} : memref<2x8x128xf32, #tpu.memory_space<vmem>>, vector<2x8x128xf32>,
    } else {
    }
    %c0 = arith.constant 0 : index
    %c0_1 = arith.constant 0 : index
    %c0_2 = arith.constant 0 : index
    %3 = vector.load %arg21[%c0, %c0_1, %c0_2] : memref<2x8x128xf32, #tpu.memory_space<vmem>>, vector<2x8x128xf32>
    %4 = vector.shape_cast %3 : vector<2x8x128xf32> to vector<16x128xf32>
    %5 = arith.truncf %4 : vector<16x128xf32> to vector<16x128xbf16>
    %c0_3 = arith.constant 0 : index
    %c0_4 = arith.constant 0 : index
    %c0_5 = arith.constant 0 : index
    %6 = vector.load %arg8[%c0_3, %c0_4, %c0_5] : memref<1x128x384xbf16, #tpu.memory_space<vmem>>, vector<1x128x384xbf16>
    %7 = vector.shape_cast %6 : vector<1x128x384xbf16> to vector<128x384xbf16>
    %cst = arith.constant dense<0.000000e+00> : vector<16x384xf32>
    %8 = tpu.matmul %5, %7, %cst {dimension_numbers = #tpu.dot_dimension_numbers<[1], [0], [0], [1], [0, 0, 1, 1], [], []>} : vector<16x128xbf16>, vector<128x384xbf16>, vector<16x384xf32> -> vector<16x384xf32>
    %c0_6 = arith.constant 0 : index
    %c0_7 = arith.constant 0 : index
    %c0_8 = arith.constant 0 : index
    %9 = vector.load %arg9[%c0_6, %c0_7, %c0_8] : memref<1x1x384xf32, #tpu.memory_space<vmem>>, vector<1x1x384xf32>
    %10 = vector.shape_cast %9 : vector<1x1x384xf32> to vector<1x384xf32>
    %11 = vector.broadcast %10 : vector<1x384xf32> to vector<16x384xf32>
    %12 = arith.addf %8, %11 : vector<16x384xf32>
    %13 = vector.shape_cast %12 : vector<16x384xf32> to vector<2x8x384xf32>
    %c0_9 = arith.constant 0 : index
    %c0_10 = arith.constant 0 : index
    %c0_11 = arith.constant 0 : index
    %14 = vector.load %arg3[%c0_9, %c0_10, %c0_11] : memref<2x1x8xf32, #tpu.memory_space<vmem>>, vector<2x1x8xf32>
    %15 = vector.extract_strided_slice %13 {offsets = [0, 0, 0], sizes = [2, 8, 32], strides = [1, 1, 1]} : vector<2x8x384xf32> to vector<2x8x32xf32>
    %16 = vector.extract_strided_slice %13 {offsets = [0, 0, 128], sizes = [2, 8, 32], strides = [1, 1, 1]} : vector<2x8x384xf32> to vector<2x8x32xf32>
    %17 = vector.extract_strided_slice %13 {offsets = [0, 0, 256], sizes = [2, 8, 32], strides = [1, 1, 1]} : vector<2x8x384xf32> to vector<2x8x32xf32>
    %18 = arith.truncf %15 : vector<2x8x32xf32> to vector<2x8x32xbf16>
    %19 = arith.truncf %16 : vector<2x8x32xf32> to vector<2x8x32xbf16>
    "tpu.trace_start"() <{level = 10 : i32, message = "bqd,bkd->bqk"}> : () -> ()
    %cst_12 = arith.constant dense<0.000000e+00> : vector<2x8x8xf32>
    %20 = tpu.matmul %18, %19, %cst_12 {dimension_numbers = #tpu.dot_dimension_numbers<[2], [2], [1], [1], [0, 0, 0, 1, 1, 1], [0], [0]>} : vector<2x8x32xbf16>, vector<2x8x32xbf16>, vector<2x8x8xf32> -> vector<2x8x8xf32>
    "tpu.trace_stop"() : () -> ()
    %21 = vector.broadcast %14 : vector<2x1x8xf32> to vector<2x8x8xf32>
    %22 = arith.addf %20, %21 : vector<2x8x8xf32>
    %cst_13 = arith.constant dense<0xFF800000> : vector<2x8xf32>
    %23 = vector.multi_reduction <maximumf>, %22, %cst_13 [2] : vector<2x8x8xf32> to vector<2x8xf32>
    %24 = vector.shape_cast %23 : vector<2x8xf32> to vector<2x8x1xf32>
    %25 = vector.broadcast %24 : vector<2x8x1xf32> to vector<2x8x8xf32>
    %26 = arith.subf %22, %25 : vector<2x8x8xf32>
    %27 = math.exp %26 : vector<2x8x8xf32>
    %cst_14 = arith.constant dense<0.000000e+00> : vector<2x8xf32>
    %28 = vector.multi_reduction <add>, %27, %cst_14 [2] : vector<2x8x8xf32> to vector<2x8xf32>
    %29 = vector.shape_cast %28 : vector<2x8xf32> to vector<2x8x1xf32>
    %30 = tpu.reciprocal %29 {approx = true} : vector<2x8x1xf32> -> vector<2x8x1xf32>
    %31 = vector.broadcast %30 : vector<2x8x1xf32> to vector<2x8x8xf32>
    %32 = arith.mulf %27, %31 : vector<2x8x8xf32>
    %33 = arith.truncf %32 : vector<2x8x8xf32> to vector<2x8x8xbf16>
    %34 = arith.truncf %17 : vector<2x8x32xf32> to vector<2x8x32xbf16>
    "tpu.trace_start"() <{level = 10 : i32, message = "bqk,bkd->bqd"}> : () -> ()
    %cst_15 = arith.constant dense<0.000000e+00> : vector<2x8x32xf32>
    %35 = tpu.matmul %33, %34, %cst_15 {dimension_numbers = #tpu.dot_dimension_numbers<[2], [1], [1], [2], [0, 0, 0, 1, 1, 2], [0], [0]>} : vector<2x8x8xbf16>, vector<2x8x32xbf16>, vector<2x8x32xf32> -> vector<2x8x32xf32>
    "tpu.trace_stop"() : () -> ()
    %36 = vector.extract_strided_slice %13 {offsets = [0, 0, 32], sizes = [2, 8, 32], strides = [1, 1, 1]} : vector<2x8x384xf32> to vector<2x8x32xf32>
    %37 = vector.extract_strided_slice %13 {offsets = [0, 0, 160], sizes = [2, 8, 32], strides = [1, 1, 1]} : vector<2x8x384xf32> to vector<2x8x32xf32>
    %38 = vector.extract_strided_slice %13 {offsets = [0, 0, 288], sizes = [2, 8, 32], strides = [1, 1, 1]} : vector<2x8x384xf32> to vector<2x8x32xf32>
    %39 = arith.truncf %36 : vector<2x8x32xf32> to vector<2x8x32xbf16>
    %40 = arith.truncf %37 : vector<2x8x32xf32> to vector<2x8x32xbf16>
    "tpu.trace_start"() <{level = 10 : i32, message = "bqd,bkd->bqk"}> : () -> ()
    %cst_16 = arith.constant dense<0.000000e+00> : vector<2x8x8xf32>
    %41 = tpu.matmul %39, %40, %cst_16 {dimension_numbers = #tpu.dot_dimension_numbers<[2], [2], [1], [1], [0, 0, 0, 1, 1, 1], [0], [0]>} : vector<2x8x32xbf16>, vector<2x8x32xbf16>, vector<2x8x8xf32> -> vector<2x8x8xf32>
    "tpu.trace_stop"() : () -> ()
    %42 = vector.broadcast %14 : vector<2x1x8xf32> to vector<2x8x8xf32>
    %43 = arith.addf %41, %42 : vector<2x8x8xf32>
    %cst_17 = arith.constant dense<0xFF800000> : vector<2x8xf32>
    %44 = vector.multi_reduction <maximumf>, %43, %cst_17 [2] : vector<2x8x8xf32> to vector<2x8xf32>
    %45 = vector.shape_cast %44 : vector<2x8xf32> to vector<2x8x1xf32>
    %46 = vector.broadcast %45 : vector<2x8x1xf32> to vector<2x8x8xf32>
    %47 = arith.subf %43, %46 : vector<2x8x8xf32>
    %48 = math.exp %47 : vector<2x8x8xf32>
    %cst_18 = arith.constant dense<0.000000e+00> : vector<2x8xf32>
    %49 = vector.multi_reduction <add>, %48, %cst_18 [2] : vector<2x8x8xf32> to vector<2x8xf32>
    %50 = vector.shape_cast %49 : vector<2x8xf32> to vector<2x8x1xf32>
    %51 = tpu.reciprocal %50 {approx = true} : vector<2x8x1xf32> -> vector<2x8x1xf32>
    %52 = vector.broadcast %51 : vector<2x8x1xf32> to vector<2x8x8xf32>
    %53 = arith.mulf %48, %52 : vector<2x8x8xf32>
    %54 = arith.truncf %53 : vector<2x8x8xf32> to vector<2x8x8xbf16>
    %55 = arith.truncf %38 : vector<2x8x32xf32> to vector<2x8x32xbf16>
    "tpu.trace_start"() <{level = 10 : i32, message = "bqk,bkd->bqd"}> : () -> ()
    %cst_19 = arith.constant dense<0.000000e+00> : vector<2x8x32xf32>
    %56 = tpu.matmul %54, %55, %cst_19 {dimension_numbers = #tpu.dot_dimension_numbers<[2], [1], [1], [2], [0, 0, 0, 1, 1, 2], [0], [0]>} : vector<2x8x8xbf16>, vector<2x8x32xbf16>, vector<2x8x32xf32> -> vector<2x8x32xf32>
    "tpu.trace_stop"() : () -> ()
    %57 = vector.extract_strided_slice %13 {offsets = [0, 0, 64], sizes = [2, 8, 32], strides = [1, 1, 1]} : vector<2x8x384xf32> to vector<2x8x32xf32>
    %58 = vector.extract_strided_slice %13 {offsets = [0, 0, 192], sizes = [2, 8, 32], strides = [1, 1, 1]} : vector<2x8x384xf32> to vector<2x8x32xf32>
    %59 = vector.extract_strided_slice %13 {offsets = [0, 0, 320], sizes = [2, 8, 32], strides = [1, 1, 1]} : vector<2x8x384xf32> to vector<2x8x32xf32>
    %60 = arith.truncf %57 : vector<2x8x32xf32> to vector<2x8x32xbf16>
    %61 = arith.truncf %58 : vector<2x8x32xf32> to vector<2x8x32xbf16>
    "tpu.trace_start"() <{level = 10 : i32, message = "bqd,bkd->bqk"}> : () -> ()
    %cst_20 = arith.constant dense<0.000000e+00> : vector<2x8x8xf32>
    %62 = tpu.matmul %60, %61, %cst_20 {dimension_numbers = #tpu.dot_dimension_numbers<[2], [2], [1], [1], [0, 0, 0, 1, 1, 1], [0], [0]>} : vector<2x8x32xbf16>, vector<2x8x32xbf16>, vector<2x8x8xf32> -> vector<2x8x8xf32>
    "tpu.trace_stop"() : () -> ()
    %63 = vector.broadcast %14 : vector<2x1x8xf32> to vector<2x8x8xf32>
    %64 = arith.addf %62, %63 : vector<2x8x8xf32>
    %cst_21 = arith.constant dense<0xFF800000> : vector<2x8xf32>
    %65 = vector.multi_reduction <maximumf>, %64, %cst_21 [2] : vector<2x8x8xf32> to vector<2x8xf32>
    %66 = vector.shape_cast %65 : vector<2x8xf32> to vector<2x8x1xf32>
    %67 = vector.broadcast %66 : vector<2x8x1xf32> to vector<2x8x8xf32>
    %68 = arith.subf %64, %67 : vector<2x8x8xf32>
    %69 = math.exp %68 : vector<2x8x8xf32>
    %cst_22 = arith.constant dense<0.000000e+00> : vector<2x8xf32>
    %70 = vector.multi_reduction <add>, %69, %cst_22 [2] : vector<2x8x8xf32> to vector<2x8xf32>
    %71 = vector.shape_cast %70 : vector<2x8xf32> to vector<2x8x1xf32>
    %72 = tpu.reciprocal %71 {approx = true} : vector<2x8x1xf32> -> vector<2x8x1xf32>
    %73 = vector.broadcast %72 : vector<2x8x1xf32> to vector<2x8x8xf32>
    %74 = arith.mulf %69, %73 : vector<2x8x8xf32>
    %75 = arith.truncf %74 : vector<2x8x8xf32> to vector<2x8x8xbf16>
    %76 = arith.truncf %59 : vector<2x8x32xf32> to vector<2x8x32xbf16>
    "tpu.trace_start"() <{level = 10 : i32, message = "bqk,bkd->bqd"}> : () -> ()
    %cst_23 = arith.constant dense<0.000000e+00> : vector<2x8x32xf32>
    %77 = tpu.matmul %75, %76, %cst_23 {dimension_numbers = #tpu.dot_dimension_numbers<[2], [1], [1], [2], [0, 0, 0, 1, 1, 2], [0], [0]>} : vector<2x8x8xbf16>, vector<2x8x32xbf16>, vector<2x8x32xf32> -> vector<2x8x32xf32>
    "tpu.trace_stop"() : () -> ()
    %78 = vector.extract_strided_slice %13 {offsets = [0, 0, 96], sizes = [2, 8, 32], strides = [1, 1, 1]} : vector<2x8x384xf32> to vector<2x8x32xf32>
    %79 = vector.extract_strided_slice %13 {offsets = [0, 0, 224], sizes = [2, 8, 32], strides = [1, 1, 1]} : vector<2x8x384xf32> to vector<2x8x32xf32>
    %80 = vector.extract_strided_slice %13 {offsets = [0, 0, 352], sizes = [2, 8, 32], strides = [1, 1, 1]} : vector<2x8x384xf32> to vector<2x8x32xf32>
    %81 = arith.truncf %78 : vector<2x8x32xf32> to vector<2x8x32xbf16>
    %82 = arith.truncf %79 : vector<2x8x32xf32> to vector<2x8x32xbf16>
    "tpu.trace_start"() <{level = 10 : i32, message = "bqd,bkd->bqk"}> : () -> ()
    %cst_24 = arith.constant dense<0.000000e+00> : vector<2x8x8xf32>
    %83 = tpu.matmul %81, %82, %cst_24 {dimension_numbers = #tpu.dot_dimension_numbers<[2], [2], [1], [1], [0, 0, 0, 1, 1, 1], [0], [0]>} : vector<2x8x32xbf16>, vector<2x8x32xbf16>, vector<2x8x8xf32> -> vector<2x8x8xf32>
    "tpu.trace_stop"() : () -> ()
    %84 = vector.broadcast %14 : vector<2x1x8xf32> to vector<2x8x8xf32>
    %85 = arith.addf %83, %84 : vector<2x8x8xf32>
    %cst_25 = arith.constant dense<0xFF800000> : vector<2x8xf32>
    %86 = vector.multi_reduction <maximumf>, %85, %cst_25 [2] : vector<2x8x8xf32> to vector<2x8xf32>
    %87 = vector.shape_cast %86 : vector<2x8xf32> to vector<2x8x1xf32>
    %88 = vector.broadcast %87 : vector<2x8x1xf32> to vector<2x8x8xf32>
    %89 = arith.subf %85, %88 : vector<2x8x8xf32>
    %90 = math.exp %89 : vector<2x8x8xf32>
    %cst_26 = arith.constant dense<0.000000e+00> : vector<2x8xf32>
    %91 = vector.multi_reduction <add>, %90, %cst_26 [2] : vector<2x8x8xf32> to vector<2x8xf32>
    %92 = vector.shape_cast %91 : vector<2x8xf32> to vector<2x8x1xf32>
    %93 = tpu.reciprocal %92 {approx = true} : vector<2x8x1xf32> -> vector<2x8x1xf32>
    %94 = vector.broadcast %93 : vector<2x8x1xf32> to vector<2x8x8xf32>
    %95 = arith.mulf %90, %94 : vector<2x8x8xf32>
    %96 = arith.truncf %95 : vector<2x8x8xf32> to vector<2x8x8xbf16>
    %97 = arith.truncf %80 : vector<2x8x32xf32> to vector<2x8x32xbf16>
    "tpu.trace_start"() <{level = 10 : i32, message = "bqk,bkd->bqd"}> : () -> ()
    %cst_27 = arith.constant dense<0.000000e+00> : vector<2x8x32xf32>
    %98 = tpu.matmul %96, %97, %cst_27 {dimension_numbers = #tpu.dot_dimension_numbers<[2], [1], [1], [2], [0, 0, 0, 1, 1, 2], [0], [0]>} : vector<2x8x8xbf16>, vector<2x8x32xbf16>, vector<2x8x32xf32> -> vector<2x8x32xf32>
    "tpu.trace_stop"() : () -> ()
    %99 = tpu.concatenate %35, %56, %77, %98 in 2 : vector<2x8x32xf32>, vector<2x8x32xf32>, vector<2x8x32xf32>, vector<2x8x32xf32> -> vector<2x8x128xf32>
    %100 = vector.shape_cast %99 : vector<2x8x128xf32> to vector<16x128xf32>
    %101 = arith.truncf %100 : vector<16x128xf32> to vector<16x128xbf16>
    %c0_28 = arith.constant 0 : index
    %c0_29 = arith.constant 0 : index
    %c0_30 = arith.constant 0 : index
    %102 = vector.load %arg10[%c0_28, %c0_29, %c0_30] : memref<1x128x128xbf16, #tpu.memory_space<vmem>>, vector<1x128x128xbf16>
    %103 = vector.shape_cast %102 : vector<1x128x128xbf16> to vector<128x128xbf16>
    %cst_31 = arith.constant dense<0.000000e+00> : vector<16x128xf32>
    %104 = tpu.matmul %101, %103, %cst_31 {dimension_numbers = #tpu.dot_dimension_numbers<[1], [0], [0], [1], [0, 0, 1, 1], [], []>} : vector<16x128xbf16>, vector<128x128xbf16>, vector<16x128xf32> -> vector<16x128xf32>
    %c0_32 = arith.constant 0 : index
    %c0_33 = arith.constant 0 : index
    %c0_34 = arith.constant 0 : index
    %105 = vector.load %arg11[%c0_32, %c0_33, %c0_34] : memref<1x1x128xf32, #tpu.memory_space<vmem>>, vector<1x1x128xf32>
    %106 = vector.shape_cast %105 : vector<1x1x128xf32> to vector<1x128xf32>
    %107 = vector.broadcast %106 : vector<1x128xf32> to vector<16x128xf32>
    %108 = arith.addf %104, %107 : vector<16x128xf32>
    %109 = arith.addf %4, %108 : vector<16x128xf32>
    %c0_35 = arith.constant 0 : index
    %c0_36 = arith.constant 0 : index
    %c0_37 = arith.constant 0 : index
    %110 = vector.load %arg12[%c0_35, %c0_36, %c0_37] : memref<1x1x128xf32, #tpu.memory_space<vmem>>, vector<1x1x128xf32>
    %111 = vector.shape_cast %110 : vector<1x1x128xf32> to vector<1x128xf32>
    %c0_38 = arith.constant 0 : index
    %c0_39 = arith.constant 0 : index
    %c0_40 = arith.constant 0 : index
    %112 = vector.load %arg13[%c0_38, %c0_39, %c0_40] : memref<1x1x128xf32, #tpu.memory_space<vmem>>, vector<1x1x128xf32>
    %113 = vector.shape_cast %112 : vector<1x1x128xf32> to vector<1x128xf32>
    %cst_41 = arith.constant dense<0.000000e+00> : vector<16xf32>
    %114 = vector.multi_reduction <add>, %109, %cst_41 [1] : vector<16x128xf32> to vector<16xf32>
    %115 = vector.shape_cast %114 : vector<16xf32> to vector<16x1xf32>
    %cst_42 = arith.constant 1.280000e+02 : f32
    %116 = vector.broadcast %cst_42 : f32 to vector<16x1xf32>
    %117 = arith.divf %115, %116 : vector<16x1xf32>
    %118 = vector.broadcast %117 : vector<16x1xf32> to vector<16x128xf32>
    %119 = arith.subf %109, %118 : vector<16x128xf32>
    %120 = arith.mulf %119, %119 : vector<16x128xf32>
    %cst_43 = arith.constant dense<0.000000e+00> : vector<16xf32>
    %121 = vector.multi_reduction <add>, %120, %cst_43 [1] : vector<16x128xf32> to vector<16xf32>
    %122 = vector.shape_cast %121 : vector<16xf32> to vector<16x1xf32>
    %cst_44 = arith.constant 1.280000e+02 : f32
    %123 = vector.broadcast %cst_44 : f32 to vector<16x1xf32>
    %124 = arith.divf %122, %123 : vector<16x1xf32>
    %cst_45 = arith.constant 9.99999974E-6 : f32
    %125 = vector.broadcast %cst_45 : f32 to vector<16x1xf32>
    %126 = arith.addf %124, %125 : vector<16x1xf32>
    %127 = math.rsqrt %126 : vector<16x1xf32>
    %128 = vector.broadcast %127 : vector<16x1xf32> to vector<16x128xf32>
    %129 = arith.mulf %119, %128 : vector<16x128xf32>
    %130 = vector.broadcast %111 : vector<1x128xf32> to vector<16x128xf32>
    %131 = arith.mulf %129, %130 : vector<16x128xf32>
    %132 = vector.broadcast %113 : vector<1x128xf32> to vector<16x128xf32>
    %133 = arith.addf %131, %132 : vector<16x128xf32>
    %134 = arith.truncf %133 : vector<16x128xf32> to vector<16x128xbf16>
    %c0_46 = arith.constant 0 : index
    %c0_47 = arith.constant 0 : index
    %c0_48 = arith.constant 0 : index
    %135 = vector.load %arg14[%c0_46, %c0_47, %c0_48] : memref<1x128x256xbf16, #tpu.memory_space<vmem>>, vector<1x128x256xbf16>
    %136 = vector.shape_cast %135 : vector<1x128x256xbf16> to vector<128x256xbf16>
    %cst_49 = arith.constant dense<0.000000e+00> : vector<16x256xf32>
    %137 = tpu.matmul %134, %136, %cst_49 {dimension_numbers = #tpu.dot_dimension_numbers<[1], [0], [0], [1], [0, 0, 1, 1], [], []>} : vector<16x128xbf16>, vector<128x256xbf16>, vector<16x256xf32> -> vector<16x256xf32>
    %c0_50 = arith.constant 0 : index
    %c0_51 = arith.constant 0 : index
    %c0_52 = arith.constant 0 : index
    %138 = vector.load %arg15[%c0_50, %c0_51, %c0_52] : memref<1x1x256xf32, #tpu.memory_space<vmem>>, vector<1x1x256xf32>
    %139 = vector.shape_cast %138 : vector<1x1x256xf32> to vector<1x256xf32>
    %140 = vector.broadcast %139 : vector<1x256xf32> to vector<16x256xf32>
    %141 = arith.addf %137, %140 : vector<16x256xf32>
    %cst_53 = arith.constant 0.000000e+00 : f32
    %142 = vector.broadcast %cst_53 : f32 to vector<16x256xf32>
    %143 = arith.maximumf %141, %142 : vector<16x256xf32>
    %144 = arith.truncf %143 : vector<16x256xf32> to vector<16x256xbf16>
    %c0_54 = arith.constant 0 : index
    %c0_55 = arith.constant 0 : index
    %c0_56 = arith.constant 0 : index
    %145 = vector.load %arg16[%c0_54, %c0_55, %c0_56] : memref<1x256x128xbf16, #tpu.memory_space<vmem>>, vector<1x256x128xbf16>
    %146 = vector.shape_cast %145 : vector<1x256x128xbf16> to vector<256x128xbf16>
    %cst_57 = arith.constant dense<0.000000e+00> : vector<16x128xf32>
    %147 = tpu.matmul %144, %146, %cst_57 {dimension_numbers = #tpu.dot_dimension_numbers<[1], [0], [0], [1], [0, 0, 1, 1], [], []>} : vector<16x256xbf16>, vector<256x128xbf16>, vector<16x128xf32> -> vector<16x128xf32>
    %c0_58 = arith.constant 0 : index
    %c0_59 = arith.constant 0 : index
    %c0_60 = arith.constant 0 : index
    %148 = vector.load %arg17[%c0_58, %c0_59, %c0_60] : memref<1x1x128xf32, #tpu.memory_space<vmem>>, vector<1x1x128xf32>
    %149 = vector.shape_cast %148 : vector<1x1x128xf32> to vector<1x128xf32>
    %150 = vector.broadcast %149 : vector<1x128xf32> to vector<16x128xf32>
    %151 = arith.addf %147, %150 : vector<16x128xf32>
    %152 = arith.addf %133, %151 : vector<16x128xf32>
    %c0_61 = arith.constant 0 : index
    %c0_62 = arith.constant 0 : index
    %c0_63 = arith.constant 0 : index
    %153 = vector.load %arg18[%c0_61, %c0_62, %c0_63] : memref<1x1x128xf32, #tpu.memory_space<vmem>>, vector<1x1x128xf32>
    %154 = vector.shape_cast %153 : vector<1x1x128xf32> to vector<1x128xf32>
    %c0_64 = arith.constant 0 : index
    %c0_65 = arith.constant 0 : index
    %c0_66 = arith.constant 0 : index
    %155 = vector.load %arg19[%c0_64, %c0_65, %c0_66] : memref<1x1x128xf32, #tpu.memory_space<vmem>>, vector<1x1x128xf32>
    %156 = vector.shape_cast %155 : vector<1x1x128xf32> to vector<1x128xf32>
    %cst_67 = arith.constant dense<0.000000e+00> : vector<16xf32>
    %157 = vector.multi_reduction <add>, %152, %cst_67 [1] : vector<16x128xf32> to vector<16xf32>
    %158 = vector.shape_cast %157 : vector<16xf32> to vector<16x1xf32>
    %cst_68 = arith.constant 1.280000e+02 : f32
    %159 = vector.broadcast %cst_68 : f32 to vector<16x1xf32>
    %160 = arith.divf %158, %159 : vector<16x1xf32>
    %161 = vector.broadcast %160 : vector<16x1xf32> to vector<16x128xf32>
    %162 = arith.subf %152, %161 : vector<16x128xf32>
    %163 = arith.mulf %162, %162 : vector<16x128xf32>
    %cst_69 = arith.constant dense<0.000000e+00> : vector<16xf32>
    %164 = vector.multi_reduction <add>, %163, %cst_69 [1] : vector<16x128xf32> to vector<16xf32>
    %165 = vector.shape_cast %164 : vector<16xf32> to vector<16x1xf32>
    %cst_70 = arith.constant 1.280000e+02 : f32
    %166 = vector.broadcast %cst_70 : f32 to vector<16x1xf32>
    %167 = arith.divf %165, %166 : vector<16x1xf32>
    %cst_71 = arith.constant 9.99999974E-6 : f32
    %168 = vector.broadcast %cst_71 : f32 to vector<16x1xf32>
    %169 = arith.addf %167, %168 : vector<16x1xf32>
    %170 = math.rsqrt %169 : vector<16x1xf32>
    %171 = vector.broadcast %170 : vector<16x1xf32> to vector<16x128xf32>
    %172 = arith.mulf %162, %171 : vector<16x128xf32>
    %173 = vector.broadcast %154 : vector<1x128xf32> to vector<16x128xf32>
    %174 = arith.mulf %172, %173 : vector<16x128xf32>
    %175 = vector.broadcast %156 : vector<1x128xf32> to vector<16x128xf32>
    %176 = arith.addf %174, %175 : vector<16x128xf32>
    %177 = vector.shape_cast %176 : vector<16x128xf32> to vector<2x8x128xf32>
    %c0_72 = arith.constant 0 : index
    %c0_73 = arith.constant 0 : index
    %c0_74 = arith.constant 0 : index
    %178 = vector.load %arg21[%c0_72, %c0_73, %c0_74] : memref<2x8x128xf32, #tpu.memory_space<vmem>>, vector<2x8x128xf32>
    tpu.vector_store %arg21[%c0_72, %c0_73, %c0_74], %177 {strides = array<i32>} : memref<2x8x128xf32, #tpu.memory_space<vmem>>, vector<2x8x128xf32>,
    %c1_i32 = arith.constant 1 : i32
    %179 = arith.cmpi eq, %arg1, %c1_i32 : i32
    %180 = arith.extui %179 : i1 to i32
    %c0_i32_75 = arith.constant 0 : i32
    %181 = arith.cmpi ne, %180, %c0_i32_75 : i32
    scf.if %181 {
      %c0_76 = arith.constant 0 : index
      %c0_77 = arith.constant 0 : index
      %182 = vector.load %arg6[%c0_76, %c0_77] : memref<1x128xf32, #tpu.memory_space<vmem>>, vector<1x128xf32>
      %c0_78 = arith.constant 0 : index
      %c0_79 = arith.constant 0 : index
      %183 = vector.load %arg7[%c0_78, %c0_79] : memref<1x128xf32, #tpu.memory_space<vmem>>, vector<1x128xf32>
      %cst_80 = arith.constant dense<0.000000e+00> : vector<16xf32>
      %184 = vector.multi_reduction <add>, %176, %cst_80 [1] : vector<16x128xf32> to vector<16xf32>
      %185 = vector.shape_cast %184 : vector<16xf32> to vector<16x1xf32>
      %cst_81 = arith.constant 1.280000e+02 : f32
      %186 = vector.broadcast %cst_81 : f32 to vector<16x1xf32>
      %187 = arith.divf %185, %186 : vector<16x1xf32>
      %188 = vector.broadcast %187 : vector<16x1xf32> to vector<16x128xf32>
      %189 = arith.subf %176, %188 : vector<16x128xf32>
      %190 = arith.mulf %189, %189 : vector<16x128xf32>
      %cst_82 = arith.constant dense<0.000000e+00> : vector<16xf32>
      %191 = vector.multi_reduction <add>, %190, %cst_82 [1] : vector<16x128xf32> to vector<16xf32>
      %192 = vector.shape_cast %191 : vector<16xf32> to vector<16x1xf32>
      %cst_83 = arith.constant 1.280000e+02 : f32
      %193 = vector.broadcast %cst_83 : f32 to vector<16x1xf32>
      %194 = arith.divf %192, %193 : vector<16x1xf32>
      %cst_84 = arith.constant 9.99999974E-6 : f32
      %195 = vector.broadcast %cst_84 : f32 to vector<16x1xf32>
      %196 = arith.addf %194, %195 : vector<16x1xf32>
      %197 = math.rsqrt %196 : vector<16x1xf32>
      %198 = vector.broadcast %197 : vector<16x1xf32> to vector<16x128xf32>
      %199 = arith.mulf %189, %198 : vector<16x128xf32>
      %200 = vector.broadcast %182 : vector<1x128xf32> to vector<16x128xf32>
      %201 = arith.mulf %199, %200 : vector<16x128xf32>
      %202 = vector.broadcast %183 : vector<1x128xf32> to vector<16x128xf32>
      %203 = arith.addf %201, %202 : vector<16x128xf32>
      %204 = vector.shape_cast %203 : vector<16x128xf32> to vector<2x8x128xf32>
      %c0_85 = arith.constant 0 : index
      %c0_86 = arith.constant 0 : index
      %c0_87 = arith.constant 0 : index
      %205 = vector.load %arg20[%c0_85, %c0_86, %c0_87] : memref<2x8x128xf32, #tpu.memory_space<vmem>>, vector<2x8x128xf32>
      tpu.vector_store %arg20[%c0_85, %c0_86, %c0_87], %204 {strides = array<i32>} : memref<2x8x128xf32, #tpu.memory_space<vmem>>, vector<2x8x128xf32>,
    } else {
    }
    return
  }
  func.func @transform_0(%arg0: i32, %arg1: i32) -> (i32, i32, i32) {
    %c0_i32 = arith.constant 0 : i32
    %c0_i32_0 = arith.constant 0 : i32
    %c0_i32_1 = arith.constant 0 : i32
    return %arg0, %c0_i32, %c0_i32_0 : i32, i32, i32
  }
  func.func @transform_1(%arg0: i32, %arg1: i32) -> (i32, i32, i32) {
    %c0_i32 = arith.constant 0 : i32
    %c0_i32_0 = arith.constant 0 : i32
    %c0_i32_1 = arith.constant 0 : i32
    return %arg0, %c0_i32, %c0_i32_0 : i32, i32, i32
  }
  func.func @transform_2(%arg0: i32, %arg1: i32) -> (i32, i32) {
    %c0_i32 = arith.constant 0 : i32
    %c0_i32_0 = arith.constant 0 : i32
    %c0_i32_1 = arith.constant 0 : i32
    return %c0_i32, %c0_i32_0 : i32, i32
  }
  func.func @transform_3(%arg0: i32, %arg1: i32) -> (i32, i32) {
    %c0_i32 = arith.constant 0 : i32
    %c0_i32_0 = arith.constant 0 : i32
    %c0_i32_1 = arith.constant 0 : i32
    return %c0_i32, %c0_i32_0 : i32, i32
  }
  func.func @transform_4(%arg0: i32, %arg1: i32) -> (i32, i32) {
    %c0_i32 = arith.constant 0 : i32
    %c0_i32_0 = arith.constant 0 : i32
    %c0_i32_1 = arith.constant 0 : i32
    return %c0_i32, %c0_i32_0 : i32, i32
  }
  func.func @transform_5(%arg0: i32, %arg1: i32) -> (i32, i32) {
    %c0_i32 = arith.constant 0 : i32
    %c0_i32_0 = arith.constant 0 : i32
    %c0_i32_1 = arith.constant 0 : i32
    return %c0_i32, %c0_i32_0 : i32, i32
  }
  func.func @transform_6(%arg0: i32, %arg1: i32) -> (i32, i32, i32) {
    %c0_i32 = arith.constant 0 : i32
    %c0_i32_0 = arith.constant 0 : i32
    %c0_i32_1 = arith.constant 0 : i32
    return %arg1, %c0_i32, %c0_i32_0 : i32, i32, i32
  }
  func.func @transform_7(%arg0: i32, %arg1: i32) -> (i32, i32, i32) {
    %c0_i32 = arith.constant 0 : i32
    %c0_i32_0 = arith.constant 0 : i32
    %c0_i32_1 = arith.constant 0 : i32
    return %arg1, %c0_i32, %c0_i32_0 : i32, i32, i32
  }
  func.func @transform_8(%arg0: i32, %arg1: i32) -> (i32, i32, i32) {
    %c0_i32 = arith.constant 0 : i32
    %c0_i32_0 = arith.constant 0 : i32
    %c0_i32_1 = arith.constant 0 : i32
    return %arg1, %c0_i32, %c0_i32_0 : i32, i32, i32
  }
  func.func @transform_9(%arg0: i32, %arg1: i32) -> (i32, i32, i32) {
    %c0_i32 = arith.constant 0 : i32
    %c0_i32_0 = arith.constant 0 : i32
    %c0_i32_1 = arith.constant 0 : i32
    return %arg1, %c0_i32, %c0_i32_0 : i32, i32, i32
  }
  func.func @transform_10(%arg0: i32, %arg1: i32) -> (i32, i32, i32) {
    %c0_i32 = arith.constant 0 : i32
    %c0_i32_0 = arith.constant 0 : i32
    %c0_i32_1 = arith.constant 0 : i32
    return %arg1, %c0_i32, %c0_i32_0 : i32, i32, i32
  }
  func.func @transform_11(%arg0: i32, %arg1: i32) -> (i32, i32, i32) {
    %c0_i32 = arith.constant 0 : i32
    %c0_i32_0 = arith.constant 0 : i32
    %c0_i32_1 = arith.constant 0 : i32
    return %arg1, %c0_i32, %c0_i32_0 : i32, i32, i32
  }
  func.func @transform_12(%arg0: i32, %arg1: i32) -> (i32, i32, i32) {
    %c0_i32 = arith.constant 0 : i32
    %c0_i32_0 = arith.constant 0 : i32
    %c0_i32_1 = arith.constant 0 : i32
    return %arg1, %c0_i32, %c0_i32_0 : i32, i32, i32
  }
  func.func @transform_13(%arg0: i32, %arg1: i32) -> (i32, i32, i32) {
    %c0_i32 = arith.constant 0 : i32
    %c0_i32_0 = arith.constant 0 : i32
    %c0_i32_1 = arith.constant 0 : i32
    return %arg1, %c0_i32, %c0_i32_0 : i32, i32, i32
  }
  func.func @transform_14(%arg0: i32, %arg1: i32) -> (i32, i32, i32) {
    %c0_i32 = arith.constant 0 : i32
    %c0_i32_0 = arith.constant 0 : i32
    %c0_i32_1 = arith.constant 0 : i32
    return %arg1, %c0_i32, %c0_i32_0 : i32, i32, i32
  }
  func.func @transform_15(%arg0: i32, %arg1: i32) -> (i32, i32, i32) {
    %c0_i32 = arith.constant 0 : i32
    %c0_i32_0 = arith.constant 0 : i32
    %c0_i32_1 = arith.constant 0 : i32
    return %arg1, %c0_i32, %c0_i32_0 : i32, i32, i32
  }
  func.func @transform_16(%arg0: i32, %arg1: i32) -> (i32, i32, i32) {
    %c0_i32 = arith.constant 0 : i32
    %c0_i32_0 = arith.constant 0 : i32
    %c0_i32_1 = arith.constant 0 : i32
    return %arg1, %c0_i32, %c0_i32_0 : i32, i32, i32
  }
  func.func @transform_17(%arg0: i32, %arg1: i32) -> (i32, i32, i32) {
    %c0_i32 = arith.constant 0 : i32
    %c0_i32_0 = arith.constant 0 : i32
    %c0_i32_1 = arith.constant 0 : i32
    return %arg1, %c0_i32, %c0_i32_0 : i32, i32, i32
  }
  func.func @transform_18(%arg0: i32, %arg1: i32) -> (i32, i32, i32) {
    %c0_i32 = arith.constant 0 : i32
    %c0_i32_0 = arith.constant 0 : i32
    %c0_i32_1 = arith.constant 0 : i32
    return %arg0, %c0_i32, %c0_i32_0 : i32, i32, i32
  }
}

</mosaic_0001>

<llo_original>
// kernel: tpu_custom_call.1
$region0: #{tpu_custom_call.1}
  #allocation0 [shape = 'u32[]', space=smem, size = 0x4, offset = 0x4, fixed_abs, tag = 'smem constant byte address 0x4 - core index']
  #allocation1 [shape = 'u32[144,128]{1,0:T(1,128)}', space=vmem, size = 0x12000, scoped, tag = 'internal scratch']
  #allocation2 [shape = 'f32[2,8,128]{2,1,0:T(8,128)}', space=vmem, size = 0x2000, scoped, tag = 'scratch operand']
  %s0 = inlined_call_operand.hbm [shape: f32[4,8,128], index: 0, kind: input, shape index: {}]
  %s1 = inlined_call_operand.hbm [shape: f32[4,1,8], index: 1, kind: input, shape index: {}]
  %s2 = inlined_call_operand.hbm [shape: f32[1,128], index: 2, kind: input, shape index: {}]
  %s3 = inlined_call_operand.hbm [shape: f32[1,128], index: 3, kind: input, shape index: {}]
  %s4 = inlined_call_operand.hbm [shape: f32[1,128], index: 4, kind: input, shape index: {}]
  %s5 = inlined_call_operand.hbm [shape: f32[1,128], index: 5, kind: input, shape index: {}]
  %s6 = inlined_call_operand.hbm [shape: bf16[2,128,384], index: 6, kind: input, shape index: {}]
  %s7 = inlined_call_operand.vmem [shape: f32[2,1,384], index: 7, kind: input, shape index: {}]
  %s8 = inlined_call_operand.hbm [shape: bf16[2,128,128], index: 8, kind: input, shape index: {}]
  %s9 = inlined_call_operand.vmem [shape: f32[2,1,128], index: 9, kind: input, shape index: {}]
  %s10 = inlined_call_operand.vmem [shape: f32[2,1,128], index: 10, kind: input, shape index: {}]
  %s11 = inlined_call_operand.vmem [shape: f32[2,1,128], index: 11, kind: input, shape index: {}]
  %s12 = inlined_call_operand.hbm [shape: bf16[2,128,256], index: 12, kind: input, shape index: {}]
  %s13 = inlined_call_operand.vmem [shape: f32[2,1,256], index: 13, kind: input, shape index: {}]
  %s14 = inlined_call_operand.hbm [shape: bf16[2,256,128], index: 14, kind: input, shape index: {}]
  %s15 = inlined_call_operand.vmem [shape: f32[2,1,128], index: 15, kind: input, shape index: {}]
  %s16 = inlined_call_operand.vmem [shape: f32[2,1,128], index: 16, kind: input, shape index: {}]
  %s17 = inlined_call_operand.vmem [shape: f32[2,1,128], index: 17, kind: input, shape index: {}]
  %s18 = inlined_call_operand.hbm [shape: f32[4,8,128], index: 18, kind: output, shape index: {}]
  %s19 = sld [smem:[#allocation0]]
  $region153: #{tpu_custom_call.1} parent=0
    _
  %s21 = ssub.s32 1, %s19
  %s22 = scalar_select 0, %s21, %s19
  $region1: #{tpu_custom_call.1} parent=0
    #allocation3 [shape = 'u8[16384]{0}', space=vmem, size = 0x4000, scoped, tag = 'input window, operand 0']
    #allocation4 [shape = 's32[2]{0}', space=sflag, size = 0x8, scoped, tag = 'scoped memory for tpu_custom_call.1']
    #allocation5 [shape = 's32[2]{0}', space=sflag, size = 0x8, scoped, tag = 'scoped memory for tpu_custom_call.1']
    #allocation6 [shape = 'u8[2048]{0}', space=vmem, size = 0x800, scoped, tag = 'input window, operand 1']
    #allocation7 [shape = 's32[2]{0}', space=sflag, size = 0x8, scoped, tag = 'scoped memory for tpu_custom_call.1']
    #allocation8 [shape = 'u8[512]{0}', space=vmem, size = 0x400, scoped, tag = 'input window, operand 2, single buffered']
    #allocation9 [shape = 'u8[512]{0}', space=vmem, size = 0x400, scoped, tag = 'input window, operand 3, single buffered']
    #allocation10 [shape = 's32[1]{0}', space=sflag, size = 0x4, scoped, tag = 'scoped memory for tpu_custom_call.1']
    #allocation11 [shape = 'u8[512]{0}', space=vmem, size = 0x400, scoped, tag = 'input window, operand 4, single buffered']
    #allocation12 [shape = 'u8[512]{0}', space=vmem, size = 0x400, scoped, tag = 'input window, operand 5, single buffered']
    #allocation13 [shape = 's32[1]{0}', space=sflag, size = 0x4, scoped, tag = 'scoped memory for tpu_custom_call.1']
    #allocation14 [shape = 'u8[196608]{0}', space=vmem, size = 0x30000, scoped, tag = 'input window, operand 6']
    #allocation15 [shape = 'u8[65536]{0}', space=vmem, size = 0x10000, scoped, tag = 'input window, operand 8']
    #allocation16 [shape = 'u8[131072]{0}', space=vmem, size = 0x20000, scoped, tag = 'input window, operand 12']
    #allocation17 [shape = 'u8[131072]{0}', space=vmem, size = 0x20000, scoped, tag = 'input window, operand 14']
    #allocation18 [shape = 'u8[16384]{0}', space=vmem, size = 0x4000, scoped, tag = 'output window, operand 0']
    %23 = vsyncpa [#allocation4], 0
    %s24 = scalar_lea.sflag [#allocation4], 1
    %25 = vsyncpa %s24, 0
    %26 = vsyncpa [#allocation7], 0
    %s27 = scalar_lea.sflag [#allocation7], 1
    %28 = vsyncpa %s27, 0
    %29 = vsyncpa [#allocation10], 0
    %30 = vsyncpa [#allocation13], 0
    %31 = vsyncpa [#allocation5], 0
    %s32 = scalar_lea.sflag [#allocation5], 1
    %33 = vsyncpa %s32, 0
    loop: start=0, step=1, limit=6
    $region2: #{tpu_custom_call.1} parent=1 // loop_pre_header
      _
    $region3: #{tpu_custom_call.1} parent=1 // loop_header
      %s35 = sphi 0, %s39
      %p36 = scmp.ge.s32.totalorder %s35, 6
      %s42 = sphi 0, %s54
      %s43 = sphi 0, %s50
      %s44 = sphi 0, %s42
      %s45 = sphi 0, %s43
      %s46 = sphi 0, %s44
      %s47 = sphi 0, %s45
      %s57 = sphi 0, %s59
      %s60 = sphi 0, %s57
      %s61 = sphi 0, %s60
      %s77 = sphi 0, %s61
      %s83 = sphi 0, %s85
      %s86 = sphi 0, %s83
      %s87 = sphi 0, %s86
      %s103 = sphi 0, %s87
      %s107 = sphi 0, %s107
      %s109 = sphi 0, %s107
      %s110 = sphi 0, %s109
      %s124 = sphi 0, %s110
      %s128 = sphi 0, %s128
      %s130 = sphi 0, %s128
      %s131 = sphi 0, %s130
      %s145 = sphi 0, %s131
      %s149 = sphi 0, %s149
      %s151 = sphi 0, %s149
      %s152 = sphi 0, %s151
      %s166 = sphi 0, %s152
      %s170 = sphi 0, %s170
      %s172 = sphi 0, %s170
      %s173 = sphi 0, %s172
      %s187 = sphi 0, %s173
      %s193 = sphi 0, %s195
      %s196 = sphi 0, %s193
      %s197 = sphi 0, %s196
      %s213 = sphi 0, %s197
      %s219 = sphi 0, %s221
      %s222 = sphi 0, %s219
      %s223 = sphi 0, %s222
      %s239 = sphi 0, %s223
      %s245 = sphi 0, %s247
      %s248 = sphi 0, %s245
      %s249 = sphi 0, %s248
      %s265 = sphi 0, %s249
      %s271 = sphi 0, %s273
      %s274 = sphi 0, %s271
      %s275 = sphi 0, %s274
      %s291 = sphi 0, %s275
      %s297 = sphi 0, %s299
      %s300 = sphi 0, %s297
      %s301 = sphi 0, %s300
      %s317 = sphi 0, %s301
      %s323 = sphi 0, %s325
      %s326 = sphi 0, %s323
      %s327 = sphi 0, %s326
      %s343 = sphi 0, %s327
      %s349 = sphi 0, %s351
      %s352 = sphi 0, %s349
      %s353 = sphi 0, %s352
      %s369 = sphi 0, %s353
      %s375 = sphi 0, %s377
      %s378 = sphi 0, %s375
      %s379 = sphi 0, %s378
      %s395 = sphi 0, %s379
      %s401 = sphi 0, %s403
      %s404 = sphi 0, %s401
      %s405 = sphi 0, %s404
      %s421 = sphi 0, %s405
      %s427 = sphi 0, %s429
      %s430 = sphi 0, %s427
      %s431 = sphi 0, %s430
      %s447 = sphi 0, %s431
      %s453 = sphi 0, %s455
      %s456 = sphi 0, %s453
      %s457 = sphi 0, %s456
      %s473 = sphi 0, %s457
      %s479 = sphi 0, %s481
      %s482 = sphi 0, %s479
      %s483 = sphi 0, %s482
      %s499 = sphi 0, %s483
      %s505 = sphi 0, %s507
      %s508 = sphi 0, %s505
      %s509 = sphi 0, %s508
      %s525 = sphi 0, %s509
    $region4: #{tpu_custom_call.1} parent=1 // loop_header_branch
      %38 = sbr.rel (%p36) target = $region8
    $region5: #{tpu_custom_call.1} parent=1 // loop_body
      %s40 = ssub.s32 %s35, 1
      %s41 = ssub.s32 %s35, 2
      %s48 = sadd.s32 1, %s43
      %p49 = scmp.ge.s32.totalorder %s48, 2
      %s50 = scalar_select %p49, 0, %s48
      %s51 = sadd.s32 1, %s42
      %s52 = scalar_select %p49, %s51, %s42
      %p53 = scmp.ge.s32.totalorder %s52, 2
      %s54 = scalar_select %p53, 0, %s52
      %s55 = ssub.s32 %s42, %s54
      %p56 = scmp.eq.s32.totalorder %s55, 0
      %s58 = sadd.s32 %s57, 1
      %s59 = scalar_select %p56, %s57, %s58
      %p62 = pneg %p56
      %p63 = scmp.eq.s32.totalorder %s35, 3
      %p64 = por %p62, %p63
      %p65 = scmp.ne.s32.totalorder %s57, %s60
      %p66 = scmp.eq.s32.totalorder %s35, 0
      %p67 = por %p65, %p66
      %p68 = scmp.ne.s32.totalorder %s57, %s60
      %p69 = scmp.eq.s32.totalorder %s40, 3
      %p70 = por %p68, %p69
      %p71 = scmp.ne.s32.totalorder %s60, %s61
      %p72 = scmp.eq.s32.totalorder %s40, 0
      %p73 = por %p71, %p72
      %p74 = scmp.ne.s32.totalorder %s60, %s61
      %p75 = scmp.eq.s32.totalorder %s41, 3
      %p76 = por %p74, %p75
      %p78 = scmp.ne.s32.totalorder %s61, %s77
      %p79 = scmp.eq.s32.totalorder %s41, 0
      %p80 = por %p78, %p79
      %s81 = ssub.s32 %s42, %s54
      %p82 = scmp.eq.s32.totalorder %s81, 0
      %s84 = sadd.s32 %s83, 1
      %s85 = scalar_select %p82, %s83, %s84
      %p88 = pneg %p82
      %p89 = scmp.eq.s32.totalorder %s35, 3
      %p90 = por %p88, %p89
      %p91 = scmp.ne.s32.totalorder %s83, %s86
      %p92 = scmp.eq.s32.totalorder %s35, 0
      %p93 = por %p91, %p92
      %p94 = scmp.ne.s32.totalorder %s83, %s86
      %p95 = scmp.eq.s32.totalorder %s40, 3
      %p96 = por %p94, %p95
      %p97 = scmp.ne.s32.totalorder %s86, %s87
      %p98 = scmp.eq.s32.totalorder %s40, 0
      %p99 = por %p97, %p98
      %p100 = scmp.ne.s32.totalorder %s86, %s87
      %p101 = scmp.eq.s32.totalorder %s41, 3
      %p102 = por %p100, %p101
      %p104 = scmp.ne.s32.totalorder %s87, %s103
      %p105 = scmp.eq.s32.totalorder %s41, 0
      %p106 = por %p104, %p105
      %s108 = sadd.s32 %s107, 1
      %p111 = scmp.eq.s32.totalorder %s35, 3
      %p112 = scmp.ne.s32.totalorder %s107, %s109
      %p113 = scmp.eq.s32.totalorder %s35, 0
      %p114 = por %p112, %p113
      %p115 = scmp.ne.s32.totalorder %s107, %s109
      %p116 = scmp.eq.s32.totalorder %s40, 3
      %p117 = por %p115, %p116
      %p118 = scmp.ne.s32.totalorder %s109, %s110
      %p119 = scmp.eq.s32.totalorder %s40, 0
      %p120 = por %p118, %p119
      %p121 = scmp.ne.s32.totalorder %s109, %s110
      %p122 = scmp.eq.s32.totalorder %s41, 3
      %p123 = por %p121, %p122
      %p125 = scmp.ne.s32.totalorder %s110, %s124
      %p126 = scmp.eq.s32.totalorder %s41, 0
      %p127 = por %p125, %p126
      %s129 = sadd.s32 %s128, 1
      %p132 = scmp.eq.s32.totalorder %s35, 3
      %p133 = scmp.ne.s32.totalorder %s128, %s130
      %p134 = scmp.eq.s32.totalorder %s35, 0
      %p135 = por %p133, %p134
      %p136 = scmp.ne.s32.totalorder %s128, %s130
      %p137 = scmp.eq.s32.totalorder %s40, 3
      %p138 = por %p136, %p137
      %p139 = scmp.ne.s32.totalorder %s130, %s131
      %p140 = scmp.eq.s32.totalorder %s40, 0
      %p141 = por %p139, %p140
      %p142 = scmp.ne.s32.totalorder %s130, %s131
      %p143 = scmp.eq.s32.totalorder %s41, 3
      %p144 = por %p142, %p143
      %p146 = scmp.ne.s32.totalorder %s131, %s145
      %p147 = scmp.eq.s32.totalorder %s41, 0
      %p148 = por %p146, %p147
      %s150 = sadd.s32 %s149, 1
      %p153 = scmp.eq.s32.totalorder %s35, 3
      %p154 = scmp.ne.s32.totalorder %s149, %s151
      %p155 = scmp.eq.s32.totalorder %s35, 0
      %p156 = por %p154, %p155
      %p157 = scmp.ne.s32.totalorder %s149, %s151
      %p158 = scmp.eq.s32.totalorder %s40, 3
      %p159 = por %p157, %p158
      %p160 = scmp.ne.s32.totalorder %s151, %s152
      %p161 = scmp.eq.s32.totalorder %s40, 0
      %p162 = por %p160, %p161
      %p163 = scmp.ne.s32.totalorder %s151, %s152
      %p164 = scmp.eq.s32.totalorder %s41, 3
      %p165 = por %p163, %p164
      %p167 = scmp.ne.s32.totalorder %s152, %s166
      %p168 = scmp.eq.s32.totalorder %s41, 0
      %p169 = por %p167, %p168
      %s171 = sadd.s32 %s170, 1
      %p174 = scmp.eq.s32.totalorder %s35, 3
      %p175 = scmp.ne.s32.totalorder %s170, %s172
      %p176 = scmp.eq.s32.totalorder %s35, 0
      %p177 = por %p175, %p176
      %p178 = scmp.ne.s32.totalorder %s170, %s172
      %p179 = scmp.eq.s32.totalorder %s40, 3
      %p180 = por %p178, %p179
      %p181 = scmp.ne.s32.totalorder %s172, %s173
      %p182 = scmp.eq.s32.totalorder %s40, 0
      %p183 = por %p181, %p182
      %p184 = scmp.ne.s32.totalorder %s172, %s173
      %p185 = scmp.eq.s32.totalorder %s41, 3
      %p186 = por %p184, %p185
      %p188 = scmp.ne.s32.totalorder %s173, %s187
      %p189 = scmp.eq.s32.totalorder %s41, 0
      %p190 = por %p188, %p189
      %s191 = ssub.s32 %s43, %s50
      %p192 = scmp.eq.s32.totalorder %s191, 0
      %s194 = sadd.s32 %s193, 1
      %s195 = scalar_select %p192, %s193, %s194
      %p198 = pneg %p192
      %p199 = scmp.eq.s32.totalorder %s35, 3
      %p200 = por %p198, %p199
      %p201 = scmp.ne.s32.totalorder %s193, %s196
      %p202 = scmp.eq.s32.totalorder %s35, 0
      %p203 = por %p201, %p202
      %p204 = scmp.ne.s32.totalorder %s193, %s196
      %p205 = scmp.eq.s32.totalorder %s40, 3
      %p206 = por %p204, %p205
      %p207 = scmp.ne.s32.totalorder %s196, %s197
      %p208 = scmp.eq.s32.totalorder %s40, 0
      %p209 = por %p207, %p208
      %p210 = scmp.ne.s32.totalorder %s196, %s197
      %p211 = scmp.eq.s32.totalorder %s41, 3
      %p212 = por %p210, %p211
      %p214 = scmp.ne.s32.totalorder %s197, %s213
      %p215 = scmp.eq.s32.totalorder %s41, 0
      %p216 = por %p214, %p215
      %s217 = ssub.s32 %s43, %s50
      %p218 = scmp.eq.s32.totalorder %s217, 0
      %s220 = sadd.s32 %s219, 1
      %s221 = scalar_select %p218, %s219, %s220
      %p224 = pneg %p218
      %p225 = scmp.eq.s32.totalorder %s35, 3
      %p226 = por %p224, %p225
      %p227 = scmp.ne.s32.totalorder %s219, %s222
      %p228 = scmp.eq.s32.totalorder %s35, 0
      %p229 = por %p227, %p228
      %p230 = scmp.ne.s32.totalorder %s219, %s222
      %p231 = scmp.eq.s32.totalorder %s40, 3
      %p232 = por %p230, %p231
      %p233 = scmp.ne.s32.totalorder %s222, %s223
      %p234 = scmp.eq.s32.totalorder %s40, 0
      %p235 = por %p233, %p234
      %p236 = scmp.ne.s32.totalorder %s222, %s223
      %p237 = scmp.eq.s32.totalorder %s41, 3
      %p238 = por %p236, %p237
      %p240 = scmp.ne.s32.totalorder %s223, %s239
      %p241 = scmp.eq.s32.totalorder %s41, 0
      %p242 = por %p240, %p241
      %s243 = ssub.s32 %s43, %s50
      %p244 = scmp.eq.s32.totalorder %s243, 0
      %s246 = sadd.s32 %s245, 1
      %s247 = scalar_select %p244, %s245, %s246
      %p250 = pneg %p244
      %p251 = scmp.eq.s32.totalorder %s35, 3
      %p252 = por %p250, %p251
      %p253 = scmp.ne.s32.totalorder %s245, %s248
      %p254 = scmp.eq.s32.totalorder %s35, 0
      %p255 = por %p253, %p254
      %p256 = scmp.ne.s32.totalorder %s245, %s248
      %p257 = scmp.eq.s32.totalorder %s40, 3
      %p258 = por %p256, %p257
      %p259 = scmp.ne.s32.totalorder %s248, %s249
      %p260 = scmp.eq.s32.totalorder %s40, 0
      %p261 = por %p259, %p260
      %p262 = scmp.ne.s32.totalorder %s248, %s249
      %p263 = scmp.eq.s32.totalorder %s41, 3
      %p264 = por %p262, %p263
      %p266 = scmp.ne.s32.totalorder %s249, %s265
      %p267 = scmp.eq.s32.totalorder %s41, 0
      %p268 = por %p266, %p267
      %s269 = ssub.s32 %s43, %s50
      %p270 = scmp.eq.s32.totalorder %s269, 0
      %s272 = sadd.s32 %s271, 1
      %s273 = scalar_select %p270, %s271, %s272
      %p276 = pneg %p270
      %p277 = scmp.eq.s32.totalorder %s35, 3
      %p278 = por %p276, %p277
      %p279 = scmp.ne.s32.totalorder %s271, %s274
      %p280 = scmp.eq.s32.totalorder %s35, 0
      %p281 = por %p279, %p280
      %p282 = scmp.ne.s32.totalorder %s271, %s274
      %p283 = scmp.eq.s32.totalorder %s40, 3
      %p284 = por %p282, %p283
      %p285 = scmp.ne.s32.totalorder %s274, %s275
      %p286 = scmp.eq.s32.totalorder %s40, 0
      %p287 = por %p285, %p286
      %p288 = scmp.ne.s32.totalorder %s274, %s275
      %p289 = scmp.eq.s32.totalorder %s41, 3
      %p290 = por %p288, %p289
      %p292 = scmp.ne.s32.totalorder %s275, %s291
      %p293 = scmp.eq.s32.totalorder %s41, 0
      %p294 = por %p292, %p293
      %s295 = ssub.s32 %s43, %s50
      %p296 = scmp.eq.s32.totalorder %s295, 0
      %s298 = sadd.s32 %s297, 1
      %s299 = scalar_select %p296, %s297, %s298
      %p302 = pneg %p296
      %p303 = scmp.eq.s32.totalorder %s35, 3
      %p304 = por %p302, %p303
      %p305 = scmp.ne.s32.totalorder %s297, %s300
      %p306 = scmp.eq.s32.totalorder %s35, 0
      %p307 = por %p305, %p306
      %p308 = scmp.ne.s32.totalorder %s297, %s300
      %p309 = scmp.eq.s32.totalorder %s40, 3
      %p310 = por %p308, %p309
      %p311 = scmp.ne.s32.totalorder %s300, %s301
      %p312 = scmp.eq.s32.totalorder %s40, 0
      %p313 = por %p311, %p312
      %p314 = scmp.ne.s32.totalorder %s300, %s301
      %p315 = scmp.eq.s32.totalorder %s41, 3
      %p316 = por %p314, %p315
      %p318 = scmp.ne.s32.totalorder %s301, %s317
      %p319 = scmp.eq.s32.totalorder %s41, 0
      %p320 = por %p318, %p319
      %s321 = ssub.s32 %s43, %s50
      %p322 = scmp.eq.s32.totalorder %s321, 0
      %s324 = sadd.s32 %s323, 1
      %s325 = scalar_select %p322, %s323, %s324
      %p328 = pneg %p322
      %p329 = scmp.eq.s32.totalorder %s35, 3
      %p330 = por %p328, %p329
      %p331 = scmp.ne.s32.totalorder %s323, %s326
      %p332 = scmp.eq.s32.totalorder %s35, 0
      %p333 = por %p331, %p332
      %p334 = scmp.ne.s32.totalorder %s323, %s326
      %p335 = scmp.eq.s32.totalorder %s40, 3
      %p336 = por %p334, %p335
      %p337 = scmp.ne.s32.totalorder %s326, %s327
      %p338 = scmp.eq.s32.totalorder %s40, 0
      %p339 = por %p337, %p338
      %p340 = scmp.ne.s32.totalorder %s326, %s327
      %p341 = scmp.eq.s32.totalorder %s41, 3
      %p342 = por %p340, %p341
      %p344 = scmp.ne.s32.totalorder %s327, %s343
      %p345 = scmp.eq.s32.totalorder %s41, 0
      %p346 = por %p344, %p345
      %s347 = ssub.s32 %s43, %s50
      %p348 = scmp.eq.s32.totalorder %s347, 0
      %s350 = sadd.s32 %s349, 1
      %s351 = scalar_select %p348, %s349, %s350
      %p354 = pneg %p348
      %p355 = scmp.eq.s32.totalorder %s35, 3
      %p356 = por %p354, %p355
      %p357 = scmp.ne.s32.totalorder %s349, %s352
      %p358 = scmp.eq.s32.totalorder %s35, 0
      %p359 = por %p357, %p358
      %p360 = scmp.ne.s32.totalorder %s349, %s352
      %p361 = scmp.eq.s32.totalorder %s40, 3
      %p362 = por %p360, %p361
      %p363 = scmp.ne.s32.totalorder %s352, %s353
      %p364 = scmp.eq.s32.totalorder %s40, 0
      %p365 = por %p363, %p364
      %p366 = scmp.ne.s32.totalorder %s352, %s353
      %p367 = scmp.eq.s32.totalorder %s41, 3
      %p368 = por %p366, %p367
      %p370 = scmp.ne.s32.totalorder %s353, %s369
      %p371 = scmp.eq.s32.totalorder %s41, 0
      %p372 = por %p370, %p371
      %s373 = ssub.s32 %s43, %s50
      %p374 = scmp.eq.s32.totalorder %s373, 0
      %s376 = sadd.s32 %s375, 1
      %s377 = scalar_select %p374, %s375, %s376
      %p380 = pneg %p374
      %p381 = scmp.eq.s32.totalorder %s35, 3
      %p382 = por %p380, %p381
      %p383 = scmp.ne.s32.totalorder %s375, %s378
      %p384 = scmp.eq.s32.totalorder %s35, 0
      %p385 = por %p383, %p384
      %p386 = scmp.ne.s32.totalorder %s375, %s378
      %p387 = scmp.eq.s32.totalorder %s40, 3
      %p388 = por %p386, %p387
      %p389 = scmp.ne.s32.totalorder %s378, %s379
      %p390 = scmp.eq.s32.totalorder %s40, 0
      %p391 = por %p389, %p390
      %p392 = scmp.ne.s32.totalorder %s378, %s379
      %p393 = scmp.eq.s32.totalorder %s41, 3
      %p394 = por %p392, %p393
      %p396 = scmp.ne.s32.totalorder %s379, %s395
      %p397 = scmp.eq.s32.totalorder %s41, 0
      %p398 = por %p396, %p397
      %s399 = ssub.s32 %s43, %s50
      %p400 = scmp.eq.s32.totalorder %s399, 0
      %s402 = sadd.s32 %s401, 1
      %s403 = scalar_select %p400, %s401, %s402
      %p406 = pneg %p400
      %p407 = scmp.eq.s32.totalorder %s35, 3
      %p408 = por %p406, %p407
      %p409 = scmp.ne.s32.totalorder %s401, %s404
      %p410 = scmp.eq.s32.totalorder %s35, 0
      %p411 = por %p409, %p410
      %p412 = scmp.ne.s32.totalorder %s401, %s404
      %p413 = scmp.eq.s32.totalorder %s40, 3
      %p414 = por %p412, %p413
      %p415 = scmp.ne.s32.totalorder %s404, %s405
      %p416 = scmp.eq.s32.totalorder %s40, 0
      %p417 = por %p415, %p416
      %p418 = scmp.ne.s32.totalorder %s404, %s405
      %p419 = scmp.eq.s32.totalorder %s41, 3
      %p420 = por %p418, %p419
      %p422 = scmp.ne.s32.totalorder %s405, %s421
      %p423 = scmp.eq.s32.totalorder %s41, 0
      %p424 = por %p422, %p423
      %s425 = ssub.s32 %s43, %s50
      %p426 = scmp.eq.s32.totalorder %s425, 0
      %s428 = sadd.s32 %s427, 1
      %s429 = scalar_select %p426, %s427, %s428
      %p432 = pneg %p426
      %p433 = scmp.eq.s32.totalorder %s35, 3
      %p434 = por %p432, %p433
      %p435 = scmp.ne.s32.totalorder %s427, %s430
      %p436 = scmp.eq.s32.totalorder %s35, 0
      %p437 = por %p435, %p436
      %p438 = scmp.ne.s32.totalorder %s427, %s430
      %p439 = scmp.eq.s32.totalorder %s40, 3
      %p440 = por %p438, %p439
      %p441 = scmp.ne.s32.totalorder %s430, %s431
      %p442 = scmp.eq.s32.totalorder %s40, 0
      %p443 = por %p441, %p442
      %p444 = scmp.ne.s32.totalorder %s430, %s431
      %p445 = scmp.eq.s32.totalorder %s41, 3
      %p446 = por %p444, %p445
      %p448 = scmp.ne.s32.totalorder %s431, %s447
      %p449 = scmp.eq.s32.totalorder %s41, 0
      %p450 = por %p448, %p449
      %s451 = ssub.s32 %s43, %s50
      %p452 = scmp.eq.s32.totalorder %s451, 0
      %s454 = sadd.s32 %s453, 1
      %s455 = scalar_select %p452, %s453, %s454
      %p458 = pneg %p452
      %p459 = scmp.eq.s32.totalorder %s35, 3
      %p460 = por %p458, %p459
      %p461 = scmp.ne.s32.totalorder %s453, %s456
      %p462 = scmp.eq.s32.totalorder %s35, 0
      %p463 = por %p461, %p462
      %p464 = scmp.ne.s32.totalorder %s453, %s456
      %p465 = scmp.eq.s32.totalorder %s40, 3
      %p466 = por %p464, %p465
      %p467 = scmp.ne.s32.totalorder %s456, %s457
      %p468 = scmp.eq.s32.totalorder %s40, 0
      %p469 = por %p467, %p468
      %p470 = scmp.ne.s32.totalorder %s456, %s457
      %p471 = scmp.eq.s32.totalorder %s41, 3
      %p472 = por %p470, %p471
      %p474 = scmp.ne.s32.totalorder %s457, %s473
      %p475 = scmp.eq.s32.totalorder %s41, 0
      %p476 = por %p474, %p475
      %s477 = ssub.s32 %s43, %s50
      %p478 = scmp.eq.s32.totalorder %s477, 0
      %s480 = sadd.s32 %s479, 1
      %s481 = scalar_select %p478, %s479, %s480
      %p484 = pneg %p478
      %p485 = scmp.eq.s32.totalorder %s35, 3
      %p486 = por %p484, %p485
      %p487 = scmp.ne.s32.totalorder %s479, %s482
      %p488 = scmp.eq.s32.totalorder %s35, 0
      %p489 = por %p487, %p488
      %p490 = scmp.ne.s32.totalorder %s479, %s482
      %p491 = scmp.eq.s32.totalorder %s40, 3
      %p492 = por %p490, %p491
      %p493 = scmp.ne.s32.totalorder %s482, %s483
      %p494 = scmp.eq.s32.totalorder %s40, 0
      %p495 = por %p493, %p494
      %p496 = scmp.ne.s32.totalorder %s482, %s483
      %p497 = scmp.eq.s32.totalorder %s41, 3
      %p498 = por %p496, %p497
      %p500 = scmp.ne.s32.totalorder %s483, %s499
      %p501 = scmp.eq.s32.totalorder %s41, 0
      %p502 = por %p500, %p501
      %s503 = ssub.s32 %s42, %s54
      %p504 = scmp.eq.s32.totalorder %s503, 0
      %s506 = sadd.s32 %s505, 1
      %s507 = scalar_select %p504, %s505, %s506
      %p510 = pneg %p504
      %p511 = scmp.eq.s32.totalorder %s35, 3
      %p512 = por %p510, %p511
      %p513 = scmp.ne.s32.totalorder %s505, %s508
      %p514 = scmp.eq.s32.totalorder %s35, 0
      %p515 = por %p513, %p514
      %p516 = scmp.ne.s32.totalorder %s505, %s508
      %p517 = scmp.eq.s32.totalorder %s40, 3
      %p518 = por %p516, %p517
      %p519 = scmp.ne.s32.totalorder %s508, %s509
      %p520 = scmp.eq.s32.totalorder %s40, 0
      %p521 = por %p519, %p520
      %p522 = scmp.ne.s32.totalorder %s508, %s509
      %p523 = scmp.eq.s32.totalorder %s41, 3
      %p524 = por %p522, %p523
      %p526 = scmp.ne.s32.totalorder %s509, %s525
      %p527 = scmp.eq.s32.totalorder %s41, 0
      %p528 = por %p526, %p527
      %p529 = scmp.le.s32.totalorder 1, %s35
      %p530 = scmp.lt.s32.totalorder %s35, 5
      %p531 = pnand %p529, %p530
      %p532 = pneg %p531
      // Predicated region
      $region9: #{tpu_custom_call.1} parent=5 // pred_check
        _
      $region10: #{tpu_custom_call.1} parent=5 // pred_check_branch
        %534 = sbr.rel (%p531) target = $region12
      $region11: #{tpu_custom_call.1} parent=5 // pred_region
        %s535 = ssub.s32 %s35, 1
        // Predicated region
        $region13: #{tpu_custom_call.1} parent=11 // pred_check
          %p536 = pneg %p120
        $region14: #{tpu_custom_call.1} parent=11 // pred_check_branch
          %538 = sbr.rel (%p536) target = $region16
        $region15: #{tpu_custom_call.1} parent=11 // pred_region
          %s540 = ssub.s32 16, 16
          %541 = vsyncadd [#allocation7], %s540
          %s543 = sshll.u32 [#allocation8], 4
          %s544 = int_to_ptr.vmem [resolvable:$true] %s543
          %546 = dma.hbm_to_vmem [thread:$0]  %s2, 16, %s544, [#allocation7]
        $region16: #{tpu_custom_call.1} parent=11 // pred_fallthru
          _
        // Predicated region
        $region17: #{tpu_custom_call.1} parent=11 // pred_check
          %p547 = pneg %p141
        $region18: #{tpu_custom_call.1} parent=11 // pred_check_branch
          %549 = sbr.rel (%p547) target = $region20
        $region19: #{tpu_custom_call.1} parent=11 // pred_region
          %s551 = ssub.s32 16, 16
          %552 = vsyncadd [#allocation10], %s551
          %s554 = sshll.u32 [#allocation9], 4
          %s555 = int_to_ptr.vmem [resolvable:$true] %s554
          %557 = dma.hbm_to_vmem [thread:$0]  %s3, 16, %s555, [#allocation10]
        $region20: #{tpu_custom_call.1} parent=11 // pred_fallthru
          _
        // Predicated region
        $region21: #{tpu_custom_call.1} parent=11 // pred_check
          %p558 = pneg %p162
        $region22: #{tpu_custom_call.1} parent=11 // pred_check_branch
          %560 = sbr.rel (%p558) target = $region24
        $region23: #{tpu_custom_call.1} parent=11 // pred_region
          %s562 = ssub.s32 16, 16
          %563 = vsyncadd [#allocation10], %s562
          %s565 = sshll.u32 [#allocation11], 4
          %s566 = int_to_ptr.vmem [resolvable:$true] %s565
          %568 = dma.hbm_to_vmem [thread:$0]  %s4, 16, %s566, [#allocation10]
        $region24: #{tpu_custom_call.1} parent=11 // pred_fallthru
          _
        // Predicated region
        $region25: #{tpu_custom_call.1} parent=11 // pred_check
          %p569 = pneg %p183
        $region26: #{tpu_custom_call.1} parent=11 // pred_check_branch
          %571 = sbr.rel (%p569) target = $region28
        $region27: #{tpu_custom_call.1} parent=11 // pred_region
          %s573 = ssub.s32 16, 16
          %574 = vsyncadd [#allocation13], %s573
          %s576 = sshll.u32 [#allocation12], 4
          %s577 = int_to_ptr.vmem [resolvable:$true] %s576
          %579 = dma.hbm_to_vmem [thread:$0]  %s5, 16, %s577, [#allocation13]
        $region28: #{tpu_custom_call.1} parent=11 // pred_fallthru
          _
      $region12: #{tpu_custom_call.1} parent=5 // pred_fallthru
        _
      %p580 = scmp.lt.s32.totalorder %s35, 4
      // Predicated region
      $region29: #{tpu_custom_call.1} parent=5 // pred_check
        %p581 = pneg %p580
      $region30: #{tpu_custom_call.1} parent=5 // pred_check_branch
        %583 = sbr.rel (%p581) target = $region32
      $region31: #{tpu_custom_call.1} parent=5 // pred_region
        // Predicated region
        $region33: #{tpu_custom_call.1} parent=31 // pred_check
          %p584 = pneg %p67
        $region34: #{tpu_custom_call.1} parent=31 // pred_check_branch
          %586 = sbr.rel (%p584) target = $region36
        $region35: #{tpu_custom_call.1} parent=31 // pred_region
          %s587 = sand.u32 %s35, 1
          %s588 = scalar_lea.sflag [#allocation4], %s587
          %s589 = sand.u32 %s57, 1
          %s590 = smul.addr %s589, 16
          %s591 = scalar_lea.vmem [#allocation3], %s590
          %s592 = smul.u32 2, %s42
          %s594 = ssub.s32 256, 256
          %595 = vsyncadd %s588, %s594
          %s596 = smul.addr %s592, 128
          %s597 = scalar_lea.hbm %s0, %s596
          %s598 = sshll.u32 %s591, 4
          %s599 = int_to_ptr.vmem [resolvable:$true] %s598
          %604 = dma.hbm_to_vmem [thread:$0]  %s597, 256, %s599, %s588, 128, 128, 8
        $region36: #{tpu_custom_call.1} parent=31 // pred_fallthru
          _
        // Predicated region
        $region37: #{tpu_custom_call.1} parent=31 // pred_check
          %p605 = pneg %p93
        $region38: #{tpu_custom_call.1} parent=31 // pred_check_branch
          %607 = sbr.rel (%p605) target = $region40
        $region39: #{tpu_custom_call.1} parent=31 // pred_region
          %s608 = sand.u32 %s35, 1
          %s609 = scalar_lea.sflag [#allocation7], %s608
          %s610 = sand.u32 %s83, 1
          %s611 = smul.addr %s610, 2
          %s612 = scalar_lea.vmem [#allocation6], %s611
          %s613 = smul.u32 2, %s42
          %s615 = ssub.s32 32, 32
          %616 = vsyncadd %s609, %s615
          %s617 = smul.addr %s613, 16
          %s618 = scalar_lea.hbm %s1, %s617
          %s619 = sshll.u32 %s612, 4
          %s620 = int_to_ptr.vmem [resolvable:$true] %s619
          %625 = dma.hbm_to_vmem [thread:$0]  %s618, 32, %s620, %s609, 16, 16, 1
        $region40: #{tpu_custom_call.1} parent=31 // pred_fallthru
          _
        // Predicated region
        $region41: #{tpu_custom_call.1} parent=31 // pred_check
          %p626 = pneg %p203
        $region42: #{tpu_custom_call.1} parent=31 // pred_check_branch
          %628 = sbr.rel (%p626) target = $region44
        $region43: #{tpu_custom_call.1} parent=31 // pred_region
          %s629 = sand.u32 %s35, 1
          %s630 = scalar_lea.sflag [#allocation4], %s629
          %s631 = sand.u32 %s193, 1
          %s632 = smul.addr %s631, 192
          %s633 = scalar_lea.vmem [#allocation14], %s632
          %s635 = ssub.s32 3072, 3072
          %636 = vsyncadd %s630, %s635
          %s637 = smul.addr %s43, 48
          %s638 = smul.addr %s637, 64
          %s639 = scalar_lea.hbm %s6, %s638
          %s640 = sshll.u32 %s633, 4
          %s641 = int_to_ptr.vmem [resolvable:$true] %s640
          %646 = dma.hbm_to_vmem [thread:$0]  %s639, 3072, %s641, %s630, 192, 192, 12
        $region44: #{tpu_custom_call.1} parent=31 // pred_fallthru
          _
        // Predicated region
        $region45: #{tpu_custom_call.1} parent=31 // pred_check
          %p647 = pneg %p229
        $region46: #{tpu_custom_call.1} parent=31 // pred_check_branch
          %649 = sbr.rel (%p647) target = $region48
        $region47: #{tpu_custom_call.1} parent=31 // pred_region
          %p650 = scmp.lt.s32.totalorder %s43, 1
          %s651 = scalar_select %p650, %s43, 1
          %s652 = smul.addr %s651, 3
          %s653 = scalar_lea.vmem %s7, %s652
        $region48: #{tpu_custom_call.1} parent=31 // pred_fallthru
          _
        // Predicated region
        $region49: #{tpu_custom_call.1} parent=31 // pred_check
          %p654 = pneg %p255
        $region50: #{tpu_custom_call.1} parent=31 // pred_check_branch
          %656 = sbr.rel (%p654) target = $region52
        $region51: #{tpu_custom_call.1} parent=31 // pred_region
          %s657 = sand.u32 %s35, 1
          %s658 = scalar_lea.sflag [#allocation7], %s657
          %s659 = sand.u32 %s245, 1
          %s660 = smul.addr %s659, 64
          %s661 = scalar_lea.vmem [#allocation15], %s660
          %s663 = ssub.s32 1024, 1024
          %664 = vsyncadd %s658, %s663
          %s665 = smul.addr %s43, 16
          %s666 = smul.addr %s665, 64
          %s667 = scalar_lea.hbm %s8, %s666
          %s668 = sshll.u32 %s661, 4
          %s669 = int_to_ptr.vmem [resolvable:$true] %s668
          %674 = dma.hbm_to_vmem [thread:$0]  %s667, 1024, %s669, %s658, 64, 64, 4
        $region52: #{tpu_custom_call.1} parent=31 // pred_fallthru
          _
        // Predicated region
        $region53: #{tpu_custom_call.1} parent=31 // pred_check
          %p675 = pneg %p281
        $region54: #{tpu_custom_call.1} parent=31 // pred_check_branch
          %677 = sbr.rel (%p675) target = $region56
        $region55: #{tpu_custom_call.1} parent=31 // pred_region
          %p678 = scmp.lt.s32.totalorder %s43, 1
          %s679 = scalar_select %p678, %s43, 1
          %s680 = scalar_lea.vmem %s9, %s679
        $region56: #{tpu_custom_call.1} parent=31 // pred_fallthru
          _
        // Predicated region
        $region57: #{tpu_custom_call.1} parent=31 // pred_check
          %p681 = pneg %p307
        $region58: #{tpu_custom_call.1} parent=31 // pred_check_branch
          %683 = sbr.rel (%p681) target = $region60
        $region59: #{tpu_custom_call.1} parent=31 // pred_region
          %p684 = scmp.lt.s32.totalorder %s43, 1
          %s685 = scalar_select %p684, %s43, 1
          %s686 = scalar_lea.vmem %s10, %s685
        $region60: #{tpu_custom_call.1} parent=31 // pred_fallthru
          _
        // Predicated region
        $region61: #{tpu_custom_call.1} parent=31 // pred_check
          %p687 = pneg %p333
        $region62: #{tpu_custom_call.1} parent=31 // pred_check_branch
          %689 = sbr.rel (%p687) target = $region64
        $region63: #{tpu_custom_call.1} parent=31 // pred_region
          %p690 = scmp.lt.s32.totalorder %s43, 1
          %s691 = scalar_select %p690, %s43, 1
          %s692 = scalar_lea.vmem %s11, %s691
        $region64: #{tpu_custom_call.1} parent=31 // pred_fallthru
          _
        // Predicated region
        $region65: #{tpu_custom_call.1} parent=31 // pred_check
          %p693 = pneg %p359
        $region66: #{tpu_custom_call.1} parent=31 // pred_check_branch
          %695 = sbr.rel (%p693) target = $region68
        $region67: #{tpu_custom_call.1} parent=31 // pred_region
          %s696 = sand.u32 %s35, 1
          %s697 = scalar_lea.sflag [#allocation4], %s696
          %s698 = sand.u32 %s349, 1
          %s699 = smul.addr %s698, 128
          %s700 = scalar_lea.vmem [#allocation16], %s699
          %s702 = ssub.s32 2048, 2048
          %703 = vsyncadd %s697, %s702
          %s704 = smul.addr %s43, 32
          %s705 = smul.addr %s704, 64
          %s706 = scalar_lea.hbm %s12, %s705
          %s707 = sshll.u32 %s700, 4
          %s708 = int_to_ptr.vmem [resolvable:$true] %s707
          %713 = dma.hbm_to_vmem [thread:$0]  %s706, 2048, %s708, %s697, 128, 128, 8
        $region68: #{tpu_custom_call.1} parent=31 // pred_fallthru
          _
        // Predicated region
        $region69: #{tpu_custom_call.1} parent=31 // pred_check
          %p714 = pneg %p385
        $region70: #{tpu_custom_call.1} parent=31 // pred_check_branch
          %716 = sbr.rel (%p714) target = $region72
        $region71: #{tpu_custom_call.1} parent=31 // pred_region
          %p717 = scmp.lt.s32.totalorder %s43, 1
          %s718 = scalar_select %p717, %s43, 1
          %s719 = smul.addr %s718, 2
          %s720 = scalar_lea.vmem %s13, %s719
        $region72: #{tpu_custom_call.1} parent=31 // pred_fallthru
          _
        // Predicated region
        $region73: #{tpu_custom_call.1} parent=31 // pred_check
          %p721 = pneg %p411
        $region74: #{tpu_custom_call.1} parent=31 // pred_check_branch
          %723 = sbr.rel (%p721) target = $region76
        $region75: #{tpu_custom_call.1} parent=31 // pred_region
          %s724 = sand.u32 %s35, 1
          %s725 = scalar_lea.sflag [#allocation7], %s724
          %s726 = sand.u32 %s401, 1
          %s727 = smul.addr %s726, 128
          %s728 = scalar_lea.vmem [#allocation17], %s727
          %s730 = ssub.s32 2048, 2048
          %731 = vsyncadd %s725, %s730
          %s732 = smul.addr %s43, 32
          %s733 = smul.addr %s732, 64
          %s734 = scalar_lea.hbm %s14, %s733
          %s735 = sshll.u32 %s728, 4
          %s736 = int_to_ptr.vmem [resolvable:$true] %s735
          %741 = dma.hbm_to_vmem [thread:$0]  %s734, 2048, %s736, %s725, 64, 64, 4
        $region76: #{tpu_custom_call.1} parent=31 // pred_fallthru
          _
        // Predicated region
        $region77: #{tpu_custom_call.1} parent=31 // pred_check
          %p742 = pneg %p437
        $region78: #{tpu_custom_call.1} parent=31 // pred_check_branch
          %744 = sbr.rel (%p742) target = $region80
        $region79: #{tpu_custom_call.1} parent=31 // pred_region
          %p745 = scmp.lt.s32.totalorder %s43, 1
          %s746 = scalar_select %p745, %s43, 1
          %s747 = scalar_lea.vmem %s15, %s746
        $region80: #{tpu_custom_call.1} parent=31 // pred_fallthru
          _
        // Predicated region
        $region81: #{tpu_custom_call.1} parent=31 // pred_check
          %p748 = pneg %p463
        $region82: #{tpu_custom_call.1} parent=31 // pred_check_branch
          %750 = sbr.rel (%p748) target = $region84
        $region83: #{tpu_custom_call.1} parent=31 // pred_region
          %p751 = scmp.lt.s32.totalorder %s43, 1
          %s752 = scalar_select %p751, %s43, 1
          %s753 = scalar_lea.vmem %s16, %s752
        $region84: #{tpu_custom_call.1} parent=31 // pred_fallthru
          _
        // Predicated region
        $region85: #{tpu_custom_call.1} parent=31 // pred_check
          %p754 = pneg %p489
        $region86: #{tpu_custom_call.1} parent=31 // pred_check_branch
          %756 = sbr.rel (%p754) target = $region88
        $region87: #{tpu_custom_call.1} parent=31 // pred_region
          %p757 = scmp.lt.s32.totalorder %s43, 1
          %s758 = scalar_select %p757, %s43, 1
          %s759 = scalar_lea.vmem %s17, %s758
        $region88: #{tpu_custom_call.1} parent=31 // pred_fallthru
          _
      $region32: #{tpu_custom_call.1} parent=5 // pred_fallthru
        _
      %p760 = scmp.le.s32.totalorder 1, %s35
      %p761 = scmp.lt.s32.totalorder %s35, 5
      %p762 = pnand %p760, %p761
      %p763 = pneg %p762
      // Predicated region
      $region89: #{tpu_custom_call.1} parent=5 // pred_check
        _
      $region90: #{tpu_custom_call.1} parent=5 // pred_check_branch
        %765 = sbr.rel (%p762) target = $region92
      $region91: #{tpu_custom_call.1} parent=5 // pred_region
        %s766 = ssub.s32 %s35, 1
        %s767 = sand.u32 %s40, 1
        %s768 = scalar_lea.sflag [#allocation4], %s767
        %s769 = sand.u32 %s60, 1
        %s770 = smul.addr %s769, 16
        %s771 = scalar_lea.vmem [#allocation3], %s770
        // Predicated region
        $region93: #{tpu_custom_call.1} parent=91 // pred_check
          %p772 = pneg %p73
        $region94: #{tpu_custom_call.1} parent=91 // pred_check_branch
          %774 = sbr.rel (%p772) target = $region96
        $region95: #{tpu_custom_call.1} parent=91 // pred_region
          %775 = dma.done %s768, 256
        $region96: #{tpu_custom_call.1} parent=91 // pred_fallthru
          _
        %s776 = sand.u32 %s40, 1
        %s777 = scalar_lea.sflag [#allocation7], %s776
        %s778 = sand.u32 %s86, 1
        %s779 = smul.addr %s778, 2
        %s780 = scalar_lea.vmem [#allocation6], %s779
        // Predicated region
        $region97: #{tpu_custom_call.1} parent=91 // pred_check
          %p781 = pneg %p99
        $region98: #{tpu_custom_call.1} parent=91 // pred_check_branch
          %783 = sbr.rel (%p781) target = $region100
        $region99: #{tpu_custom_call.1} parent=91 // pred_region
          %784 = dma.done %s777, 32
        $region100: #{tpu_custom_call.1} parent=91 // pred_fallthru
          _
        // Predicated region
        $region101: #{tpu_custom_call.1} parent=91 // pred_check
          %p785 = pneg %p120
        $region102: #{tpu_custom_call.1} parent=91 // pred_check_branch
          %787 = sbr.rel (%p785) target = $region104
        $region103: #{tpu_custom_call.1} parent=91 // pred_region
          %788 = dma.done [#allocation7], 16
        $region104: #{tpu_custom_call.1} parent=91 // pred_fallthru
          _
        // Predicated region
        $region105: #{tpu_custom_call.1} parent=91 // pred_check
          %p789 = pneg %p141
        $region106: #{tpu_custom_call.1} parent=91 // pred_check_branch
          %791 = sbr.rel (%p789) target = $region108
        $region107: #{tpu_custom_call.1} parent=91 // pred_region
          %792 = dma.done [#allocation10], 16
        $region108: #{tpu_custom_call.1} parent=91 // pred_fallthru
          _
        // Predicated region
        $region109: #{tpu_custom_call.1} parent=91 // pred_check
          %p793 = pneg %p162
        $region110: #{tpu_custom_call.1} parent=91 // pred_check_branch
          %795 = sbr.rel (%p793) target = $region112
        $region111: #{tpu_custom_call.1} parent=91 // pred_region
          %796 = dma.done [#allocation10], 16
        $region112: #{tpu_custom_call.1} parent=91 // pred_fallthru
          _
        // Predicated region
        $region113: #{tpu_custom_call.1} parent=91 // pred_check
          %p797 = pneg %p183
        $region114: #{tpu_custom_call.1} parent=91 // pred_check_branch
          %799 = sbr.rel (%p797) target = $region116
        $region115: #{tpu_custom_call.1} parent=91 // pred_region
          %800 = dma.done [#allocation13], 16
        $region116: #{tpu_custom_call.1} parent=91 // pred_fallthru
          _
        %s801 = sand.u32 %s40, 1
        %s802 = scalar_lea.sflag [#allocation4], %s801
        %s803 = sand.u32 %s196, 1
        %s804 = smul.addr %s803, 192
        %s805 = scalar_lea.vmem [#allocation14], %s804
        // Predicated region
        $region117: #{tpu_custom_call.1} parent=91 // pred_check
          %p806 = pneg %p209
        $region118: #{tpu_custom_call.1} parent=91 // pred_check_branch
          %808 = sbr.rel (%p806) target = $region120
        $region119: #{tpu_custom_call.1} parent=91 // pred_region
          %809 = dma.done %s802, 3072
        $region120: #{tpu_custom_call.1} parent=91 // pred_fallthru
          _
        %s810 = sand.u32 %s40, 1
        %s811 = scalar_lea.sflag [#allocation7], %s810
        %s812 = sand.u32 %s248, 1
        %s813 = smul.addr %s812, 64
        %s814 = scalar_lea.vmem [#allocation15], %s813
        // Predicated region
        $region121: #{tpu_custom_call.1} parent=91 // pred_check
          %p815 = pneg %p261
        $region122: #{tpu_custom_call.1} parent=91 // pred_check_branch
          %817 = sbr.rel (%p815) target = $region124
        $region123: #{tpu_custom_call.1} parent=91 // pred_region
          %818 = dma.done %s811, 1024
        $region124: #{tpu_custom_call.1} parent=91 // pred_fallthru
          _
        %s819 = sand.u32 %s40, 1
        %s820 = scalar_lea.sflag [#allocation4], %s819
        %s821 = sand.u32 %s352, 1
        %s822 = smul.addr %s821, 128
        %s823 = scalar_lea.vmem [#allocation16], %s822
        // Predicated region
        $region125: #{tpu_custom_call.1} parent=91 // pred_check
          %p824 = pneg %p365
        $region126: #{tpu_custom_call.1} parent=91 // pred_check_branch
          %826 = sbr.rel (%p824) target = $region128
        $region127: #{tpu_custom_call.1} parent=91 // pred_region
          %827 = dma.done %s820, 2048
        $region128: #{tpu_custom_call.1} parent=91 // pred_fallthru
          _
        %s828 = sand.u32 %s40, 1
        %s829 = scalar_lea.sflag [#allocation7], %s828
        %s830 = sand.u32 %s404, 1
        %s831 = smul.addr %s830, 128
        %s832 = scalar_lea.vmem [#allocation17], %s831
        // Predicated region
        $region129: #{tpu_custom_call.1} parent=91 // pred_check
          %p833 = pneg %p417
        $region130: #{tpu_custom_call.1} parent=91 // pred_check_branch
          %835 = sbr.rel (%p833) target = $region132
        $region131: #{tpu_custom_call.1} parent=91 // pred_region
          %836 = dma.done %s829, 2048
        $region132: #{tpu_custom_call.1} parent=91 // pred_fallthru
          _
        %s837 = sand.u32 %s40, 1
        %s838 = scalar_lea.sflag [#allocation4], %s837
        %s839 = sand.u32 %s60, 1
        %s840 = smul.addr %s839, 16
        %s841 = scalar_lea.vmem [#allocation3], %s840
        %p842 = pneg %p73
        %p843 = pneg %p70
        %s844 = sand.u32 %s40, 1
        %s845 = scalar_lea.sflag [#allocation7], %s844
        %s846 = sand.u32 %s86, 1
        %s847 = smul.addr %s846, 2
        %s848 = scalar_lea.vmem [#allocation6], %s847
        %p849 = pneg %p99
        %p850 = pneg %p96
        %p851 = pneg %p120
        %p852 = pneg %p117
        %p853 = pneg %p141
        %p854 = pneg %p138
        %p855 = pneg %p162
        %p856 = pneg %p159
        %p857 = pneg %p183
        %p858 = pneg %p180
        %s859 = sand.u32 %s40, 1
        %s860 = scalar_lea.sflag [#allocation4], %s859
        %s861 = sand.u32 %s196, 1
        %s862 = smul.addr %s861, 192
        %s863 = scalar_lea.vmem [#allocation14], %s862
        %p864 = pneg %p209
        %p865 = pneg %p206
        %p866 = scmp.lt.s32.totalorder %s45, 1
        %s867 = scalar_select %p866, %s45, 1
        %s868 = smul.addr %s867, 3
        %s869 = scalar_lea.vmem %s7, %s868
        %p870 = pneg %p235
        %p871 = pneg %p232
        %s872 = sand.u32 %s40, 1
        %s873 = scalar_lea.sflag [#allocation7], %s872
        %s874 = sand.u32 %s248, 1
        %s875 = smul.addr %s874, 64
        %s876 = scalar_lea.vmem [#allocation15], %s875
        %p877 = pneg %p261
        %p878 = pneg %p258
        %p879 = scmp.lt.s32.totalorder %s45, 1
        %s880 = scalar_select %p879, %s45, 1
        %s881 = scalar_lea.vmem %s9, %s880
        %p882 = pneg %p287
        %p883 = pneg %p284
        %p884 = scmp.lt.s32.totalorder %s45, 1
        %s885 = scalar_select %p884, %s45, 1
        %s886 = scalar_lea.vmem %s10, %s885
        %p887 = pneg %p313
        %p888 = pneg %p310
        %p889 = scmp.lt.s32.totalorder %s45, 1
        %s890 = scalar_select %p889, %s45, 1
        %s891 = scalar_lea.vmem %s11, %s890
        %p892 = pneg %p339
        %p893 = pneg %p336
        %s894 = sand.u32 %s40, 1
        %s895 = scalar_lea.sflag [#allocation4], %s894
        %s896 = sand.u32 %s352, 1
        %s897 = smul.addr %s896, 128
        %s898 = scalar_lea.vmem [#allocation16], %s897
        %p899 = pneg %p365
        %p900 = pneg %p362
        %p901 = scmp.lt.s32.totalorder %s45, 1
        %s902 = scalar_select %p901, %s45, 1
        %s903 = smul.addr %s902, 2
        %s904 = scalar_lea.vmem %s13, %s903
        %p905 = pneg %p391
        %p906 = pneg %p388
        %s907 = sand.u32 %s40, 1
        %s908 = scalar_lea.sflag [#allocation7], %s907
        %s909 = sand.u32 %s404, 1
        %s910 = smul.addr %s909, 128
        %s911 = scalar_lea.vmem [#allocation17], %s910
        %p912 = pneg %p417
        %p913 = pneg %p414
        %p914 = scmp.lt.s32.totalorder %s45, 1
        %s915 = scalar_select %p914, %s45, 1
        %s916 = scalar_lea.vmem %s15, %s915
        %p917 = pneg %p443
        %p918 = pneg %p440
        %p919 = scmp.lt.s32.totalorder %s45, 1
        %s920 = scalar_select %p919, %s45, 1
        %s921 = scalar_lea.vmem %s16, %s920
        %p922 = pneg %p469
        %p923 = pneg %p466
        %p924 = scmp.lt.s32.totalorder %s45, 1
        %s925 = scalar_select %p924, %s45, 1
        %s926 = scalar_lea.vmem %s17, %s925
        %p927 = pneg %p495
        %p928 = pneg %p492
        %p929 = pneg %p521
        %p930 = pneg %p518
        %s931 = sand.u32 %s508, 1
        %s932 = scalar_lea.sflag [#allocation5], %s931
        %s933 = sand.u32 %s508, 1
        %s934 = smul.addr %s933, 16
        %s935 = scalar_lea.vmem [#allocation18], %s934
        %s936 = smul.u32 2, %s44
        %s937 = smul.u32 2, %s44
        %p938 = scmp.lt.s32.totalorder %s45, 1
        %s939 = scalar_select %p938, %s45, 1
        %s940 = smul.addr %s939, 3
        %s941 = scalar_lea.vmem %s7, %s940
        %p942 = scmp.lt.s32.totalorder %s45, 1
        %s943 = scalar_select %p942, %s45, 1
        %s944 = scalar_lea.vmem %s9, %s943
        %p945 = scmp.lt.s32.totalorder %s45, 1
        %s946 = scalar_select %p945, %s45, 1
        %s947 = scalar_lea.vmem %s10, %s946
        %p948 = scmp.lt.s32.totalorder %s45, 1
        %s949 = scalar_select %p948, %s45, 1
        %s950 = scalar_lea.vmem %s11, %s949
        %p951 = scmp.lt.s32.totalorder %s45, 1
        %s952 = scalar_select %p951, %s45, 1
        %s953 = smul.addr %s952, 2
        %s954 = scalar_lea.vmem %s13, %s953
        %p955 = scmp.lt.s32.totalorder %s45, 1
        %s956 = scalar_select %p955, %s45, 1
        %s957 = scalar_lea.vmem %s15, %s956
        %p958 = scmp.lt.s32.totalorder %s45, 1
        %s959 = scalar_select %p958, %s45, 1
        %s960 = scalar_lea.vmem %s16, %s959
        %p961 = scmp.lt.s32.totalorder %s45, 1
        %s962 = scalar_select %p961, %s45, 1
        %s963 = scalar_lea.vmem %s17, %s962
        %s964 = smul.u32 2, %s44
        %p966 = scmp.eq.s32.totalorder %s45, 0
        // Predicated region
        $region133: #{tpu_custom_call.1} parent=91 // pred_check
          %p967 = pneg %p966
        $region134: #{tpu_custom_call.1} parent=91 // pred_check_branch
          %969 = sbr.rel (%p967) target = $region136
        $region135: #{tpu_custom_call.1} parent=91 // pred_region
          %v970 = vld [vmem:[%s771] sm:$0xff]
          %v971 = vld [vmem:[%s771 + $0x8] sm:$0xff]
          %v972 = vld [vmem:[#allocation8] sm:$0x1]
          %v973 = vld [vmem:[#allocation9] sm:$0x1]
          %974 = vadd.xlane.f32.xlu0 %v970
          %v975 = vpop.xlane.xlu0 %974
          %976 = vadd.xlane.f32.xlu0 %v971
          %v977 = vpop.xlane.xlu0 %976
          %v978 = vrcp.pop 128.0
          %v979 = vmul.f32 %v975, %v978
          %v980 = vmul.f32 %v977, %v978
          %v981 = vsub.f32 %v970, %v979
          %v982 = vsub.f32 %v971, %v980
          %v983 = vmul.f32 %v981, %v981
          %v984 = vmul.f32 %v982, %v982
          %985 = vadd.xlane.f32.xlu0 %v983
          %v986 = vpop.xlane.xlu0 %985
          %987 = vadd.xlane.f32.xlu0 %v984
          %v988 = vpop.xlane.xlu0 %987
          %v989 = vmul.f32 %v986, %v978
          %v990 = vmul.f32 %v988, %v978
          %v991 = vadd.f32 %v989, 1e-05
          %v992 = vadd.f32 %v990, 1e-05
          %v993 = vrsqrt.pop %v991
          %v994 = vrsqrt.pop %v992
          %v995 = vmul.f32 %v981, %v993
          %v996 = vmul.f32 %v982, %v994
          %v998 = vlaneseq
          %v999 = vshrl.u32 %v998, 7
          %v1000 = vsub.s32 0, %v999
          %v1001 = vrot.slane %v972, %v1000
          %v1003 = vmul.f32 %v995, %v1001
          %v1004 = vmul.f32 %v996, %v1001
          %v1006 = vlaneseq
          %v1007 = vshrl.u32 %v1006, 7
          %v1008 = vsub.s32 0, %v1007
          %v1009 = vrot.slane %v973, %v1008
          %v1011 = vadd.f32 %v1003, %v1009
          %v1012 = vadd.f32 %v1004, %v1009
          %1013 = vst [vmem:[#allocation2] sm:$0xff] %v1011
          %1014 = vst [vmem:[#allocation2 + $0x8] sm:$0xff] %v1012
        $region136: #{tpu_custom_call.1} parent=91 // pred_fallthru
          _
        %v1015 = vld [vmem:[#allocation2] sm:$0xff]
        %v1016 = vld [vmem:[#allocation2 + $0x8] sm:$0xff]
        %v1017 = vpack.c.bf16 %v1016, %v1015
        %v1018 = vld [vmem:[%s805] sm:$0xff]
        %v1019 = vld [vmem:[%s805 + $0x8] sm:$0xf]
        %v1020 = vld [vmem:[%s805 + $0xc] sm:$0xff]
        %v1021 = vld [vmem:[%s805 + $0x14] sm:$0xf]
        %v1022 = vld [vmem:[%s805 + $0x18] sm:$0xff]
        %v1023 = vld [vmem:[%s805 + $0x20] sm:$0xf]
        %v1024 = vld [vmem:[%s805 + $0x24] sm:$0xff]
        %v1025 = vld [vmem:[%s805 + $0x2c] sm:$0xf]
        %v1026 = vld [vmem:[%s805 + $0x30] sm:$0xff]
        %v1027 = vld [vmem:[%s805 + $0x38] sm:$0xf]
        %v1028 = vld [vmem:[%s805 + $0x3c] sm:$0xff]
        %v1029 = vld [vmem:[%s805 + $0x44] sm:$0xf]
        %v1030 = vld [vmem:[%s805 + $0x48] sm:$0xff]
        %v1031 = vld [vmem:[%s805 + $0x50] sm:$0xf]
        %v1032 = vld [vmem:[%s805 + $0x54] sm:$0xff]
        %v1033 = vld [vmem:[%s805 + $0x5c] sm:$0xf]
        %v1034 = vld [vmem:[%s805 + $0x60] sm:$0xff]
        %v1035 = vld [vmem:[%s805 + $0x68] sm:$0xf]
        %v1036 = vld [vmem:[%s805 + $0x6c] sm:$0xff]
        %v1037 = vld [vmem:[%s805 + $0x74] sm:$0xf]
        %v1038 = vld [vmem:[%s805 + $0x78] sm:$0xff]
        %v1039 = vld [vmem:[%s805 + $0x80] sm:$0xf]
        %v1040 = vld [vmem:[%s805 + $0x84] sm:$0xff]
        %v1041 = vld [vmem:[%s805 + $0x8c] sm:$0xf]
        %v1042 = vld [vmem:[%s805 + $0x90] sm:$0xff]
        %v1043 = vld [vmem:[%s805 + $0x98] sm:$0xf]
        %v1044 = vld [vmem:[%s805 + $0x9c] sm:$0xff]
        %v1045 = vld [vmem:[%s805 + $0xa4] sm:$0xf]
        %v1046 = vld [vmem:[%s805 + $0xa8] sm:$0xff]
        %v1047 = vld [vmem:[%s805 + $0xb0] sm:$0xf]
        %v1048 = vld [vmem:[%s805 + $0xb4] sm:$0xff]
        %v1049 = vld [vmem:[%s805 + $0xbc] sm:$0xf]
        %v1050 = vld [vmem:[%s941] sm:$0x7]
        %v1052 = vlaneseq
        %v1053 = vshrl.u32 %v1052, 7
        %v1054 = vsub.s32 0, %v1053
        %v1055 = vrot.slane %v1050, %v1054
        %v1056 = vlaneseq
        %v1057 = vshrl.u32 %v1056, 7
        %v1058 = vsub.s32 1, %v1057
        %v1059 = vrot.slane %v1050, %v1058
        %v1060 = vlaneseq
        %v1061 = vshrl.u32 %v1060, 7
        %v1062 = vsub.s32 2, %v1061
        %v1063 = vrot.slane %v1050, %v1062
        %v1099 = vunpack.c.l.b16 %v1018
        %v1100 = vunpack.c.h.b16 %v1018
        %v1101 = vunpack.c.l.b16 %v1019
        %v1102 = vunpack.c.l.b16 %v1020
        %v1103 = vunpack.c.h.b16 %v1020
        %v1104 = vunpack.c.l.b16 %v1021
        %v1105 = vunpack.c.l.b16 %v1022
        %v1106 = vunpack.c.h.b16 %v1022
        %v1107 = vunpack.c.l.b16 %v1023
        %v1108 = vunpack.c.l.b16 %v1024
        %v1109 = vunpack.c.h.b16 %v1024
        %v1110 = vunpack.c.l.b16 %v1025
        %v1111 = vunpack.c.l.b16 %v1026
        %v1112 = vunpack.c.h.b16 %v1026
        %v1113 = vunpack.c.l.b16 %v1027
        %v1114 = vunpack.c.l.b16 %v1028
        %v1115 = vunpack.c.h.b16 %v1028
        %v1116 = vunpack.c.l.b16 %v1029
        %v1117 = vunpack.c.l.b16 %v1030
        %v1118 = vunpack.c.h.b16 %v1030
        %v1119 = vunpack.c.l.b16 %v1031
        %v1120 = vunpack.c.l.b16 %v1032
        %v1121 = vunpack.c.h.b16 %v1032
        %v1122 = vunpack.c.l.b16 %v1033
        %v1123 = vunpack.c.l.b16 %v1034
        %v1124 = vunpack.c.h.b16 %v1034
        %v1125 = vunpack.c.l.b16 %v1035
        %v1126 = vunpack.c.l.b16 %v1036
        %v1127 = vunpack.c.h.b16 %v1036
        %v1128 = vunpack.c.l.b16 %v1037
        %v1129 = vunpack.c.l.b16 %v1038
        %v1130 = vunpack.c.h.b16 %v1038
        %v1131 = vunpack.c.l.b16 %v1039
        %v1132 = vunpack.c.l.b16 %v1040
        %v1133 = vunpack.c.h.b16 %v1040
        %v1134 = vunpack.c.l.b16 %v1041
        %v1135 = vunpack.c.l.b16 %v1042
        %v1136 = vunpack.c.h.b16 %v1042
        %v1137 = vunpack.c.l.b16 %v1043
        %v1138 = vunpack.c.l.b16 %v1044
        %v1139 = vunpack.c.h.b16 %v1044
        %v1140 = vunpack.c.l.b16 %v1045
        %v1141 = vunpack.c.l.b16 %v1046
        %v1142 = vunpack.c.h.b16 %v1046
        %v1143 = vunpack.c.l.b16 %v1047
        %v1144 = vunpack.c.l.b16 %v1048
        %v1145 = vunpack.c.h.b16 %v1048
        %v1146 = vunpack.c.l.b16 %v1049
        %v1147 = vpack.c.b16 %v1102, %v1099
        %v1148 = vpack.c.b16 %v1103, %v1100
        %v1149 = vpack.c.b16 %v1104, %v1101
        %v1150 = vpack.c.b16 %v1108, %v1105
        %v1151 = vpack.c.b16 %v1109, %v1106
        %v1152 = vpack.c.b16 %v1110, %v1107
        %v1153 = vpack.c.b16 %v1114, %v1111
        %v1154 = vpack.c.b16 %v1115, %v1112
        %v1155 = vpack.c.b16 %v1116, %v1113
        %v1156 = vpack.c.b16 %v1120, %v1117
        %v1157 = vpack.c.b16 %v1121, %v1118
        %v1158 = vpack.c.b16 %v1122, %v1119
        %v1159 = vpack.c.b16 %v1126, %v1123
        %v1160 = vpack.c.b16 %v1127, %v1124
        %v1161 = vpack.c.b16 %v1128, %v1125
        %v1162 = vpack.c.b16 %v1132, %v1129
        %v1163 = vpack.c.b16 %v1133, %v1130
        %v1164 = vpack.c.b16 %v1134, %v1131
        %v1165 = vpack.c.b16 %v1138, %v1135
        %v1166 = vpack.c.b16 %v1139, %v1136
        %v1167 = vpack.c.b16 %v1140, %v1137
        %v1168 = vpack.c.b16 %v1144, %v1141
        %v1169 = vpack.c.b16 %v1145, %v1142
        %v1170 = vpack.c.b16 %v1146, %v1143
        %1195 = vmatprep.subr.bf16.mxu0 %v1169
        %1196 = vmatpush1.bf16.msra.mxu0 %v1168
        %1197 = vmatprep.subr.bf16.mxu0 %v1166
        %1198 = vmatpush1.bf16.msra.mxu0 %v1165
        %1199 = vmatprep.subr.bf16.mxu0 %v1163
        %1200 = vmatpush1.bf16.msra.mxu0 %v1162
        %1201 = vmatprep.subr.bf16.mxu0 %v1160
        %1202 = vmatpush1.bf16.msra.mxu0 %v1159
        %1203 = vmatprep.subr.bf16.mxu0 %v1157
        %1204 = vmatpush1.bf16.msra.mxu0 %v1156
        %1205 = vmatprep.subr.bf16.mxu0 %v1154
        %1206 = vmatpush1.bf16.msra.mxu0 %v1153
        %1207 = vmatprep.subr.bf16.mxu0 %v1151
        %1208 = vmatpush1.bf16.msra.mxu0 %v1150
        %1209 = vmatprep.subr.bf16.mxu0 %v1148
        %1210 = vmatpush1.bf16.msra.mxu0 %v1147
        %1211 = vmatprep.subr.bf16.mxu0 0
        %1212 = vmatpush2.bf16.msra.mxu0 0
        %1213 = vmatprep.subr.bf16.mxu0 0
        %1214 = vmatpush2.bf16.msra.mxu0 0
        %1215 = vmatprep.subr.bf16.mxu0 0
        %1216 = vmatpush2.bf16.msra.mxu0 0
        %1217 = vmatprep.subr.bf16.mxu0 0
        %1218 = vmatpush2.bf16.msra.mxu0 0
        %1219 = vmatprep.subr.bf16.mxu0 0
        %1220 = vmatpush2.bf16.msra.mxu0 0
        %1221 = vmatprep.subr.bf16.mxu0 0
        %1222 = vmatpush2.bf16.msra.mxu0 0
        %1223 = vmatprep.subr.bf16.mxu0 0
        %1224 = vmatpush2.bf16.msra.mxu0 0
        %1225 = vmatprep.subr.bf16.mxu0 0
        %1226 = vmatpush2.bf16.msra.mxu0 0
        %1227 = vmatprep.mubr.bf16.mxu0 0
        %1228 = vmatmul.mubr.bf16.gmra.mxu0 %v1017
        %v1229 = vpop.f32.mrf.mxu0
        %v1230 = vadd.f32 %v1055, %v1229
        %v1231 = vpop.f32.mrf.mxu0
        %v1232 = vadd.f32 %v1059, %v1231
        %v1233 = vpop.f32.mrf.mxu0
        %v1234 = vadd.f32 %v1055, %v1233
        %v1235 = vpop.f32.mrf.mxu0
        %v1236 = vadd.f32 %v1059, %v1235
        %1237 = vdwg.mxu0
        %1238 = vmatprep.subr.bf16.mxu0 0
        %1239 = vmatpush1.bf16.msra.mxu0 %v1170
        %1240 = vmatprep.subr.bf16.mxu0 0
        %1241 = vmatpush1.bf16.msra.mxu0 %v1167
        %1242 = vmatprep.subr.bf16.mxu0 0
        %1243 = vmatpush1.bf16.msra.mxu0 %v1164
        %1244 = vmatprep.subr.bf16.mxu0 0
        %1245 = vmatpush1.bf16.msra.mxu0 %v1161
        %1246 = vmatprep.subr.bf16.mxu0 0
        %1247 = vmatpush1.bf16.msra.mxu0 %v1158
        %1248 = vmatprep.subr.bf16.mxu0 0
        %1249 = vmatpush1.bf16.msra.mxu0 %v1155
        %1250 = vmatprep.subr.bf16.mxu0 0
        %1251 = vmatpush1.bf16.msra.mxu0 %v1152
        %1252 = vmatprep.subr.bf16.mxu0 0
        %1253 = vmatpush1.bf16.msra.mxu0 %v1149
        %1254 = vmatprep.subr.bf16.mxu0 0
        %1255 = vmatpush2.bf16.msra.mxu0 0
        %1256 = vmatprep.subr.bf16.mxu0 0
        %1257 = vmatpush2.bf16.msra.mxu0 0
        %1258 = vmatprep.subr.bf16.mxu0 0
        %1259 = vmatpush2.bf16.msra.mxu0 0
        %1260 = vmatprep.subr.bf16.mxu0 0
        %1261 = vmatpush2.bf16.msra.mxu0 0
        %1262 = vmatprep.subr.bf16.mxu0 0
        %1263 = vmatpush2.bf16.msra.mxu0 0
        %1264 = vmatprep.subr.bf16.mxu0 0
        %1265 = vmatpush2.bf16.msra.mxu0 0
        %1266 = vmatprep.subr.bf16.mxu0 0
        %1267 = vmatpush2.bf16.msra.mxu0 0
        %1268 = vmatprep.subr.bf16.mxu0 0
        %1269 = vmatpush2.bf16.msra.mxu0 0
        %1270 = vmatprep.mubr.bf16.mxu0 0
        %1271 = vmatmul.mubr.bf16.gmra.mxu0 %v1017
        %v1272 = vpop.f32.mrf.mxu0
        %v1273 = vadd.f32 %v1063, %v1272
        %v1274 = vpop.f32.mrf.mxu0
        %v1275 = vpop.f32.mrf.mxu0
        %v1276 = vadd.f32 %v1063, %v1275
        %v1277 = vpop.f32.mrf.mxu0
        %1278 = vdwg.mxu0
        %v1279 = vld [vmem:[%s780] sm:$0x1]
        %v1280 = vld [vmem:[%s780 + $0x1] sm:$0x1]
        %v1281 = vpack.c.bf16 %v1230, %v1230
        %v1282 = vpack.c.bf16 %v1234, %v1234
        %v1283 = vpack.c.bf16 %v1232, %v1232
        %v1284 = vpack.c.bf16 %v1236, %v1236
        %v1287 = vlaneseq
        %v1288 = vshrl.u32 %v1287, 7
        %v1289 = vsub.s32 0, %v1288
        %v1290 = vrot.slane %v1279, %v1289
        %v1291 = vlaneseq
        %v1292 = vshrl.u32 %v1291, 7
        %v1293 = vsub.s32 0, %v1292
        %v1294 = vrot.slane %v1280, %v1293
        %vm1297 = vcmask 261120
        %v1299 = vsel %vm1297, %v1281, 0
        %v1302 = vsel %vm1297, %v1283, 0
        %1304 = vmatprep.subr.bf16.mxu0 0
        %1305 = vmatpush1.bf16.xpose.msra.mxu0 0
        %1306 = vmatprep.subr.bf16.mxu0 0
        %1307 = vmatpush1.bf16.xpose.msra.mxu0 0
        %1308 = vmatprep.subr.bf16.mxu0 0
        %1309 = vmatpush1.bf16.xpose.msra.mxu0 0
        %1310 = vmatprep.subr.bf16.mxu0 0
        %1311 = vmatpush1.bf16.xpose.msra.mxu0 0
        %1312 = vmatprep.subr.bf16.mxu0 0
        %1313 = vmatpush1.bf16.xpose.msra.mxu0 0
        %1314 = vmatprep.subr.bf16.mxu0 0
        %1315 = vmatpush1.bf16.xpose.msra.mxu0 0
        %1316 = vmatprep.subr.bf16.mxu0 0
        %1317 = vmatpush1.bf16.xpose.msra.mxu0 0
        %1318 = vmatprep.subr.bf16.mxu0 0
        %1319 = vmatpush1.bf16.xpose.msra.mxu0 %v1302
        %1320 = vmatprep.subr.bf16.mxu0 0
        %1321 = vmatpush2.bf16.xpose.msra.mxu0 0
        %1322 = vmatprep.subr.bf16.mxu0 0
        %1323 = vmatpush2.bf16.xpose.msra.mxu0 0
        %1324 = vmatprep.subr.bf16.mxu0 0
        %1325 = vmatpush2.bf16.xpose.msra.mxu0 0
        %1326 = vmatprep.subr.bf16.mxu0 0
        %1327 = vmatpush2.bf16.xpose.msra.mxu0 0
        %1328 = vmatprep.subr.bf16.mxu0 0
        %1329 = vmatpush2.bf16.xpose.msra.mxu0 0
        %1330 = vmatprep.subr.bf16.mxu0 0
        %1331 = vmatpush2.bf16.xpose.msra.mxu0 0
        %1332 = vmatprep.subr.bf16.mxu0 0
        %1333 = vmatpush2.bf16.xpose.msra.mxu0 0
        %1334 = vmatprep.subr.bf16.mxu0 0
        %1335 = vmatpush2.bf16.xpose.msra.mxu0 0
        %1336 = vmatprep.mubr.bf16.mxu0 0
        %1337 = vmatmul.mubr.bf16.gmra.mxu0 %v1299
        %v1338 = vpop.f32.mrf.mxu0
        %v1339 = vadd.f32 %v1290, %v1338
        %v1340 = vpop.f32.mrf.mxu0
        %v1341 = vpop.f32.mrf.mxu0
        %v1342 = vpop.f32.mrf.mxu0
        %1343 = vdwg.mxu0
        %v1345 = vsel %vm1297, %v1282, 0
        %v1348 = vsel %vm1297, %v1284, 0
        %1350 = vmatprep.subr.bf16.mxu0 0
        %1351 = vmatpush1.bf16.xpose.msra.mxu0 0
        %1352 = vmatprep.subr.bf16.mxu0 0
        %1353 = vmatpush1.bf16.xpose.msra.mxu0 0
        %1354 = vmatprep.subr.bf16.mxu0 0
        %1355 = vmatpush1.bf16.xpose.msra.mxu0 0
        %1356 = vmatprep.subr.bf16.mxu0 0
        %1357 = vmatpush1.bf16.xpose.msra.mxu0 0
        %1358 = vmatprep.subr.bf16.mxu0 0
        %1359 = vmatpush1.bf16.xpose.msra.mxu0 0
        %1360 = vmatprep.subr.bf16.mxu0 0
        %1361 = vmatpush1.bf16.xpose.msra.mxu0 0
        %1362 = vmatprep.subr.bf16.mxu0 0
        %1363 = vmatpush1.bf16.xpose.msra.mxu0 0
        %1364 = vmatprep.subr.bf16.mxu0 0
        %1365 = vmatpush1.bf16.xpose.msra.mxu0 %v1348
        %1366 = vmatprep.subr.bf16.mxu0 0
        %1367 = vmatpush2.bf16.xpose.msra.mxu0 0
        %1368 = vmatprep.subr.bf16.mxu0 0
        %1369 = vmatpush2.bf16.xpose.msra.mxu0 0
        %1370 = vmatprep.subr.bf16.mxu0 0
        %1371 = vmatpush2.bf16.xpose.msra.mxu0 0
        %1372 = vmatprep.subr.bf16.mxu0 0
        %1373 = vmatpush2.bf16.xpose.msra.mxu0 0
        %1374 = vmatprep.subr.bf16.mxu0 0
        %1375 = vmatpush2.bf16.xpose.msra.mxu0 0
        %1376 = vmatprep.subr.bf16.mxu0 0
        %1377 = vmatpush2.bf16.xpose.msra.mxu0 0
        %1378 = vmatprep.subr.bf16.mxu0 0
        %1379 = vmatpush2.bf16.xpose.msra.mxu0 0
        %1380 = vmatprep.subr.bf16.mxu0 0
        %1381 = vmatpush2.bf16.xpose.msra.mxu0 0
        %1382 = vmatprep.mubr.bf16.mxu0 0
        %1383 = vmatmul.mubr.bf16.gmra.mxu0 %v1345
        %v1384 = vpop.f32.mrf.mxu0
        %v1385 = vadd.f32 %v1294, %v1384
        %v1386 = vpop.f32.mrf.mxu0
        %v1387 = vpop.f32.mrf.mxu0
        %v1388 = vpop.f32.mrf.mxu0
        %1389 = vdwg.mxu0
        %vm1390 = vcmask 64512
        %v1391 = vsel %vm1390, %v1339, -inf
        %1392 = vmax.xlane.f32.xlu0 %v1391
        %v1393 = vpop.xlane.xlu0 %1392
        %v1394 = vsel %vm1390, %v1385, -inf
        %1395 = vmax.xlane.f32.xlu0 %v1394
        %v1396 = vpop.xlane.xlu0 %1395
        %v1397 = vsub.f32 %v1339, %v1393
        %v1398 = vsub.f32 %v1385, %v1396
        %v1399 = vmul.f32 %v1397, 1.442695
        %v1400 = vpow.pop %v1399
        %v1401 = vmul.f32 %v1398, 1.442695
        %v1402 = vpow.pop %v1401
        %v1403 = vsel %vm1390, %v1400, 0.0
        %1404 = vadd.xlane.f32.xlu0 %v1403
        %v1405 = vpop.xlane.xlu0 %1404
        %v1406 = vsel %vm1390, %v1402, 0.0
        %1407 = vadd.xlane.f32.xlu0 %v1406
        %v1408 = vpop.xlane.xlu0 %1407
        %v1409 = vrcp.pop %v1405
        %v1410 = vrcp.pop %v1408
        %v1411 = vmul.f32 %v1400, %v1409
        %v1412 = vmul.f32 %v1402, %v1410
        %v1413 = vpack.c.bf16 %v1411, %v1411
        %v1414 = vpack.c.bf16 %v1412, %v1412
        %v1415 = vpack.c.bf16 %v1273, %v1273
        %v1416 = vpack.c.bf16 %v1276, %v1276
        %v1418 = vsel %vm1390, %v1413, 0
        %vm1420 = vcmask 1043456
        %v1422 = vsel %vm1420, %v1415, 0
        %1424 = vmatprep.subr.bf16.mxu0 0
        %1425 = vmatpush1.bf16.msra.mxu0 0
        %1426 = vmatprep.subr.bf16.mxu0 0
        %1427 = vmatpush1.bf16.msra.mxu0 0
        %1428 = vmatprep.subr.bf16.mxu0 0
        %1429 = vmatpush1.bf16.msra.mxu0 0
        %1430 = vmatprep.subr.bf16.mxu0 0
        %1431 = vmatpush1.bf16.msra.mxu0 0
        %1432 = vmatprep.subr.bf16.mxu0 0
        %1433 = vmatpush1.bf16.msra.mxu0 0
        %1434 = vmatprep.subr.bf16.mxu0 0
        %1435 = vmatpush1.bf16.msra.mxu0 0
        %1436 = vmatprep.subr.bf16.mxu0 0
        %1437 = vmatpush1.bf16.msra.mxu0 0
        %1438 = vmatprep.subr.bf16.mxu0 0
        %1439 = vmatpush1.bf16.msra.mxu0 %v1422
        %1440 = vmatprep.subr.bf16.mxu0 0
        %1441 = vmatpush2.bf16.msra.mxu0 0
        %1442 = vmatprep.subr.bf16.mxu0 0
        %1443 = vmatpush2.bf16.msra.mxu0 0
        %1444 = vmatprep.subr.bf16.mxu0 0
        %1445 = vmatpush2.bf16.msra.mxu0 0
        %1446 = vmatprep.subr.bf16.mxu0 0
        %1447 = vmatpush2.bf16.msra.mxu0 0
        %1448 = vmatprep.subr.bf16.mxu0 0
        %1449 = vmatpush2.bf16.msra.mxu0 0
        %1450 = vmatprep.subr.bf16.mxu0 0
        %1451 = vmatpush2.bf16.msra.mxu0 0
        %1452 = vmatprep.subr.bf16.mxu0 0
        %1453 = vmatpush2.bf16.msra.mxu0 0
        %1454 = vmatprep.subr.bf16.mxu0 0
        %1455 = vmatpush2.bf16.msra.mxu0 0
        %1456 = vmatprep.mubr.bf16.mxu0 0
        %1457 = vmatmul.mubr.bf16.gmra.mxu0 %v1418
        %v1458 = vpop.f32.mrf.mxu0
        %v1459 = vadd.f32 0.0, %v1458
        %v1460 = vpop.f32.mrf.mxu0
        %v1461 = vpop.f32.mrf.mxu0
        %v1462 = vpop.f32.mrf.mxu0
        %1463 = vdwg.mxu0
        %v1465 = vsel %vm1390, %v1414, 0
        %v1468 = vsel %vm1420, %v1416, 0
        %1470 = vmatprep.subr.bf16.mxu0 0
        %1471 = vmatpush1.bf16.msra.mxu0 0
        %1472 = vmatprep.subr.bf16.mxu0 0
        %1473 = vmatpush1.bf16.msra.mxu0 0
        %1474 = vmatprep.subr.bf16.mxu0 0
        %1475 = vmatpush1.bf16.msra.mxu0 0
        %1476 = vmatprep.subr.bf16.mxu0 0
        %1477 = vmatpush1.bf16.msra.mxu0 0
        %1478 = vmatprep.subr.bf16.mxu0 0
        %1479 = vmatpush1.bf16.msra.mxu0 0
        %1480 = vmatprep.subr.bf16.mxu0 0
        %1481 = vmatpush1.bf16.msra.mxu0 0
        %1482 = vmatprep.subr.bf16.mxu0 0
        %1483 = vmatpush1.bf16.msra.mxu0 0
        %1484 = vmatprep.subr.bf16.mxu0 0
        %1485 = vmatpush1.bf16.msra.mxu0 %v1468
        %1486 = vmatprep.subr.bf16.mxu0 0
        %1487 = vmatpush2.bf16.msra.mxu0 0
        %1488 = vmatprep.subr.bf16.mxu0 0
        %1489 = vmatpush2.bf16.msra.mxu0 0
        %1490 = vmatprep.subr.bf16.mxu0 0
        %1491 = vmatpush2.bf16.msra.mxu0 0
        %1492 = vmatprep.subr.bf16.mxu0 0
        %1493 = vmatpush2.bf16.msra.mxu0 0
        %1494 = vmatprep.subr.bf16.mxu0 0
        %1495 = vmatpush2.bf16.msra.mxu0 0
        %1496 = vmatprep.subr.bf16.mxu0 0
        %1497 = vmatpush2.bf16.msra.mxu0 0
        %1498 = vmatprep.subr.bf16.mxu0 0
        %1499 = vmatpush2.bf16.msra.mxu0 0
        %1500 = vmatprep.subr.bf16.mxu0 0
        %1501 = vmatpush2.bf16.msra.mxu0 0
        %1502 = vmatprep.mubr.bf16.mxu0 0
        %1503 = vmatmul.mubr.bf16.gmra.mxu0 %v1465
        %v1504 = vpop.f32.mrf.mxu0
        %v1505 = vadd.f32 0.0, %v1504
        %v1506 = vpop.f32.mrf.mxu0
        %v1507 = vpop.f32.mrf.mxu0
        %v1508 = vpop.f32.mrf.mxu0
        %1509 = vdwg.mxu0
        %1511 = vrot.lane.b32.xlu0 %v1281, 96
        %v1512 = vpop.permute.xlu0 %1511
        %1514 = vrot.lane.b32.xlu0 %v1283, 96
        %v1515 = vpop.permute.xlu0 %1514
        %v1517 = vsel %vm1297, %v1512, 0
        %v1520 = vsel %vm1297, %v1515, 0
        %1522 = vmatprep.subr.bf16.mxu0 0
        %1523 = vmatpush1.bf16.xpose.msra.mxu0 0
        %1524 = vmatprep.subr.bf16.mxu0 0
        %1525 = vmatpush1.bf16.xpose.msra.mxu0 0
        %1526 = vmatprep.subr.bf16.mxu0 0
        %1527 = vmatpush1.bf16.xpose.msra.mxu0 0
        %1528 = vmatprep.subr.bf16.mxu0 0
        %1529 = vmatpush1.bf16.xpose.msra.mxu0 0
        %1530 = vmatprep.subr.bf16.mxu0 0
        %1531 = vmatpush1.bf16.xpose.msra.mxu0 0
        %1532 = vmatprep.subr.bf16.mxu0 0
        %1533 = vmatpush1.bf16.xpose.msra.mxu0 0
        %1534 = vmatprep.subr.bf16.mxu0 0
        %1535 = vmatpush1.bf16.xpose.msra.mxu0 0
        %1536 = vmatprep.subr.bf16.mxu0 0
        %1537 = vmatpush1.bf16.xpose.msra.mxu0 %v1520
        %1538 = vmatprep.subr.bf16.mxu0 0
        %1539 = vmatpush2.bf16.xpose.msra.mxu0 0
        %1540 = vmatprep.subr.bf16.mxu0 0
        %1541 = vmatpush2.bf16.xpose.msra.mxu0 0
        %1542 = vmatprep.subr.bf16.mxu0 0
        %1543 = vmatpush2.bf16.xpose.msra.mxu0 0
        %1544 = vmatprep.subr.bf16.mxu0 0
        %1545 = vmatpush2.bf16.xpose.msra.mxu0 0
        %1546 = vmatprep.subr.bf16.mxu0 0
        %1547 = vmatpush2.bf16.xpose.msra.mxu0 0
        %1548 = vmatprep.subr.bf16.mxu0 0
        %1549 = vmatpush2.bf16.xpose.msra.mxu0 0
        %1550 = vmatprep.subr.bf16.mxu0 0
        %1551 = vmatpush2.bf16.xpose.msra.mxu0 0
        %1552 = vmatprep.subr.bf16.mxu0 0
        %1553 = vmatpush2.bf16.xpose.msra.mxu0 0
        %1554 = vmatprep.mubr.bf16.mxu0 0
        %1555 = vmatmul.mubr.bf16.gmra.mxu0 %v1517
        %v1556 = vpop.f32.mrf.mxu0
        %v1557 = vadd.f32 %v1290, %v1556
        %v1558 = vpop.f32.mrf.mxu0
        %v1559 = vpop.f32.mrf.mxu0
        %v1560 = vpop.f32.mrf.mxu0
        %1561 = vdwg.mxu0
        %1563 = vrot.lane.b32.xlu0 %v1282, 96
        %v1564 = vpop.permute.xlu0 %1563
        %1566 = vrot.lane.b32.xlu0 %v1284, 96
        %v1567 = vpop.permute.xlu0 %1566
        %v1569 = vsel %vm1297, %v1564, 0
        %v1572 = vsel %vm1297, %v1567, 0
        %1574 = vmatprep.subr.bf16.mxu0 0
        %1575 = vmatpush1.bf16.xpose.msra.mxu0 0
        %1576 = vmatprep.subr.bf16.mxu0 0
        %1577 = vmatpush1.bf16.xpose.msra.mxu0 0
        %1578 = vmatprep.subr.bf16.mxu0 0
        %1579 = vmatpush1.bf16.xpose.msra.mxu0 0
        %1580 = vmatprep.subr.bf16.mxu0 0
        %1581 = vmatpush1.bf16.xpose.msra.mxu0 0
        %1582 = vmatprep.subr.bf16.mxu0 0
        %1583 = vmatpush1.bf16.xpose.msra.mxu0 0
        %1584 = vmatprep.subr.bf16.mxu0 0
        %1585 = vmatpush1.bf16.xpose.msra.mxu0 0
        %1586 = vmatprep.subr.bf16.mxu0 0
        %1587 = vmatpush1.bf16.xpose.msra.mxu0 0
        %1588 = vmatprep.subr.bf16.mxu0 0
        %1589 = vmatpush1.bf16.xpose.msra.mxu0 %v1572
        %1590 = vmatprep.subr.bf16.mxu0 0
        %1591 = vmatpush2.bf16.xpose.msra.mxu0 0
        %1592 = vmatprep.subr.bf16.mxu0 0
        %1593 = vmatpush2.bf16.xpose.msra.mxu0 0
        %1594 = vmatprep.subr.bf16.mxu0 0
        %1595 = vmatpush2.bf16.xpose.msra.mxu0 0
        %1596 = vmatprep.subr.bf16.mxu0 0
        %1597 = vmatpush2.bf16.xpose.msra.mxu0 0
        %1598 = vmatprep.subr.bf16.mxu0 0
        %1599 = vmatpush2.bf16.xpose.msra.mxu0 0
        %1600 = vmatprep.subr.bf16.mxu0 0
        %1601 = vmatpush2.bf16.xpose.msra.mxu0 0
        %1602 = vmatprep.subr.bf16.mxu0 0
        %1603 = vmatpush2.bf16.xpose.msra.mxu0 0
        %1604 = vmatprep.subr.bf16.mxu0 0
        %1605 = vmatpush2.bf16.xpose.msra.mxu0 0
        %1606 = vmatprep.mubr.bf16.mxu0 0
        %1607 = vmatmul.mubr.bf16.gmra.mxu0 %v1569
        %v1608 = vpop.f32.mrf.mxu0
        %v1609 = vadd.f32 %v1294, %v1608
        %v1610 = vpop.f32.mrf.mxu0
        %v1611 = vpop.f32.mrf.mxu0
        %v1612 = vpop.f32.mrf.mxu0
        %1613 = vdwg.mxu0
        %v1614 = vsel %vm1390, %v1557, -inf
        %1615 = vmax.xlane.f32.xlu0 %v1614
        %v1616 = vpop.xlane.xlu0 %1615
        %v1617 = vsel %vm1390, %v1609, -inf
        %1618 = vmax.xlane.f32.xlu0 %v1617
        %v1619 = vpop.xlane.xlu0 %1618
        %v1620 = vsub.f32 %v1557, %v1616
        %v1621 = vsub.f32 %v1609, %v1619
        %v1622 = vmul.f32 %v1620, 1.442695
        %v1623 = vpow.pop %v1622
        %v1624 = vmul.f32 %v1621, 1.442695
        %v1625 = vpow.pop %v1624
        %v1626 = vsel %vm1390, %v1623, 0.0
        %1627 = vadd.xlane.f32.xlu0 %v1626
        %v1628 = vpop.xlane.xlu0 %1627
        %v1629 = vsel %vm1390, %v1625, 0.0
        %1630 = vadd.xlane.f32.xlu0 %v1629
        %v1631 = vpop.xlane.xlu0 %1630
        %v1632 = vrcp.pop %v1628
        %v1633 = vrcp.pop %v1631
        %v1634 = vmul.f32 %v1623, %v1632
        %v1635 = vmul.f32 %v1625, %v1633
        %v1636 = vpack.c.bf16 %v1634, %v1634
        %v1637 = vpack.c.bf16 %v1635, %v1635
        %1639 = vrot.lane.b32.xlu0 %v1415, 96
        %v1640 = vpop.permute.xlu0 %1639
        %v1642 = vsel %vm1390, %v1636, 0
        %v1645 = vsel %vm1420, %v1640, 0
        %1647 = vmatprep.subr.bf16.mxu0 0
        %1648 = vmatpush1.bf16.msra.mxu0 0
        %1649 = vmatprep.subr.bf16.mxu0 0
        %1650 = vmatpush1.bf16.msra.mxu0 0
        %1651 = vmatprep.subr.bf16.mxu0 0
        %1652 = vmatpush1.bf16.msra.mxu0 0
        %1653 = vmatprep.subr.bf16.mxu0 0
        %1654 = vmatpush1.bf16.msra.mxu0 0
        %1655 = vmatprep.subr.bf16.mxu0 0
        %1656 = vmatpush1.bf16.msra.mxu0 0
        %1657 = vmatprep.subr.bf16.mxu0 0
        %1658 = vmatpush1.bf16.msra.mxu0 0
        %1659 = vmatprep.subr.bf16.mxu0 0
        %1660 = vmatpush1.bf16.msra.mxu0 0
        %1661 = vmatprep.subr.bf16.mxu0 0
        %1662 = vmatpush1.bf16.msra.mxu0 %v1645
        %1663 = vmatprep.subr.bf16.mxu0 0
        %1664 = vmatpush2.bf16.msra.mxu0 0
        %1665 = vmatprep.subr.bf16.mxu0 0
        %1666 = vmatpush2.bf16.msra.mxu0 0
        %1667 = vmatprep.subr.bf16.mxu0 0
        %1668 = vmatpush2.bf16.msra.mxu0 0
        %1669 = vmatprep.subr.bf16.mxu0 0
        %1670 = vmatpush2.bf16.msra.mxu0 0
        %1671 = vmatprep.subr.bf16.mxu0 0
        %1672 = vmatpush2.bf16.msra.mxu0 0
        %1673 = vmatprep.subr.bf16.mxu0 0
        %1674 = vmatpush2.bf16.msra.mxu0 0
        %1675 = vmatprep.subr.bf16.mxu0 0
        %1676 = vmatpush2.bf16.msra.mxu0 0
        %1677 = vmatprep.subr.bf16.mxu0 0
        %1678 = vmatpush2.bf16.msra.mxu0 0
        %1679 = vmatprep.mubr.bf16.mxu0 0
        %1680 = vmatmul.mubr.bf16.gmra.mxu0 %v1642
        %v1681 = vpop.f32.mrf.mxu0
        %v1682 = vadd.f32 0.0, %v1681
        %v1683 = vpop.f32.mrf.mxu0
        %v1684 = vpop.f32.mrf.mxu0
        %v1685 = vpop.f32.mrf.mxu0
        %1686 = vdwg.mxu0
        %1688 = vrot.lane.b32.xlu0 %v1416, 96
        %v1689 = vpop.permute.xlu0 %1688
        %v1691 = vsel %vm1390, %v1637, 0
        %v1694 = vsel %vm1420, %v1689, 0
        %1696 = vmatprep.subr.bf16.mxu0 0
        %1697 = vmatpush1.bf16.msra.mxu0 0
        %1698 = vmatprep.subr.bf16.mxu0 0
        %1699 = vmatpush1.bf16.msra.mxu0 0
        %1700 = vmatprep.subr.bf16.mxu0 0
        %1701 = vmatpush1.bf16.msra.mxu0 0
        %1702 = vmatprep.subr.bf16.mxu0 0
        %1703 = vmatpush1.bf16.msra.mxu0 0
        %1704 = vmatprep.subr.bf16.mxu0 0
        %1705 = vmatpush1.bf16.msra.mxu0 0
        %1706 = vmatprep.subr.bf16.mxu0 0
        %1707 = vmatpush1.bf16.msra.mxu0 0
        %1708 = vmatprep.subr.bf16.mxu0 0
        %1709 = vmatpush1.bf16.msra.mxu0 0
        %1710 = vmatprep.subr.bf16.mxu0 0
        %1711 = vmatpush1.bf16.msra.mxu0 %v1694
        %1712 = vmatprep.subr.bf16.mxu0 0
        %1713 = vmatpush2.bf16.msra.mxu0 0
        %1714 = vmatprep.subr.bf16.mxu0 0
        %1715 = vmatpush2.bf16.msra.mxu0 0
        %1716 = vmatprep.subr.bf16.mxu0 0
        %1717 = vmatpush2.bf16.msra.mxu0 0
        %1718 = vmatprep.subr.bf16.mxu0 0
        %1719 = vmatpush2.bf16.msra.mxu0 0
        %1720 = vmatprep.subr.bf16.mxu0 0
        %1721 = vmatpush2.bf16.msra.mxu0 0
        %1722 = vmatprep.subr.bf16.mxu0 0
        %1723 = vmatpush2.bf16.msra.mxu0 0
        %1724 = vmatprep.subr.bf16.mxu0 0
        %1725 = vmatpush2.bf16.msra.mxu0 0
        %1726 = vmatprep.subr.bf16.mxu0 0
        %1727 = vmatpush2.bf16.msra.mxu0 0
        %1728 = vmatprep.mubr.bf16.mxu0 0
        %1729 = vmatmul.mubr.bf16.gmra.mxu0 %v1691
        %v1730 = vpop.f32.mrf.mxu0
        %v1731 = vadd.f32 0.0, %v1730
        %v1732 = vpop.f32.mrf.mxu0
        %v1733 = vpop.f32.mrf.mxu0
        %v1734 = vpop.f32.mrf.mxu0
        %1735 = vdwg.mxu0
        %1736 = vrot.lane.b32.xlu0 %v1281, 64
        %v1737 = vpop.permute.xlu0 %1736
        %1738 = vrot.lane.b32.xlu0 %v1283, 64
        %v1739 = vpop.permute.xlu0 %1738
        %v1741 = vsel %vm1297, %v1737, 0
        %v1744 = vsel %vm1297, %v1739, 0
        %1746 = vmatprep.subr.bf16.mxu0 0
        %1747 = vmatpush1.bf16.xpose.msra.mxu0 0
        %1748 = vmatprep.subr.bf16.mxu0 0
        %1749 = vmatpush1.bf16.xpose.msra.mxu0 0
        %1750 = vmatprep.subr.bf16.mxu0 0
        %1751 = vmatpush1.bf16.xpose.msra.mxu0 0
        %1752 = vmatprep.subr.bf16.mxu0 0
        %1753 = vmatpush1.bf16.xpose.msra.mxu0 0
        %1754 = vmatprep.subr.bf16.mxu0 0
        %1755 = vmatpush1.bf16.xpose.msra.mxu0 0
        %1756 = vmatprep.subr.bf16.mxu0 0
        %1757 = vmatpush1.bf16.xpose.msra.mxu0 0
        %1758 = vmatprep.subr.bf16.mxu0 0
        %1759 = vmatpush1.bf16.xpose.msra.mxu0 0
        %1760 = vmatprep.subr.bf16.mxu0 0
        %1761 = vmatpush1.bf16.xpose.msra.mxu0 %v1744
        %1762 = vmatprep.subr.bf16.mxu0 0
        %1763 = vmatpush2.bf16.xpose.msra.mxu0 0
        %1764 = vmatprep.subr.bf16.mxu0 0
        %1765 = vmatpush2.bf16.xpose.msra.mxu0 0
        %1766 = vmatprep.subr.bf16.mxu0 0
        %1767 = vmatpush2.bf16.xpose.msra.mxu0 0
        %1768 = vmatprep.subr.bf16.mxu0 0
        %1769 = vmatpush2.bf16.xpose.msra.mxu0 0
        %1770 = vmatprep.subr.bf16.mxu0 0
        %1771 = vmatpush2.bf16.xpose.msra.mxu0 0
        %1772 = vmatprep.subr.bf16.mxu0 0
        %1773 = vmatpush2.bf16.xpose.msra.mxu0 0
        %1774 = vmatprep.subr.bf16.mxu0 0
        %1775 = vmatpush2.bf16.xpose.msra.mxu0 0
        %1776 = vmatprep.subr.bf16.mxu0 0
        %1777 = vmatpush2.bf16.xpose.msra.mxu0 0
        %1778 = vmatprep.mubr.bf16.mxu0 0
        %1779 = vmatmul.mubr.bf16.gmra.mxu0 %v1741
        %v1780 = vpop.f32.mrf.mxu0
        %v1781 = vadd.f32 %v1290, %v1780
        %v1782 = vpop.f32.mrf.mxu0
        %v1783 = vpop.f32.mrf.mxu0
        %v1784 = vpop.f32.mrf.mxu0
        %1785 = vdwg.mxu0
        %1786 = vrot.lane.b32.xlu0 %v1282, 64
        %v1787 = vpop.permute.xlu0 %1786
        %1788 = vrot.lane.b32.xlu0 %v1284, 64
        %v1789 = vpop.permute.xlu0 %1788
        %v1791 = vsel %vm1297, %v1787, 0
        %v1794 = vsel %vm1297, %v1789, 0
        %1796 = vmatprep.subr.bf16.mxu0 0
        %1797 = vmatpush1.bf16.xpose.msra.mxu0 0
        %1798 = vmatprep.subr.bf16.mxu0 0
        %1799 = vmatpush1.bf16.xpose.msra.mxu0 0
        %1800 = vmatprep.subr.bf16.mxu0 0
        %1801 = vmatpush1.bf16.xpose.msra.mxu0 0
        %1802 = vmatprep.subr.bf16.mxu0 0
        %1803 = vmatpush1.bf16.xpose.msra.mxu0 0
        %1804 = vmatprep.subr.bf16.mxu0 0
        %1805 = vmatpush1.bf16.xpose.msra.mxu0 0
        %1806 = vmatprep.subr.bf16.mxu0 0
        %1807 = vmatpush1.bf16.xpose.msra.mxu0 0
        %1808 = vmatprep.subr.bf16.mxu0 0
        %1809 = vmatpush1.bf16.xpose.msra.mxu0 0
        %1810 = vmatprep.subr.bf16.mxu0 0
        %1811 = vmatpush1.bf16.xpose.msra.mxu0 %v1794
        %1812 = vmatprep.subr.bf16.mxu0 0
        %1813 = vmatpush2.bf16.xpose.msra.mxu0 0
        %1814 = vmatprep.subr.bf16.mxu0 0
        %1815 = vmatpush2.bf16.xpose.msra.mxu0 0
        %1816 = vmatprep.subr.bf16.mxu0 0
        %1817 = vmatpush2.bf16.xpose.msra.mxu0 0
        %1818 = vmatprep.subr.bf16.mxu0 0
        %1819 = vmatpush2.bf16.xpose.msra.mxu0 0
        %1820 = vmatprep.subr.bf16.mxu0 0
        %1821 = vmatpush2.bf16.xpose.msra.mxu0 0
        %1822 = vmatprep.subr.bf16.mxu0 0
        %1823 = vmatpush2.bf16.xpose.msra.mxu0 0
        %1824 = vmatprep.subr.bf16.mxu0 0
        %1825 = vmatpush2.bf16.xpose.msra.mxu0 0
        %1826 = vmatprep.subr.bf16.mxu0 0
        %1827 = vmatpush2.bf16.xpose.msra.mxu0 0
        %1828 = vmatprep.mubr.bf16.mxu0 0
        %1829 = vmatmul.mubr.bf16.gmra.mxu0 %v1791
        %v1830 = vpop.f32.mrf.mxu0
        %v1831 = vadd.f32 %v1294, %v1830
        %v1832 = vpop.f32.mrf.mxu0
        %v1833 = vpop.f32.mrf.mxu0
        %v1834 = vpop.f32.mrf.mxu0
        %1835 = vdwg.mxu0
        %v1836 = vsel %vm1390, %v1781, -inf
        %1837 = vmax.xlane.f32.xlu0 %v1836
        %v1838 = vpop.xlane.xlu0 %1837
        %v1839 = vsel %vm1390, %v1831, -inf
        %1840 = vmax.xlane.f32.xlu0 %v1839
        %v1841 = vpop.xlane.xlu0 %1840
        %v1842 = vsub.f32 %v1781, %v1838
        %v1843 = vsub.f32 %v1831, %v1841
        %v1844 = vmul.f32 %v1842, 1.442695
        %v1845 = vpow.pop %v1844
        %v1846 = vmul.f32 %v1843, 1.442695
        %v1847 = vpow.pop %v1846
        %v1848 = vsel %vm1390, %v1845, 0.0
        %1849 = vadd.xlane.f32.xlu0 %v1848
        %v1850 = vpop.xlane.xlu0 %1849
        %v1851 = vsel %vm1390, %v1847, 0.0
        %1852 = vadd.xlane.f32.xlu0 %v1851
        %v1853 = vpop.xlane.xlu0 %1852
        %v1854 = vrcp.pop %v1850
        %v1855 = vrcp.pop %v1853
        %v1856 = vmul.f32 %v1845, %v1854
        %v1857 = vmul.f32 %v1847, %v1855
        %v1858 = vpack.c.bf16 %v1856, %v1856
        %v1859 = vpack.c.bf16 %v1857, %v1857
        %1860 = vrot.lane.b32.xlu0 %v1415, 64
        %v1861 = vpop.permute.xlu0 %1860
        %v1863 = vsel %vm1390, %v1858, 0
        %v1866 = vsel %vm1420, %v1861, 0
        %1868 = vmatprep.subr.bf16.mxu0 0
        %1869 = vmatpush1.bf16.msra.mxu0 0
        %1870 = vmatprep.subr.bf16.mxu0 0
        %1871 = vmatpush1.bf16.msra.mxu0 0
        %1872 = vmatprep.subr.bf16.mxu0 0
        %1873 = vmatpush1.bf16.msra.mxu0 0
        %1874 = vmatprep.subr.bf16.mxu0 0
        %1875 = vmatpush1.bf16.msra.mxu0 0
        %1876 = vmatprep.subr.bf16.mxu0 0
        %1877 = vmatpush1.bf16.msra.mxu0 0
        %1878 = vmatprep.subr.bf16.mxu0 0
        %1879 = vmatpush1.bf16.msra.mxu0 0
        %1880 = vmatprep.subr.bf16.mxu0 0
        %1881 = vmatpush1.bf16.msra.mxu0 0
        %1882 = vmatprep.subr.bf16.mxu0 0
        %1883 = vmatpush1.bf16.msra.mxu0 %v1866
        %1884 = vmatprep.subr.bf16.mxu0 0
        %1885 = vmatpush2.bf16.msra.mxu0 0
        %1886 = vmatprep.subr.bf16.mxu0 0
        %1887 = vmatpush2.bf16.msra.mxu0 0
        %1888 = vmatprep.subr.bf16.mxu0 0
        %1889 = vmatpush2.bf16.msra.mxu0 0
        %1890 = vmatprep.subr.bf16.mxu0 0
        %1891 = vmatpush2.bf16.msra.mxu0 0
        %1892 = vmatprep.subr.bf16.mxu0 0
        %1893 = vmatpush2.bf16.msra.mxu0 0
        %1894 = vmatprep.subr.bf16.mxu0 0
        %1895 = vmatpush2.bf16.msra.mxu0 0
        %1896 = vmatprep.subr.bf16.mxu0 0
        %1897 = vmatpush2.bf16.msra.mxu0 0
        %1898 = vmatprep.subr.bf16.mxu0 0
        %1899 = vmatpush2.bf16.msra.mxu0 0
        %1900 = vmatprep.mubr.bf16.mxu0 0
        %1901 = vmatmul.mubr.bf16.gmra.mxu0 %v1863
        %v1902 = vpop.f32.mrf.mxu0
        %v1903 = vadd.f32 0.0, %v1902
        %v1904 = vpop.f32.mrf.mxu0
        %v1905 = vpop.f32.mrf.mxu0
        %v1906 = vpop.f32.mrf.mxu0
        %1907 = vdwg.mxu0
        %1908 = vrot.lane.b32.xlu0 %v1416, 64
        %v1909 = vpop.permute.xlu0 %1908
        %v1911 = vsel %vm1390, %v1859, 0
        %v1914 = vsel %vm1420, %v1909, 0
        %1916 = vmatprep.subr.bf16.mxu0 0
        %1917 = vmatpush1.bf16.msra.mxu0 0
        %1918 = vmatprep.subr.bf16.mxu0 0
        %1919 = vmatpush1.bf16.msra.mxu0 0
        %1920 = vmatprep.subr.bf16.mxu0 0
        %1921 = vmatpush1.bf16.msra.mxu0 0
        %1922 = vmatprep.subr.bf16.mxu0 0
        %1923 = vmatpush1.bf16.msra.mxu0 0
        %1924 = vmatprep.subr.bf16.mxu0 0
        %1925 = vmatpush1.bf16.msra.mxu0 0
        %1926 = vmatprep.subr.bf16.mxu0 0
        %1927 = vmatpush1.bf16.msra.mxu0 0
        %1928 = vmatprep.subr.bf16.mxu0 0
        %1929 = vmatpush1.bf16.msra.mxu0 0
        %1930 = vmatprep.subr.bf16.mxu0 0
        %1931 = vmatpush1.bf16.msra.mxu0 %v1914
        %1932 = vmatprep.subr.bf16.mxu0 0
        %1933 = vmatpush2.bf16.msra.mxu0 0
        %1934 = vmatprep.subr.bf16.mxu0 0
        %1935 = vmatpush2.bf16.msra.mxu0 0
        %1936 = vmatprep.subr.bf16.mxu0 0
        %1937 = vmatpush2.bf16.msra.mxu0 0
        %1938 = vmatprep.subr.bf16.mxu0 0
        %1939 = vmatpush2.bf16.msra.mxu0 0
        %1940 = vmatprep.subr.bf16.mxu0 0
        %1941 = vmatpush2.bf16.msra.mxu0 0
        %1942 = vmatprep.subr.bf16.mxu0 0
        %1943 = vmatpush2.bf16.msra.mxu0 0
        %1944 = vmatprep.subr.bf16.mxu0 0
        %1945 = vmatpush2.bf16.msra.mxu0 0
        %1946 = vmatprep.subr.bf16.mxu0 0
        %1947 = vmatpush2.bf16.msra.mxu0 0
        %1948 = vmatprep.mubr.bf16.mxu0 0
        %1949 = vmatmul.mubr.bf16.gmra.mxu0 %v1911
        %v1950 = vpop.f32.mrf.mxu0
        %v1951 = vadd.f32 0.0, %v1950
        %v1952 = vpop.f32.mrf.mxu0
        %v1953 = vpop.f32.mrf.mxu0
        %v1954 = vpop.f32.mrf.mxu0
        %1955 = vdwg.mxu0
        %1956 = vrot.lane.b32.xlu0 %v1281, 32
        %v1957 = vpop.permute.xlu0 %1956
        %1958 = vrot.lane.b32.xlu0 %v1283, 32
        %v1959 = vpop.permute.xlu0 %1958
        %v1961 = vsel %vm1297, %v1957, 0
        %v1964 = vsel %vm1297, %v1959, 0
        %1966 = vmatprep.subr.bf16.mxu0 0
        %1967 = vmatpush1.bf16.xpose.msra.mxu0 0
        %1968 = vmatprep.subr.bf16.mxu0 0
        %1969 = vmatpush1.bf16.xpose.msra.mxu0 0
        %1970 = vmatprep.subr.bf16.mxu0 0
        %1971 = vmatpush1.bf16.xpose.msra.mxu0 0
        %1972 = vmatprep.subr.bf16.mxu0 0
        %1973 = vmatpush1.bf16.xpose.msra.mxu0 0
        %1974 = vmatprep.subr.bf16.mxu0 0
        %1975 = vmatpush1.bf16.xpose.msra.mxu0 0
        %1976 = vmatprep.subr.bf16.mxu0 0
        %1977 = vmatpush1.bf16.xpose.msra.mxu0 0
        %1978 = vmatprep.subr.bf16.mxu0 0
        %1979 = vmatpush1.bf16.xpose.msra.mxu0 0
        %1980 = vmatprep.subr.bf16.mxu0 0
        %1981 = vmatpush1.bf16.xpose.msra.mxu0 %v1964
        %1982 = vmatprep.subr.bf16.mxu0 0
        %1983 = vmatpush2.bf16.xpose.msra.mxu0 0
        %1984 = vmatprep.subr.bf16.mxu0 0
        %1985 = vmatpush2.bf16.xpose.msra.mxu0 0
        %1986 = vmatprep.subr.bf16.mxu0 0
        %1987 = vmatpush2.bf16.xpose.msra.mxu0 0
        %1988 = vmatprep.subr.bf16.mxu0 0
        %1989 = vmatpush2.bf16.xpose.msra.mxu0 0
        %1990 = vmatprep.subr.bf16.mxu0 0
        %1991 = vmatpush2.bf16.xpose.msra.mxu0 0
        %1992 = vmatprep.subr.bf16.mxu0 0
        %1993 = vmatpush2.bf16.xpose.msra.mxu0 0
        %1994 = vmatprep.subr.bf16.mxu0 0
        %1995 = vmatpush2.bf16.xpose.msra.mxu0 0
        %1996 = vmatprep.subr.bf16.mxu0 0
        %1997 = vmatpush2.bf16.xpose.msra.mxu0 0
        %1998 = vmatprep.mubr.bf16.mxu0 0
        %1999 = vmatmul.mubr.bf16.gmra.mxu0 %v1961
        %v2000 = vpop.f32.mrf.mxu0
        %v2001 = vadd.f32 %v1290, %v2000
        %v2002 = vpop.f32.mrf.mxu0
        %v2003 = vpop.f32.mrf.mxu0
        %v2004 = vpop.f32.mrf.mxu0
        %2005 = vdwg.mxu0
        %2006 = vrot.lane.b32.xlu0 %v1282, 32
        %v2007 = vpop.permute.xlu0 %2006
        %2008 = vrot.lane.b32.xlu0 %v1284, 32
        %v2009 = vpop.permute.xlu0 %2008
        %v2011 = vsel %vm1297, %v2007, 0
        %v2014 = vsel %vm1297, %v2009, 0
        %2016 = vmatprep.subr.bf16.mxu0 0
        %2017 = vmatpush1.bf16.xpose.msra.mxu0 0
        %2018 = vmatprep.subr.bf16.mxu0 0
        %2019 = vmatpush1.bf16.xpose.msra.mxu0 0
        %2020 = vmatprep.subr.bf16.mxu0 0
        %2021 = vmatpush1.bf16.xpose.msra.mxu0 0
        %2022 = vmatprep.subr.bf16.mxu0 0
        %2023 = vmatpush1.bf16.xpose.msra.mxu0 0
        %2024 = vmatprep.subr.bf16.mxu0 0
        %2025 = vmatpush1.bf16.xpose.msra.mxu0 0
        %2026 = vmatprep.subr.bf16.mxu0 0
        %2027 = vmatpush1.bf16.xpose.msra.mxu0 0
        %2028 = vmatprep.subr.bf16.mxu0 0
        %2029 = vmatpush1.bf16.xpose.msra.mxu0 0
        %2030 = vmatprep.subr.bf16.mxu0 0
        %2031 = vmatpush1.bf16.xpose.msra.mxu0 %v2014
        %2032 = vmatprep.subr.bf16.mxu0 0
        %2033 = vmatpush2.bf16.xpose.msra.mxu0 0
        %2034 = vmatprep.subr.bf16.mxu0 0
        %2035 = vmatpush2.bf16.xpose.msra.mxu0 0
        %2036 = vmatprep.subr.bf16.mxu0 0
        %2037 = vmatpush2.bf16.xpose.msra.mxu0 0
        %2038 = vmatprep.subr.bf16.mxu0 0
        %2039 = vmatpush2.bf16.xpose.msra.mxu0 0
        %2040 = vmatprep.subr.bf16.mxu0 0
        %2041 = vmatpush2.bf16.xpose.msra.mxu0 0
        %2042 = vmatprep.subr.bf16.mxu0 0
        %2043 = vmatpush2.bf16.xpose.msra.mxu0 0
        %2044 = vmatprep.subr.bf16.mxu0 0
        %2045 = vmatpush2.bf16.xpose.msra.mxu0 0
        %2046 = vmatprep.subr.bf16.mxu0 0
        %2047 = vmatpush2.bf16.xpose.msra.mxu0 0
        %2048 = vmatprep.mubr.bf16.mxu0 0
        %2049 = vmatmul.mubr.bf16.gmra.mxu0 %v2011
        %v2050 = vpop.f32.mrf.mxu0
        %v2051 = vadd.f32 %v1294, %v2050
        %v2052 = vpop.f32.mrf.mxu0
        %v2053 = vpop.f32.mrf.mxu0
        %v2054 = vpop.f32.mrf.mxu0
        %2055 = vdwg.mxu0
        %v2056 = vsel %vm1390, %v2001, -inf
        %2057 = vmax.xlane.f32.xlu0 %v2056
        %v2058 = vpop.xlane.xlu0 %2057
        %v2059 = vsel %vm1390, %v2051, -inf
        %2060 = vmax.xlane.f32.xlu0 %v2059
        %v2061 = vpop.xlane.xlu0 %2060
        %v2062 = vsub.f32 %v2001, %v2058
        %v2063 = vsub.f32 %v2051, %v2061
        %v2064 = vmul.f32 %v2062, 1.442695
        %v2065 = vpow.pop %v2064
        %v2066 = vmul.f32 %v2063, 1.442695
        %v2067 = vpow.pop %v2066
        %v2068 = vsel %vm1390, %v2065, 0.0
        %2069 = vadd.xlane.f32.xlu0 %v2068
        %v2070 = vpop.xlane.xlu0 %2069
        %v2071 = vsel %vm1390, %v2067, 0.0
        %2072 = vadd.xlane.f32.xlu0 %v2071
        %v2073 = vpop.xlane.xlu0 %2072
        %v2074 = vrcp.pop %v2070
        %v2075 = vrcp.pop %v2073
        %v2076 = vmul.f32 %v2065, %v2074
        %v2077 = vmul.f32 %v2067, %v2075
        %v2078 = vpack.c.bf16 %v2076, %v2076
        %v2079 = vpack.c.bf16 %v2077, %v2077
        %2080 = vrot.lane.b32.xlu0 %v1415, 32
        %v2081 = vpop.permute.xlu0 %2080
        %v2083 = vsel %vm1390, %v2078, 0
        %v2086 = vsel %vm1420, %v2081, 0
        %2088 = vmatprep.subr.bf16.mxu0 0
        %2089 = vmatpush1.bf16.msra.mxu0 0
        %2090 = vmatprep.subr.bf16.mxu0 0
        %2091 = vmatpush1.bf16.msra.mxu0 0
        %2092 = vmatprep.subr.bf16.mxu0 0
        %2093 = vmatpush1.bf16.msra.mxu0 0
        %2094 = vmatprep.subr.bf16.mxu0 0
        %2095 = vmatpush1.bf16.msra.mxu0 0
        %2096 = vmatprep.subr.bf16.mxu0 0
        %2097 = vmatpush1.bf16.msra.mxu0 0
        %2098 = vmatprep.subr.bf16.mxu0 0
        %2099 = vmatpush1.bf16.msra.mxu0 0
        %2100 = vmatprep.subr.bf16.mxu0 0
        %2101 = vmatpush1.bf16.msra.mxu0 0
        %2102 = vmatprep.subr.bf16.mxu0 0
        %2103 = vmatpush1.bf16.msra.mxu0 %v2086
        %2104 = vmatprep.subr.bf16.mxu0 0
        %2105 = vmatpush2.bf16.msra.mxu0 0
        %2106 = vmatprep.subr.bf16.mxu0 0
        %2107 = vmatpush2.bf16.msra.mxu0 0
        %2108 = vmatprep.subr.bf16.mxu0 0
        %2109 = vmatpush2.bf16.msra.mxu0 0
        %2110 = vmatprep.subr.bf16.mxu0 0
        %2111 = vmatpush2.bf16.msra.mxu0 0
        %2112 = vmatprep.subr.bf16.mxu0 0
        %2113 = vmatpush2.bf16.msra.mxu0 0
        %2114 = vmatprep.subr.bf16.mxu0 0
        %2115 = vmatpush2.bf16.msra.mxu0 0
        %2116 = vmatprep.subr.bf16.mxu0 0
        %2117 = vmatpush2.bf16.msra.mxu0 0
        %2118 = vmatprep.subr.bf16.mxu0 0
        %2119 = vmatpush2.bf16.msra.mxu0 0
        %2120 = vmatprep.mubr.bf16.mxu0 0
        %2121 = vmatmul.mubr.bf16.gmra.mxu0 %v2083
        %v2122 = vpop.f32.mrf.mxu0
        %v2123 = vadd.f32 0.0, %v2122
        %v2124 = vpop.f32.mrf.mxu0
        %v2125 = vpop.f32.mrf.mxu0
        %v2126 = vpop.f32.mrf.mxu0
        %2127 = vdwg.mxu0
        %2128 = vrot.lane.b32.xlu0 %v1416, 32
        %v2129 = vpop.permute.xlu0 %2128
        %v2131 = vsel %vm1390, %v2079, 0
        %v2134 = vsel %vm1420, %v2129, 0
        %2136 = vmatprep.subr.bf16.mxu0 0
        %2137 = vmatpush1.bf16.msra.mxu0 0
        %2138 = vmatprep.subr.bf16.mxu0 0
        %2139 = vmatpush1.bf16.msra.mxu0 0
        %2140 = vmatprep.subr.bf16.mxu0 0
        %2141 = vmatpush1.bf16.msra.mxu0 0
        %2142 = vmatprep.subr.bf16.mxu0 0
        %2143 = vmatpush1.bf16.msra.mxu0 0
        %2144 = vmatprep.subr.bf16.mxu0 0
        %2145 = vmatpush1.bf16.msra.mxu0 0
        %2146 = vmatprep.subr.bf16.mxu0 0
        %2147 = vmatpush1.bf16.msra.mxu0 0
        %2148 = vmatprep.subr.bf16.mxu0 0
        %2149 = vmatpush1.bf16.msra.mxu0 0
        %2150 = vmatprep.subr.bf16.mxu0 0
        %2151 = vmatpush1.bf16.msra.mxu0 %v2134
        %2152 = vmatprep.subr.bf16.mxu0 0
        %2153 = vmatpush2.bf16.msra.mxu0 0
        %2154 = vmatprep.subr.bf16.mxu0 0
        %2155 = vmatpush2.bf16.msra.mxu0 0
        %2156 = vmatprep.subr.bf16.mxu0 0
        %2157 = vmatpush2.bf16.msra.mxu0 0
        %2158 = vmatprep.subr.bf16.mxu0 0
        %2159 = vmatpush2.bf16.msra.mxu0 0
        %2160 = vmatprep.subr.bf16.mxu0 0
        %2161 = vmatpush2.bf16.msra.mxu0 0
        %2162 = vmatprep.subr.bf16.mxu0 0
        %2163 = vmatpush2.bf16.msra.mxu0 0
        %2164 = vmatprep.subr.bf16.mxu0 0
        %2165 = vmatpush2.bf16.msra.mxu0 0
        %2166 = vmatprep.subr.bf16.mxu0 0
        %2167 = vmatpush2.bf16.msra.mxu0 0
        %2168 = vmatprep.mubr.bf16.mxu0 0
        %2169 = vmatmul.mubr.bf16.gmra.mxu0 %v2131
        %v2170 = vpop.f32.mrf.mxu0
        %v2171 = vadd.f32 0.0, %v2170
        %v2172 = vpop.f32.mrf.mxu0
        %v2173 = vpop.f32.mrf.mxu0
        %v2174 = vpop.f32.mrf.mxu0
        %2175 = vdwg.mxu0
        %2178 = vrot.lane.b32.xlu0 %v1682, 32
        %v2179 = vpop.permute.xlu0 %2178
        %2180 = vrot.lane.b32.xlu0 %v1731, 32
        %v2181 = vpop.permute.xlu0 %2180
        %2186 = vrot.lane.b32.xlu0 %v1903, 64
        %v2187 = vpop.permute.xlu0 %2186
        %2188 = vrot.lane.b32.xlu0 %v1951, 64
        %v2189 = vpop.permute.xlu0 %2188
        %2194 = vrot.lane.b32.xlu0 %v2123, 96
        %v2195 = vpop.permute.xlu0 %2194
        %2196 = vrot.lane.b32.xlu0 %v2171, 96
        %v2197 = vpop.permute.xlu0 %2196
        %v2200 = vsel %vm1297, %v1459, %v2179
        %v2201 = vsel %vm1297, %v1505, %v2181
        %vm2202 = vcmask 523264
        %v2203 = vsel %vm2202, %v2200, %v2187
        %v2204 = vsel %vm2202, %v2201, %v2189
        %vm2205 = vcmask 785408
        %v2206 = vsel %vm2205, %v2203, %v2195
        %v2207 = vsel %vm2205, %v2204, %v2197
        %v2208 = vpack.c.bf16 %v2207, %v2206
        %v2209 = vld [vmem:[%s814] sm:$0xf]
        %v2210 = vld [vmem:[%s814 + $0x4] sm:$0xf]
        %v2211 = vld [vmem:[%s814 + $0x8] sm:$0xf]
        %v2212 = vld [vmem:[%s814 + $0xc] sm:$0xf]
        %v2213 = vld [vmem:[%s814 + $0x10] sm:$0xf]
        %v2214 = vld [vmem:[%s814 + $0x14] sm:$0xf]
        %v2215 = vld [vmem:[%s814 + $0x18] sm:$0xf]
        %v2216 = vld [vmem:[%s814 + $0x1c] sm:$0xf]
        %v2217 = vld [vmem:[%s814 + $0x20] sm:$0xf]
        %v2218 = vld [vmem:[%s814 + $0x24] sm:$0xf]
        %v2219 = vld [vmem:[%s814 + $0x28] sm:$0xf]
        %v2220 = vld [vmem:[%s814 + $0x2c] sm:$0xf]
        %v2221 = vld [vmem:[%s814 + $0x30] sm:$0xf]
        %v2222 = vld [vmem:[%s814 + $0x34] sm:$0xf]
        %v2223 = vld [vmem:[%s814 + $0x38] sm:$0xf]
        %v2224 = vld [vmem:[%s814 + $0x3c] sm:$0xf]
        %v2225 = vld [vmem:[%s944] sm:$0x1]
        %v2227 = vlaneseq
        %v2228 = vshrl.u32 %v2227, 7
        %v2229 = vsub.s32 0, %v2228
        %v2230 = vrot.slane %v2225, %v2229
        %v2248 = vunpack.c.l.b16 %v2209
        %v2249 = vunpack.c.l.b16 %v2210
        %v2250 = vunpack.c.l.b16 %v2211
        %v2251 = vunpack.c.l.b16 %v2212
        %v2252 = vunpack.c.l.b16 %v2213
        %v2253 = vunpack.c.l.b16 %v2214
        %v2254 = vunpack.c.l.b16 %v2215
        %v2255 = vunpack.c.l.b16 %v2216
        %v2256 = vunpack.c.l.b16 %v2217
        %v2257 = vunpack.c.l.b16 %v2218
        %v2258 = vunpack.c.l.b16 %v2219
        %v2259 = vunpack.c.l.b16 %v2220
        %v2260 = vunpack.c.l.b16 %v2221
        %v2261 = vunpack.c.l.b16 %v2222
        %v2262 = vunpack.c.l.b16 %v2223
        %v2263 = vunpack.c.l.b16 %v2224
        %v2264 = vpack.c.b16 %v2249, %v2248
        %v2265 = vpack.c.b16 %v2251, %v2250
        %v2266 = vpack.c.b16 %v2253, %v2252
        %v2267 = vpack.c.b16 %v2255, %v2254
        %v2268 = vpack.c.b16 %v2257, %v2256
        %v2269 = vpack.c.b16 %v2259, %v2258
        %v2270 = vpack.c.b16 %v2261, %v2260
        %v2271 = vpack.c.b16 %v2263, %v2262
        %2280 = vmatprep.subr.bf16.mxu0 0
        %2281 = vmatpush1.bf16.msra.mxu0 %v2271
        %2282 = vmatprep.subr.bf16.mxu0 0
        %2283 = vmatpush1.bf16.msra.mxu0 %v2270
        %2284 = vmatprep.subr.bf16.mxu0 0
        %2285 = vmatpush1.bf16.msra.mxu0 %v2269
        %2286 = vmatprep.subr.bf16.mxu0 0
        %2287 = vmatpush1.bf16.msra.mxu0 %v2268
        %2288 = vmatprep.subr.bf16.mxu0 0
        %2289 = vmatpush1.bf16.msra.mxu0 %v2267
        %2290 = vmatprep.subr.bf16.mxu0 0
        %2291 = vmatpush1.bf16.msra.mxu0 %v2266
        %2292 = vmatprep.subr.bf16.mxu0 0
        %2293 = vmatpush1.bf16.msra.mxu0 %v2265
        %2294 = vmatprep.subr.bf16.mxu0 0
        %2295 = vmatpush1.bf16.msra.mxu0 %v2264
        %2296 = vmatprep.subr.bf16.mxu0 0
        %2297 = vmatpush2.bf16.msra.mxu0 0
        %2298 = vmatprep.subr.bf16.mxu0 0
        %2299 = vmatpush2.bf16.msra.mxu0 0
        %2300 = vmatprep.subr.bf16.mxu0 0
        %2301 = vmatpush2.bf16.msra.mxu0 0
        %2302 = vmatprep.subr.bf16.mxu0 0
        %2303 = vmatpush2.bf16.msra.mxu0 0
        %2304 = vmatprep.subr.bf16.mxu0 0
        %2305 = vmatpush2.bf16.msra.mxu0 0
        %2306 = vmatprep.subr.bf16.mxu0 0
        %2307 = vmatpush2.bf16.msra.mxu0 0
        %2308 = vmatprep.subr.bf16.mxu0 0
        %2309 = vmatpush2.bf16.msra.mxu0 0
        %2310 = vmatprep.subr.bf16.mxu0 0
        %2311 = vmatpush2.bf16.msra.mxu0 0
        %2312 = vmatprep.mubr.bf16.mxu0 0
        %2313 = vmatmul.mubr.bf16.gmra.mxu0 %v2208
        %v2314 = vpop.f32.mrf.mxu0
        %v2315 = vadd.f32 %v2230, %v2314
        %v2316 = vpop.f32.mrf.mxu0
        %v2317 = vpop.f32.mrf.mxu0
        %v2318 = vadd.f32 %v2230, %v2317
        %v2319 = vpop.f32.mrf.mxu0
        %2320 = vdwg.mxu0
        %v2321 = vadd.f32 %v1015, %v2315
        %v2322 = vadd.f32 %v1016, %v2318
        %v2323 = vld [vmem:[%s947] sm:$0x1]
        %v2324 = vld [vmem:[%s950] sm:$0x1]
        %2325 = vadd.xlane.f32.xlu0 %v2321
        %v2326 = vpop.xlane.xlu0 %2325
        %2327 = vadd.xlane.f32.xlu0 %v2322
        %v2328 = vpop.xlane.xlu0 %2327
        %v2329 = vrcp.pop 128.0
        %v2330 = vmul.f32 %v2326, %v2329
        %v2331 = vmul.f32 %v2328, %v2329
        %v2332 = vsub.f32 %v2321, %v2330
        %v2333 = vsub.f32 %v2322, %v2331
        %v2334 = vmul.f32 %v2332, %v2332
        %v2335 = vmul.f32 %v2333, %v2333
        %2336 = vadd.xlane.f32.xlu0 %v2334
        %v2337 = vpop.xlane.xlu0 %2336
        %2338 = vadd.xlane.f32.xlu0 %v2335
        %v2339 = vpop.xlane.xlu0 %2338
        %v2340 = vmul.f32 %v2337, %v2329
        %v2341 = vmul.f32 %v2339, %v2329
        %v2342 = vadd.f32 %v2340, 1e-05
        %v2343 = vadd.f32 %v2341, 1e-05
        %v2344 = vrsqrt.pop %v2342
        %v2345 = vrsqrt.pop %v2343
        %v2346 = vmul.f32 %v2332, %v2344
        %v2347 = vmul.f32 %v2333, %v2345
        %v2349 = vlaneseq
        %v2350 = vshrl.u32 %v2349, 7
        %v2351 = vsub.s32 0, %v2350
        %v2352 = vrot.slane %v2323, %v2351
        %v2354 = vmul.f32 %v2346, %v2352
        %v2355 = vmul.f32 %v2347, %v2352
        %v2357 = vlaneseq
        %v2358 = vshrl.u32 %v2357, 7
        %v2359 = vsub.s32 0, %v2358
        %v2360 = vrot.slane %v2324, %v2359
        %v2362 = vadd.f32 %v2354, %v2360
        %v2363 = vadd.f32 %v2355, %v2360
        %v2364 = vpack.c.bf16 %v2363, %v2362
        %v2365 = vld [vmem:[%s823] sm:$0xff]
        %v2366 = vld [vmem:[%s823 + $0x8] sm:$0xff]
        %v2367 = vld [vmem:[%s823 + $0x10] sm:$0xff]
        %v2368 = vld [vmem:[%s823 + $0x18] sm:$0xff]
        %v2369 = vld [vmem:[%s823 + $0x20] sm:$0xff]
        %v2370 = vld [vmem:[%s823 + $0x28] sm:$0xff]
        %v2371 = vld [vmem:[%s823 + $0x30] sm:$0xff]
        %v2372 = vld [vmem:[%s823 + $0x38] sm:$0xff]
        %v2373 = vld [vmem:[%s823 + $0x40] sm:$0xff]
        %v2374 = vld [vmem:[%s823 + $0x48] sm:$0xff]
        %v2375 = vld [vmem:[%s823 + $0x50] sm:$0xff]
        %v2376 = vld [vmem:[%s823 + $0x58] sm:$0xff]
        %v2377 = vld [vmem:[%s823 + $0x60] sm:$0xff]
        %v2378 = vld [vmem:[%s823 + $0x68] sm:$0xff]
        %v2379 = vld [vmem:[%s823 + $0x70] sm:$0xff]
        %v2380 = vld [vmem:[%s823 + $0x78] sm:$0xff]
        %v2381 = vld [vmem:[%s954] sm:$0x3]
        %v2383 = vlaneseq
        %v2384 = vshrl.u32 %v2383, 7
        %v2385 = vsub.s32 0, %v2384
        %v2386 = vrot.slane %v2381, %v2385
        %v2387 = vlaneseq
        %v2388 = vshrl.u32 %v2387, 7
        %v2389 = vsub.s32 1, %v2388
        %v2390 = vrot.slane %v2381, %v2389
        %v2409 = vunpack.c.l.b16 %v2365
        %v2410 = vunpack.c.h.b16 %v2365
        %v2411 = vunpack.c.l.b16 %v2366
        %v2412 = vunpack.c.h.b16 %v2366
        %v2413 = vunpack.c.l.b16 %v2367
        %v2414 = vunpack.c.h.b16 %v2367
        %v2415 = vunpack.c.l.b16 %v2368
        %v2416 = vunpack.c.h.b16 %v2368
        %v2417 = vunpack.c.l.b16 %v2369
        %v2418 = vunpack.c.h.b16 %v2369
        %v2419 = vunpack.c.l.b16 %v2370
        %v2420 = vunpack.c.h.b16 %v2370
        %v2421 = vunpack.c.l.b16 %v2371
        %v2422 = vunpack.c.h.b16 %v2371
        %v2423 = vunpack.c.l.b16 %v2372
        %v2424 = vunpack.c.h.b16 %v2372
        %v2425 = vunpack.c.l.b16 %v2373
        %v2426 = vunpack.c.h.b16 %v2373
        %v2427 = vunpack.c.l.b16 %v2374
        %v2428 = vunpack.c.h.b16 %v2374
        %v2429 = vunpack.c.l.b16 %v2375
        %v2430 = vunpack.c.h.b16 %v2375
        %v2431 = vunpack.c.l.b16 %v2376
        %v2432 = vunpack.c.h.b16 %v2376
        %v2433 = vunpack.c.l.b16 %v2377
        %v2434 = vunpack.c.h.b16 %v2377
        %v2435 = vunpack.c.l.b16 %v2378
        %v2436 = vunpack.c.h.b16 %v2378
        %v2437 = vunpack.c.l.b16 %v2379
        %v2438 = vunpack.c.h.b16 %v2379
        %v2439 = vunpack.c.l.b16 %v2380
        %v2440 = vunpack.c.h.b16 %v2380
        %v2441 = vpack.c.b16 %v2411, %v2409
        %v2442 = vpack.c.b16 %v2412, %v2410
        %v2443 = vpack.c.b16 %v2415, %v2413
        %v2444 = vpack.c.b16 %v2416, %v2414
        %v2445 = vpack.c.b16 %v2419, %v2417
        %v2446 = vpack.c.b16 %v2420, %v2418
        %v2447 = vpack.c.b16 %v2423, %v2421
        %v2448 = vpack.c.b16 %v2424, %v2422
        %v2449 = vpack.c.b16 %v2427, %v2425
        %v2450 = vpack.c.b16 %v2428, %v2426
        %v2451 = vpack.c.b16 %v2431, %v2429
        %v2452 = vpack.c.b16 %v2432, %v2430
        %v2453 = vpack.c.b16 %v2435, %v2433
        %v2454 = vpack.c.b16 %v2436, %v2434
        %v2455 = vpack.c.b16 %v2439, %v2437
        %v2456 = vpack.c.b16 %v2440, %v2438
        %2473 = vmatprep.subr.bf16.mxu0 %v2456
        %2474 = vmatpush1.bf16.msra.mxu0 %v2455
        %2475 = vmatprep.subr.bf16.mxu0 %v2454
        %2476 = vmatpush1.bf16.msra.mxu0 %v2453
        %2477 = vmatprep.subr.bf16.mxu0 %v2452
        %2478 = vmatpush1.bf16.msra.mxu0 %v2451
        %2479 = vmatprep.subr.bf16.mxu0 %v2450
        %2480 = vmatpush1.bf16.msra.mxu0 %v2449
        %2481 = vmatprep.subr.bf16.mxu0 %v2448
        %2482 = vmatpush1.bf16.msra.mxu0 %v2447
        %2483 = vmatprep.subr.bf16.mxu0 %v2446
        %2484 = vmatpush1.bf16.msra.mxu0 %v2445
        %2485 = vmatprep.subr.bf16.mxu0 %v2444
        %2486 = vmatpush1.bf16.msra.mxu0 %v2443
        %2487 = vmatprep.subr.bf16.mxu0 %v2442
        %2488 = vmatpush1.bf16.msra.mxu0 %v2441
        %2489 = vmatprep.subr.bf16.mxu0 0
        %2490 = vmatpush2.bf16.msra.mxu0 0
        %2491 = vmatprep.subr.bf16.mxu0 0
        %2492 = vmatpush2.bf16.msra.mxu0 0
        %2493 = vmatprep.subr.bf16.mxu0 0
        %2494 = vmatpush2.bf16.msra.mxu0 0
        %2495 = vmatprep.subr.bf16.mxu0 0
        %2496 = vmatpush2.bf16.msra.mxu0 0
        %2497 = vmatprep.subr.bf16.mxu0 0
        %2498 = vmatpush2.bf16.msra.mxu0 0
        %2499 = vmatprep.subr.bf16.mxu0 0
        %2500 = vmatpush2.bf16.msra.mxu0 0
        %2501 = vmatprep.subr.bf16.mxu0 0
        %2502 = vmatpush2.bf16.msra.mxu0 0
        %2503 = vmatprep.subr.bf16.mxu0 0
        %2504 = vmatpush2.bf16.msra.mxu0 0
        %2505 = vmatprep.mubr.bf16.mxu0 0
        %2506 = vmatmul.mubr.bf16.gmra.mxu0 %v2364
        %v2507 = vpop.f32.mrf.mxu0
        %v2508 = vadd.f32 %v2386, %v2507
        %v2509 = vpop.f32.mrf.mxu0
        %v2510 = vadd.f32 %v2390, %v2509
        %v2511 = vpop.f32.mrf.mxu0
        %v2512 = vadd.f32 %v2386, %v2511
        %v2513 = vpop.f32.mrf.mxu0
        %v2514 = vadd.f32 %v2390, %v2513
        %2515 = vdwg.mxu0
        %v2516 = vmax.f32 %v2508, 0.0
        %v2517 = vmax.f32 %v2510, 0.0
        %v2518 = vmax.f32 %v2512, 0.0
        %v2519 = vmax.f32 %v2514, 0.0
        %v2520 = vpack.c.bf16 %v2518, %v2516
        %v2521 = vpack.c.bf16 %v2519, %v2517
        %v2522 = vld [vmem:[%s832] sm:$0xf]
        %v2523 = vld [vmem:[%s832 + $0x4] sm:$0xf]
        %v2524 = vld [vmem:[%s832 + $0x8] sm:$0xf]
        %v2525 = vld [vmem:[%s832 + $0xc] sm:$0xf]
        %v2526 = vld [vmem:[%s832 + $0x10] sm:$0xf]
        %v2527 = vld [vmem:[%s832 + $0x14] sm:$0xf]
        %v2528 = vld [vmem:[%s832 + $0x18] sm:$0xf]
        %v2529 = vld [vmem:[%s832 + $0x1c] sm:$0xf]
        %v2530 = vld [vmem:[%s832 + $0x20] sm:$0xf]
        %v2531 = vld [vmem:[%s832 + $0x24] sm:$0xf]
        %v2532 = vld [vmem:[%s832 + $0x28] sm:$0xf]
        %v2533 = vld [vmem:[%s832 + $0x2c] sm:$0xf]
        %v2534 = vld [vmem:[%s832 + $0x30] sm:$0xf]
        %v2535 = vld [vmem:[%s832 + $0x34] sm:$0xf]
        %v2536 = vld [vmem:[%s832 + $0x38] sm:$0xf]
        %v2537 = vld [vmem:[%s832 + $0x3c] sm:$0xf]
        %v2538 = vld [vmem:[%s832 + $0x40] sm:$0xf]
        %v2539 = vld [vmem:[%s832 + $0x44] sm:$0xf]
        %v2540 = vld [vmem:[%s832 + $0x48] sm:$0xf]
        %v2541 = vld [vmem:[%s832 + $0x4c] sm:$0xf]
        %v2542 = vld [vmem:[%s832 + $0x50] sm:$0xf]
        %v2543 = vld [vmem:[%s832 + $0x54] sm:$0xf]
        %v2544 = vld [vmem:[%s832 + $0x58] sm:$0xf]
        %v2545 = vld [vmem:[%s832 + $0x5c] sm:$0xf]
        %v2546 = vld [vmem:[%s832 + $0x60] sm:$0xf]
        %v2547 = vld [vmem:[%s832 + $0x64] sm:$0xf]
        %v2548 = vld [vmem:[%s832 + $0x68] sm:$0xf]
        %v2549 = vld [vmem:[%s832 + $0x6c] sm:$0xf]
        %v2550 = vld [vmem:[%s832 + $0x70] sm:$0xf]
        %v2551 = vld [vmem:[%s832 + $0x74] sm:$0xf]
        %v2552 = vld [vmem:[%s832 + $0x78] sm:$0xf]
        %v2553 = vld [vmem:[%s832 + $0x7c] sm:$0xf]
        %v2554 = vld [vmem:[%s957] sm:$0x1]
        %v2556 = vlaneseq
        %v2557 = vshrl.u32 %v2556, 7
        %v2558 = vsub.s32 0, %v2557
        %v2559 = vrot.slane %v2554, %v2558
        %v2593 = vunpack.c.l.b16 %v2522
        %v2594 = vunpack.c.l.b16 %v2523
        %v2595 = vunpack.c.l.b16 %v2524
        %v2596 = vunpack.c.l.b16 %v2525
        %v2597 = vunpack.c.l.b16 %v2526
        %v2598 = vunpack.c.l.b16 %v2527
        %v2599 = vunpack.c.l.b16 %v2528
        %v2600 = vunpack.c.l.b16 %v2529
        %v2601 = vunpack.c.l.b16 %v2530
        %v2602 = vunpack.c.l.b16 %v2531
        %v2603 = vunpack.c.l.b16 %v2532
        %v2604 = vunpack.c.l.b16 %v2533
        %v2605 = vunpack.c.l.b16 %v2534
        %v2606 = vunpack.c.l.b16 %v2535
        %v2607 = vunpack.c.l.b16 %v2536
        %v2608 = vunpack.c.l.b16 %v2537
        %v2609 = vunpack.c.l.b16 %v2538
        %v2610 = vunpack.c.l.b16 %v2539
        %v2611 = vunpack.c.l.b16 %v2540
        %v2612 = vunpack.c.l.b16 %v2541
        %v2613 = vunpack.c.l.b16 %v2542
        %v2614 = vunpack.c.l.b16 %v2543
        %v2615 = vunpack.c.l.b16 %v2544
        %v2616 = vunpack.c.l.b16 %v2545
        %v2617 = vunpack.c.l.b16 %v2546
        %v2618 = vunpack.c.l.b16 %v2547
        %v2619 = vunpack.c.l.b16 %v2548
        %v2620 = vunpack.c.l.b16 %v2549
        %v2621 = vunpack.c.l.b16 %v2550
        %v2622 = vunpack.c.l.b16 %v2551
        %v2623 = vunpack.c.l.b16 %v2552
        %v2624 = vunpack.c.l.b16 %v2553
        %v2625 = vpack.c.b16 %v2594, %v2593
        %v2626 = vpack.c.b16 %v2596, %v2595
        %v2627 = vpack.c.b16 %v2598, %v2597
        %v2628 = vpack.c.b16 %v2600, %v2599
        %v2629 = vpack.c.b16 %v2602, %v2601
        %v2630 = vpack.c.b16 %v2604, %v2603
        %v2631 = vpack.c.b16 %v2606, %v2605
        %v2632 = vpack.c.b16 %v2608, %v2607
        %v2633 = vpack.c.b16 %v2610, %v2609
        %v2634 = vpack.c.b16 %v2612, %v2611
        %v2635 = vpack.c.b16 %v2614, %v2613
        %v2636 = vpack.c.b16 %v2616, %v2615
        %v2637 = vpack.c.b16 %v2618, %v2617
        %v2638 = vpack.c.b16 %v2620, %v2619
        %v2639 = vpack.c.b16 %v2622, %v2621
        %v2640 = vpack.c.b16 %v2624, %v2623
        %2657 = vmatprep.subr.bf16.mxu0 0
        %2658 = vmatpush1.bf16.msra.mxu0 %v2632
        %2659 = vmatprep.subr.bf16.mxu0 0
        %2660 = vmatpush1.bf16.msra.mxu0 %v2631
        %2661 = vmatprep.subr.bf16.mxu0 0
        %2662 = vmatpush1.bf16.msra.mxu0 %v2630
        %2663 = vmatprep.subr.bf16.mxu0 0
        %2664 = vmatpush1.bf16.msra.mxu0 %v2629
        %2665 = vmatprep.subr.bf16.mxu0 0
        %2666 = vmatpush1.bf16.msra.mxu0 %v2628
        %2667 = vmatprep.subr.bf16.mxu0 0
        %2668 = vmatpush1.bf16.msra.mxu0 %v2627
        %2669 = vmatprep.subr.bf16.mxu0 0
        %2670 = vmatpush1.bf16.msra.mxu0 %v2626
        %2671 = vmatprep.subr.bf16.mxu0 0
        %2672 = vmatpush1.bf16.msra.mxu0 %v2625
        %2673 = vmatprep.subr.bf16.mxu0 0
        %2674 = vmatpush2.bf16.msra.mxu0 %v2640
        %2675 = vmatprep.subr.bf16.mxu0 0
        %2676 = vmatpush2.bf16.msra.mxu0 %v2639
        %2677 = vmatprep.subr.bf16.mxu0 0
        %2678 = vmatpush2.bf16.msra.mxu0 %v2638
        %2679 = vmatprep.subr.bf16.mxu0 0
        %2680 = vmatpush2.bf16.msra.mxu0 %v2637
        %2681 = vmatprep.subr.bf16.mxu0 0
        %2682 = vmatpush2.bf16.msra.mxu0 %v2636
        %2683 = vmatprep.subr.bf16.mxu0 0
        %2684 = vmatpush2.bf16.msra.mxu0 %v2635
        %2685 = vmatprep.subr.bf16.mxu0 0
        %2686 = vmatpush2.bf16.msra.mxu0 %v2634
        %2687 = vmatprep.subr.bf16.mxu0 0
        %2688 = vmatpush2.bf16.msra.mxu0 %v2633
        %2689 = vmatprep.mubr.bf16.mxu0 %v2521
        %2690 = vmatmul.mubr.bf16.gmra.mxu0 %v2520
        %v2691 = vpop.f32.mrf.mxu0
        %v2692 = vadd.f32 %v2559, %v2691
        %v2693 = vpop.f32.mrf.mxu0
        %v2694 = vpop.f32.mrf.mxu0
        %v2695 = vadd.f32 %v2559, %v2694
        %v2696 = vpop.f32.mrf.mxu0
        %2697 = vdwg.mxu0
        %v2698 = vadd.f32 %v2362, %v2692
        %v2699 = vadd.f32 %v2363, %v2695
        %v2700 = vld [vmem:[%s960] sm:$0x1]
        %v2701 = vld [vmem:[%s963] sm:$0x1]
        %2702 = vadd.xlane.f32.xlu0 %v2698
        %v2703 = vpop.xlane.xlu0 %2702
        %2704 = vadd.xlane.f32.xlu0 %v2699
        %v2705 = vpop.xlane.xlu0 %2704
        %v2706 = vmul.f32 %v2703, %v2329
        %v2707 = vmul.f32 %v2705, %v2329
        %v2708 = vsub.f32 %v2698, %v2706
        %v2709 = vsub.f32 %v2699, %v2707
        %v2710 = vmul.f32 %v2708, %v2708
        %v2711 = vmul.f32 %v2709, %v2709
        %2712 = vadd.xlane.f32.xlu0 %v2710
        %v2713 = vpop.xlane.xlu0 %2712
        %2714 = vadd.xlane.f32.xlu0 %v2711
        %v2715 = vpop.xlane.xlu0 %2714
        %v2716 = vmul.f32 %v2713, %v2329
        %v2717 = vmul.f32 %v2715, %v2329
        %v2718 = vadd.f32 %v2716, 1e-05
        %v2719 = vadd.f32 %v2717, 1e-05
        %v2720 = vrsqrt.pop %v2718
        %v2721 = vrsqrt.pop %v2719
        %v2722 = vmul.f32 %v2708, %v2720
        %v2723 = vmul.f32 %v2709, %v2721
        %v2725 = vlaneseq
        %v2726 = vshrl.u32 %v2725, 7
        %v2727 = vsub.s32 0, %v2726
        %v2728 = vrot.slane %v2700, %v2727
        %v2730 = vmul.f32 %v2722, %v2728
        %v2731 = vmul.f32 %v2723, %v2728
        %v2733 = vlaneseq
        %v2734 = vshrl.u32 %v2733, 7
        %v2735 = vsub.s32 0, %v2734
        %v2736 = vrot.slane %v2701, %v2735
        %v2738 = vadd.f32 %v2730, %v2736
        %v2739 = vadd.f32 %v2731, %v2736
        %2740 = vst [vmem:[#allocation2] sm:$0xff] %v2738
        %2741 = vst [vmem:[#allocation2 + $0x8] sm:$0xff] %v2739
        %p2742 = scmp.eq.s32.totalorder %s45, 1
        // Predicated region
        $region137: #{tpu_custom_call.1} parent=91 // pred_check
          %p2743 = pneg %p2742
        $region138: #{tpu_custom_call.1} parent=91 // pred_check_branch
          %2745 = sbr.rel (%p2743) target = $region140
        $region139: #{tpu_custom_call.1} parent=91 // pred_region
          %v2746 = vld [vmem:[#allocation11] sm:$0x1]
          %v2747 = vld [vmem:[#allocation12] sm:$0x1]
          %2748 = vadd.xlane.f32.xlu0 %v2738
          %v2749 = vpop.xlane.xlu0 %2748
          %2750 = vadd.xlane.f32.xlu0 %v2739
          %v2751 = vpop.xlane.xlu0 %2750
          %v2752 = vmul.f32 %v2749, %v2329
          %v2753 = vmul.f32 %v2751, %v2329
          %v2754 = vsub.f32 %v2738, %v2752
          %v2755 = vsub.f32 %v2739, %v2753
          %v2756 = vmul.f32 %v2754, %v2754
          %v2757 = vmul.f32 %v2755, %v2755
          %2758 = vadd.xlane.f32.xlu0 %v2756
          %v2759 = vpop.xlane.xlu0 %2758
          %2760 = vadd.xlane.f32.xlu0 %v2757
          %v2761 = vpop.xlane.xlu0 %2760
          %v2762 = vmul.f32 %v2759, %v2329
          %v2763 = vmul.f32 %v2761, %v2329
          %v2764 = vadd.f32 %v2762, 1e-05
          %v2765 = vadd.f32 %v2763, 1e-05
          %v2766 = vrsqrt.pop %v2764
          %v2767 = vrsqrt.pop %v2765
          %v2768 = vmul.f32 %v2754, %v2766
          %v2769 = vmul.f32 %v2755, %v2767
          %v2771 = vlaneseq
          %v2772 = vshrl.u32 %v2771, 7
          %v2773 = vsub.s32 0, %v2772
          %v2774 = vrot.slane %v2746, %v2773
          %v2776 = vmul.f32 %v2768, %v2774
          %v2777 = vmul.f32 %v2769, %v2774
          %v2779 = vlaneseq
          %v2780 = vshrl.u32 %v2779, 7
          %v2781 = vsub.s32 0, %v2780
          %v2782 = vrot.slane %v2747, %v2781
          %v2784 = vadd.f32 %v2776, %v2782
          %v2785 = vadd.f32 %v2777, %v2782
          %2786 = vst [vmem:[%s935] sm:$0xff] %v2784
          %2787 = vst [vmem:[%s935 + $0x8] sm:$0xff] %v2785
        $region140: #{tpu_custom_call.1} parent=91 // pred_fallthru
          _
        %s2788 = sand.u32 %s508, 1
        %s2789 = scalar_lea.sflag [#allocation5], %s2788
        %s2790 = sand.u32 %s508, 1
        %s2791 = smul.addr %s2790, 16
        %s2792 = scalar_lea.vmem [#allocation18], %s2791
        // Predicated region
        $region141: #{tpu_custom_call.1} parent=91 // pred_check
          %p2793 = pneg %p518
        $region142: #{tpu_custom_call.1} parent=91 // pred_check_branch
          %2795 = sbr.rel (%p2793) target = $region144
        $region143: #{tpu_custom_call.1} parent=91 // pred_region
          %s2796 = smul.u32 2, %s44
          %s2798 = ssub.s32 256, 256
          %2799 = vsyncadd %s2789, %s2798
          %s2800 = smul.addr %s2796, 128
          %s2801 = scalar_lea.hbm %s18, %s2800
          %s2802 = sshll.u32 %s2792, 4
          %s2803 = int_to_ptr.vmem [resolvable:$true] %s2802
          %2808 = dma.vmem_to_hbm [thread:$0]  %s2803, 256, %s2801, %s2789, 128, 128, 8
        $region144: #{tpu_custom_call.1} parent=91 // pred_fallthru
          _
      $region92: #{tpu_custom_call.1} parent=5 // pred_fallthru
        _
      %p2809 = scmp.le.s32.totalorder 2, %s35
      // Predicated region
      $region145: #{tpu_custom_call.1} parent=5 // pred_check
        %p2810 = pneg %p2809
      $region146: #{tpu_custom_call.1} parent=5 // pred_check_branch
        %2812 = sbr.rel (%p2810) target = $region148
      $region147: #{tpu_custom_call.1} parent=5 // pred_region
        %s2813 = ssub.s32 %s35, 2
        // Predicated region
        $region149: #{tpu_custom_call.1} parent=147 // pred_check
          %p2814 = pneg %p524
        $region150: #{tpu_custom_call.1} parent=147 // pred_check_branch
          %2816 = sbr.rel (%p2814) target = $region152
        $region151: #{tpu_custom_call.1} parent=147 // pred_region
          %s2817 = sand.u32 %s509, 1
          %s2818 = scalar_lea.sflag [#allocation5], %s2817
          %s2819 = sand.u32 %s509, 1
          %s2820 = smul.addr %s2819, 16
          %s2821 = scalar_lea.vmem [#allocation18], %s2820
          %2822 = dma.done %s2818, 256
        $region152: #{tpu_custom_call.1} parent=147 // pred_fallthru
          _
      $region148: #{tpu_custom_call.1} parent=5 // pred_fallthru
        _
    $region6: #{tpu_custom_call.1} parent=1 // loop_footer
      %s39 = sadd.s32 1, %s35
    $region7: #{tpu_custom_call.1} parent=1 // loop_footer_branch
      %34 = sbr.rel target = $region3
    $region8: #{tpu_custom_call.1} parent=1 // loop_exit
      _
    %2823 = vsyncpa [#allocation4], 1
    %s2824 = scalar_lea.sflag [#allocation4], 1
    %2825 = vsyncpa %s2824, 1
    %2826 = vsyncpa [#allocation7], 1
    %s2827 = scalar_lea.sflag [#allocation7], 1
    %2828 = vsyncpa %s2827, 1
    %2829 = vsyncpa [#allocation10], 1
    %2830 = vsyncpa [#allocation13], 1
    %2831 = vsyncpa [#allocation5], 1
    %s2832 = scalar_lea.sflag [#allocation5], 1
    %2833 = vsyncpa %s2832, 1

</llo_original>
